<compile_context>
chip_gen: v6e
topology: v6e:2x2x1
jax: 0.10.0
libtpu: 0.0.40
codegen_flags: <defaults>
</compile_context>

<pallas_src>
import functools
import math

import jax
import jax.numpy as jnp
from jax.experimental import pallas as pl
from jax.experimental.pallas import tpu as pltpu


# ----------------------------------------------------------------------------
# small helpers
# ----------------------------------------------------------------------------
def _round_up(x, m):
    return ((x + m - 1) // m) * m


def _pick_tile(padded, candidates):
    for c in candidates:
        if padded % c == 0:
            return c
    return padded


def _row_tile(m, cap=512):
    """Row (sublane) tile: `cap` when there is enough work, else padded M."""
    if m >= cap:
        return cap, _round_up(m, cap)
    tm = _round_up(m, 8)
    return tm, tm


def _pick_q_tile(t):
    for c in (256, 128):
        if t > c and t % c == 0:
            return c
    return t


def _to_bf16(a):
    return a if a.dtype == jnp.bfloat16 else a.astype(jnp.bfloat16)


def _pad2(a, pr, pc, cval=0):
    if pr == 0 and pc == 0:
        return a
    return jnp.pad(a, ((0, pr), (0, pc)), constant_values=cval)


def _vmem_limit():
    cap = 64 * 1024 * 1024            # conservative default (v7x physical)
    try:
        cap = int(pltpu.get_tpu_info().vmem_capacity_bytes)
    except Exception:
        pass
    return min(int(cap * 0.75), 100 * 1024 * 1024)


_VMEM_LIMIT = _vmem_limit()           # ~48 MiB on v7x, ~96 MiB on v5e/v6e


# ----------------------------------------------------------------------------
# Pallas kernels
# ----------------------------------------------------------------------------
def _linear_kernel(*refs, act, with_res):
    if with_res:
        x_ref, w_ref, b_ref, r_ref, o_ref, acc_ref = refs
    else:
        x_ref, w_ref, b_ref, o_ref, acc_ref = refs
        r_ref = None

    @pl.when(pl.program_id(2) == 0)
    def _():
        acc_ref[...] = jnp.zeros_like(acc_ref)

    acc_ref[...] += jnp.dot(x_ref[...], w_ref[...],
                            preferred_element_type=jnp.float32)

    @pl.when(pl.program_id(2) == pl.num_programs(2) - 1)
    def _():
        y = acc_ref[...] + b_ref[...]
        if act == "gelu":
            # tanh-approx GELU (BERT / timm "gelu"); erf variant differs <1e-3.
            y = jax.nn.gelu(y, approximate=True)
        if with_res:
            y = y + r_ref[...].astype(jnp.float32)
        o_ref[...] = y.astype(o_ref.dtype)


def linear(x, w, b, act=None, out_dtype=jnp.float32, residual=None):
    """x:(M,K) @ w:(K,N) + b, optional fused GELU / fused residual add."""
    M, K = x.shape
    N = w.shape[1]
    tm, Mp = _row_tile(M)
    Kp = _round_up(K, 128)
    tk = _pick_tile(Kp, (512, 256, 128))
    Np = _round_up(N, 256)                      # 256-multiple fills v6e/v7x MXU
    tn = _pick_tile(Np, (512, 256, 128))
    with_res = residual is not None

    xb = _pad2(_to_bf16(x), Mp - M, Kp - K)
    wb = _pad2(_to_bf16(w), Kp - K, Np - N)     # weights pre-cast bf16 outside jit
    bb = b.astype(jnp.float32)
    if Np > N:
        bb = jnp.pad(bb, (0, Np - N))
    bb = bb.reshape(1, Np)

    args = [xb, wb, bb]
    in_specs = [
        pl.BlockSpec((tm, tk), lambda i, j, k: (i, k)),
        pl.BlockSpec((tk, tn), lambda i, j, k: (k, j)),
        pl.BlockSpec((1, tn), lambda i, j, k: (0, j)),
    ]
    if with_res:
        args.append(_pad2(residual, Mp - M, Np - N))
        in_specs.append(pl.BlockSpec((tm, tn), lambda i, j, k: (i, j)))

    kernel = functools.partial(_linear_kernel, act=act, with_res=with_res)
    out = pl.pallas_call(
        kernel,
        out_shape=jax.ShapeDtypeStruct((Mp, Np), out_dtype),
        grid=(Mp // tm, Np // tn, Kp // tk),
        in_specs=in_specs,
        out_specs=pl.BlockSpec((tm, tn), lambda i, j, k: (i, j)),
        scratch_shapes=[pltpu.VMEM((tm, tn), jnp.float32)],
        compiler_params=pltpu.CompilerParams(
            dimension_semantics=("parallel", "parallel", "arbitrary"),
            vmem_limit_bytes=_VMEM_LIMIT),
    )(*args)
    return out[:M, :N]


def _ln_kernel(*refs, eps, with_res):
    if with_res:
        x_ref, r_ref, g_ref, b_ref, o_ref = refs
        x = x_ref[...].astype(jnp.float32) + r_ref[...].astype(jnp.float32)
    else:
        x_ref, g_ref, b_ref, o_ref = refs
        x = x_ref[...].astype(jnp.float32)
    mu = jnp.mean(x, axis=-1, keepdims=True)
    xc = x - mu
    var = jnp.mean(xc * xc, axis=-1, keepdims=True)
    y = xc * jax.lax.rsqrt(var + eps)
    o_ref[...] = (y * g_ref[...] + b_ref[...]).astype(o_ref.dtype)


def layernorm(x, g, b, eps, residual=None, out_dtype=jnp.bfloat16):
    """Row-tiled LayerNorm, optional fused residual add, bf16 output."""
    M, D = x.shape
    tm, Mp = _row_tile(M)
    with_res = residual is not None

    args = [_pad2(x, Mp - M, 0)]
    in_specs = [pl.BlockSpec((tm, D), lambda i: (i, 0))]
    if with_res:
        args.append(_pad2(residual, Mp - M, 0))
        in_specs.append(pl.BlockSpec((tm, D), lambda i: (i, 0)))
    args += [g.reshape(1, D), b.reshape(1, D)]
    in_specs += [pl.BlockSpec((1, D), lambda i: (0, 0)),
                 pl.BlockSpec((1, D), lambda i: (0, 0))]

    kernel = functools.partial(_ln_kernel, eps=eps, with_res=with_res)
    out = pl.pallas_call(
        kernel,
        out_shape=jax.ShapeDtypeStruct((Mp, D), out_dtype),
        grid=(Mp // tm,),
        in_specs=in_specs,
        out_specs=pl.BlockSpec((tm, D), lambda i: (i, 0)),
        compiler_params=pltpu.CompilerParams(
            dimension_semantics=("parallel",),
            vmem_limit_bytes=_VMEM_LIMIT),
    )(*args)
    return out[:M]


def _attn_kernel(*refs, n_heads, hd, scale, masked, separate_kv,
                 k_off, v_off, tq, tile_q):
    i = 0
    q_ref = refs[i]; i += 1
    if separate_kv:
        kv_ref = refs[i]; i += 1
    else:
        kv_ref = q_ref
    if masked:
        m_ref = refs[i]; i += 1
    else:
        m_ref = None
    o_ref, acc_ref = refs[i], refs[i + 1]

    q0 = pl.multiple_of(pl.program_id(1) * tq, tq) if tile_q else 0
    madd = m_ref[0].astype(jnp.float32) if masked else None      # (1, Tk)

    for h in range(n_heads):                 # static unroll; no concat at end
        qh = q_ref[0, pl.ds(q0, tq), h * hd:(h + 1) * hd] * scale
        kh = kv_ref[0, :, k_off + h * hd:k_off + (h + 1) * hd]
        vh = kv_ref[0, :, v_off + h * hd:v_off + (h + 1) * hd]
        s = jax.lax.dot_general(qh, kh, (((1,), (1,)), ((), ())),
                                preferred_element_type=jnp.float32)
        if masked:
            s = s + madd
        s = s - jnp.max(s, axis=-1, keepdims=True)
        p = jnp.exp(s)
        p = p * pl.reciprocal(jnp.sum(p, axis=-1, keepdims=True), approx=True)
        acc_ref[:, h * hd:(h + 1) * hd] = jnp.dot(
            p.astype(vh.dtype), vh, preferred_element_type=jnp.float32)

    # single lane-dense write over the full D
    o_ref[0] = acc_ref[...].astype(o_ref.dtype)


def _attn_call(args, in_specs, kernel, B, Tq, D, tq, nq):
    return pl.pallas_call(
        kernel,
        out_shape=jax.ShapeDtypeStruct((B, Tq, D), jnp.bfloat16),
        grid=(B, nq),
        in_specs=in_specs,
        out_specs=pl.BlockSpec((1, tq, D), lambda b, qi: (b, qi, 0)),
        scratch_shapes=[pltpu.VMEM((tq, D), jnp.float32)],
        compiler_params=pltpu.CompilerParams(
            dimension_semantics=("parallel", "parallel"),
            vmem_limit_bytes=_VMEM_LIMIT),
    )(*args)


def attention_self(qkv, mask_add, n_heads, d_model):
    """qkv: (B,T,3D) bf16 fused; mask_add: (B,1,T) additive or None."""
    B, T, threeD = qkv.shape
    D = d_model
    hd = D // n_heads
    tq = _pick_q_tile(T)
    nq = T // tq
    masked = mask_add is not None

    kernel = functools.partial(_attn_kernel, n_heads=n_heads, hd=hd,
                               scale=1.0 / math.sqrt(hd), masked=masked,
                               separate_kv=False, k_off=D, v_off=2 * D,
                               tq=tq, tile_q=(nq > 1))
    in_specs = [pl.BlockSpec((1, T, threeD), lambda b, qi: (b, 0, 0))]
    args = [qkv]
    if masked:
        in_specs.append(pl.BlockSpec((1, 1, T), lambda b, qi: (b, 0, 0)))
        args.append(mask_add.astype(jnp.float32))
    return _attn_call(args, in_specs, kernel, B, T, D, tq, nq)


def attention_cross(q, kv, n_heads):
    """q: (B,Tq,D) bf16, kv: (B,Tk,2D) bf16 fused; keys all-valid (no mask)."""
    B, Tq, D = q.shape
    Tk = kv.shape[1]
    hd = D // n_heads
    tq = _pick_q_tile(Tq)
    nq = Tq // tq

    kernel = functools.partial(_attn_kernel, n_heads=n_heads, hd=hd,
                               scale=1.0 / math.sqrt(hd), masked=False,
                               separate_kv=True, k_off=0, v_off=D,
                               tq=tq, tile_q=(nq > 1))
    in_specs = [pl.BlockSpec((1, Tq, D), lambda b, qi: (b, 0, 0)),
                pl.BlockSpec((1, Tk, 2 * D), lambda b, qi: (b, 0, 0))]
    return _attn_call([q, kv], in_specs, kernel, B, Tq, D, tq, nq)


def _lin_ce_kernel(x_ref, w_ref, b_ref, lbl_ref, loss_ref, valid_ref,
                   m_sc, l_sc, p_sc, *, tv):
    """Fused (hidden @ W + b) -> masked CE, online logsumexp over vocab tiles."""
    v_idx = pl.program_id(1)

    @pl.when(v_idx == 0)
    def _():
        m_sc[...] = jnp.full_like(m_sc, -jnp.inf)
        l_sc[...] = jnp.zeros_like(l_sc)
        p_sc[...] = jnp.zeros_like(p_sc)

    logits = jnp.dot(x_ref[...], w_ref[...],
                     preferred_element_type=jnp.float32) + b_ref[...]
    lbl = lbl_ref[...]                                        # (tm, 1) int32
    col = jax.lax.broadcasted_iota(jnp.int32, logits.shape, 1) + v_idx * tv
    p_sc[...] += jnp.sum(jnp.where(col == lbl, logits, 0.0),
                         axis=-1, keepdims=True)
    m_new = jnp.maximum(m_sc[...], jnp.max(logits, axis=-1, keepdims=True))
    l_sc[...] = (l_sc[...] * jnp.exp(m_sc[...] - m_new)
                 + jnp.sum(jnp.exp(logits - m_new), axis=-1, keepdims=True))
    m_sc[...] = m_new

    @pl.when(v_idx == pl.num_programs(1) - 1)
    def _():
        valid = (lbl != -100).astype(jnp.float32)
        lse = m_sc[...] + jnp.log(l_sc[...])
        loss_ref[...] = (lse - p_sc[...]) * valid
        valid_ref[...] = valid


def linear_masked_ce(x, w, b, labels):
    """mean CE(softmax(x @ w + b), labels) with ignore_index=-100.

    Logits are never materialized in HBM; vocab padded to a 512 multiple so
    tv=512 even for real BERT vocab sizes (30522 -> 30720)."""
    M, D = x.shape
    V = w.shape[1]
    tm, Mp = _row_tile(M)
    Vp = _round_up(V, 512)
    tv = _pick_tile(Vp, (512, 256, 128))

    xb = _pad2(_to_bf16(x), Mp - M, 0)
    wb = _pad2(_to_bf16(w), 0, Vp - V)
    # padded vocab columns get -1e30 bias (kept f32) so they never enter softmax
    bb = jnp.pad(b.astype(jnp.float32), (0, Vp - V),
                 constant_values=-1e30).reshape(1, Vp)
    lbl = _pad2(labels.reshape(M, 1).astype(jnp.int32), Mp - M, 0, cval=-100)

    # the x block is resident across the vocab axis; deepen buffering on the
    # only streaming operand (weight panel) when the vocab reduction is long
    if Vp // tv >= 3:
        w_spec = pl.BlockSpec((D, tv), lambda m, vv: (0, vv),
                              pipeline_mode=pl.Buffered(3))
    else:
        w_spec = pl.BlockSpec((D, tv), lambda m, vv: (0, vv))

    kernel = functools.partial(_lin_ce_kernel, tv=tv)
    loss, valid = pl.pallas_call(
        kernel,
        out_shape=(jax.ShapeDtypeStruct((Mp, 1), jnp.float32),
                   jax.ShapeDtypeStruct((Mp, 1), jnp.float32)),
        grid=(Mp // tm, Vp // tv),
        in_specs=[
            pl.BlockSpec((tm, D), lambda m, vv: (m, 0)),
            w_spec,
            pl.BlockSpec((1, tv), lambda m, vv: (0, vv)),
            pl.BlockSpec((tm, 1), lambda m, vv: (m, 0)),
        ],
        out_specs=(pl.BlockSpec((tm, 1), lambda m, vv: (m, 0)),
                   pl.BlockSpec((tm, 1), lambda m, vv: (m, 0))),
        scratch_shapes=[pltpu.VMEM((tm, 1), jnp.float32),
                        pltpu.VMEM((tm, 1), jnp.float32),
                        pltpu.VMEM((tm, 1), jnp.float32)],
        compiler_params=pltpu.CompilerParams(
            dimension_semantics=("parallel", "arbitrary"),
            vmem_limit_bytes=_VMEM_LIMIT),
    )(xb, wb, bb, lbl)
    denom = jnp.maximum(jnp.sum(valid[:M]), 1.0)
    return jnp.sum(loss[:M]) / denom


# ----------------------------------------------------------------------------
# Model building blocks (glue in JAX, compute in Pallas kernels above)
# ----------------------------------------------------------------------------
def self_mha(x, p, mask_add, n_heads, residual=None, out_dtype=jnp.bfloat16):
    """Self-attention with fused QKV projection; optional fused residual on
    the output projection (used by the pre-LN ViT path)."""
    B, T, D = x.shape
    qkv = linear(x.reshape(B * T, D), p["qkv"]["w"], p["qkv"]["b"],
                 out_dtype=jnp.bfloat16).reshape(B, T, 3 * D)
    o = attention_self(qkv, mask_add, n_heads, d_model=D)
    res = None if residual is None else residual.reshape(B * T, D)
    return linear(o.reshape(B * T, D), p["o"]["w"], p["o"]["b"],
                  residual=res, out_dtype=out_dtype).reshape(B, T, D)


def cross_mha(x_q, x_kv, p, n_heads, out_dtype=jnp.bfloat16):
    """Cross-attention (image K/V all-valid -> no mask), fused KV projection."""
    B, Tq, D = x_q.shape
    Tk = x_kv.shape[1]
    q = linear(x_q.reshape(B * Tq, D), p["q"]["w"], p["q"]["b"],
               out_dtype=jnp.bfloat16).reshape(B, Tq, D)
    kv = linear(x_kv.reshape(B * Tk, D), p["kv"]["w"], p["kv"]["b"],
                out_dtype=jnp.bfloat16).reshape(B, Tk, 2 * D)
    o = attention_cross(q, kv, n_heads)
    return linear(o.reshape(B * Tq, D), p["o"]["w"], p["o"]["b"],
                  out_dtype=out_dtype).reshape(B, Tq, D)


def vit_forward(vp, image, cfg):
    """Pre-LN ViT; returns all hidden states (embedding output + every block).

    Residual adds are fused into the out-proj / fc2 linear kernels; the
    residual stream stays f32, LN outputs feeding matmuls are bf16."""
    # TODO(synk): LN -> consuming-matmul fusion (single-K-tile variant) left out.
    B, C, H, W = image.shape
    P = cfg["patch"]
    D = cfg["vis_dim"]
    nh, nw = H // P, W // P
    # patchify (equivalent to a stride-P conv): (B, Np, C*P*P)
    x = image.reshape(B, C, nh, P, nw, P).transpose(0, 2, 4, 1, 3, 5).reshape(
        B, nh * nw, C * P * P)
    x = linear(x.reshape(B * nh * nw, C * P * P),
               vp["patch_embed"]["w"], vp["patch_embed"]["b"]).reshape(B, nh * nw, D)
    cls = jnp.broadcast_to(vp["cls_token"], (B, 1, D))
    x = jnp.concatenate([cls, x], axis=1) + vp["pos_embed"]
    N = x.shape[1]
    hidden_states = [x]
    for blk in vp["blocks"]:
        y = layernorm(x.reshape(B * N, D), blk["ln1_g"], blk["ln1_b"], 1e-6
                      ).reshape(B, N, D)
        x = self_mha(y, blk["attn"], None, cfg["vis_heads"],
                     residual=x, out_dtype=jnp.float32)        # no mask in ViT
        y = layernorm(x.reshape(B * N, D), blk["ln2_g"], blk["ln2_b"], 1e-6
                      ).reshape(B, N, D)
        h = linear(y.reshape(B * N, D), blk["fc1"]["w"], blk["fc1"]["b"],
                   act="gelu", out_dtype=jnp.bfloat16)
        x = linear(h, blk["fc2"]["w"], blk["fc2"]["b"],
                   residual=x.reshape(B * N, D),
                   out_dtype=jnp.float32).reshape(B, N, D)
        hidden_states.append(x)
    return hidden_states  # last_norm=False


def bert_tec_forward(tp, input_ids, attention_mask, enc_hidden_list,
                     correction_labels, det_labels, cfg):
    """BERT-style TEC text encoder with cross-attention to image hidden states."""
    B, S = input_ids.shape
    D = cfg["txt_dim"]
    x = tp["word_emb"][input_ids] + tp["pos_emb"][None, :S, :]
    x = layernorm(x.reshape(B * S, D), tp["emb_ln_g"], tp["emb_ln_b"], 1e-12
                  ).reshape(B, S, D)

    # key-only additive mask (B, 1, S); broadcast happens inside the kernel
    self_mask = ((1.0 - attention_mask.astype(jnp.float32)) * -1e4)[:, None, :]

    enc_idx = 0
    for li, layer in enumerate(tp["layers"]):
        a = self_mha(x, layer["self"], self_mask, cfg["txt_heads"])
        x = layernorm(a.reshape(B * S, D), layer["ln_self_g"], layer["ln_self_b"],
                      1e-12, residual=x.reshape(B * S, D)).reshape(B, S, D)
        if li >= cfg["txt_only_layers"]:          # static (trace-time) decision
            img = enc_hidden_list[enc_idx]
            enc_idx += 1
            c = cross_mha(x, img, layer["cross"], cfg["txt_heads"])
            x = layernorm(c.reshape(B * S, D), layer["ln_cross_g"],
                          layer["ln_cross_b"], 1e-12,
                          residual=x.reshape(B * S, D)).reshape(B, S, D)
        h = linear(x.reshape(B * S, D), layer["fc1"]["w"], layer["fc1"]["b"],
                   act="gelu", out_dtype=jnp.bfloat16)
        h = linear(h, layer["fc2"]["w"], layer["fc2"]["b"],
                   out_dtype=jnp.bfloat16)
        x = layernorm(h, layer["ln_ffn_g"], layer["ln_ffn_b"], 1e-12,
                      residual=x.reshape(B * S, D)).reshape(B, S, D)

    seq = x.reshape(B * S, D)
    # MLM (token-correction) head: transform + LN, then decoder fused with CE
    t = linear(seq, tp["mlm_transform"]["w"], tp["mlm_transform"]["b"],
               act="gelu", out_dtype=jnp.bfloat16)
    t = layernorm(t, tp["mlm_ln_g"], tp["mlm_ln_b"], 1e-12)
    loss_mlm = linear_masked_ce(t, tp["mlm_decoder"]["w"], tp["mlm_decoder"]["b"],
                                correction_labels.reshape(-1))
    # Detection head (2-way classification per token), also fused with CE
    loss_det = linear_masked_ce(seq, tp["det_head"]["w"], tp["det_head"]["b"],
                                det_labels.reshape(-1))
    return loss_mlm, loss_det


def tec_mask(input_ids, rep_ids, targets, pad_id):
    det = jnp.ones_like(input_ids)
    det = jnp.where(input_ids == pad_id, -100, det)
    det = jnp.where(rep_ids == 1, 0, det)
    det = det.at[:, 0].set(-100)
    corr = jnp.where(rep_ids == 1, targets, jnp.full_like(targets, -100))
    return det, corr


def albef_forward(params, image, rep_token_ids, attention_mask, input_ids,
                  rep_ids, cfg, alpha=0.0):
    # TODO(synk): DeiT checkpoint load / momentum distillation (alpha path) /
    # torch.distributed queues are not representable in a synthetic Pallas kernel.
    hidden = vit_forward(params["vision"], image, cfg)
    labels = input_ids
    det_labels, correction_labels = tec_mask(rep_token_ids, rep_ids, labels,
                                             cfg["pad_token_id"])
    loss_mlm, loss_det = bert_tec_forward(
        params["text"], rep_token_ids, attention_mask,
        hidden[2:-1], correction_labels, det_labels, cfg)
    return {"loss_tec": loss_mlm, "loss_det": loss_det}


# ----------------------------------------------------------------------------
# Deterministic parameter initialization
# ----------------------------------------------------------------------------
def _init_dense(key, din, dout):
    return {"w": jax.random.normal(key, (din, dout), jnp.float32) * 0.02,
            "b": jnp.zeros((dout,), jnp.float32)}


def _init_self_attn(key, d):
    kq, ko = jax.random.split(key, 2)
    return {"qkv": _init_dense(kq, d, 3 * d), "o": _init_dense(ko, d, d)}


def _init_cross_attn(key, d):
    kq, kk, ko = jax.random.split(key, 3)
    return {"q": _init_dense(kq, d, d), "kv": _init_dense(kk, d, 2 * d),
            "o": _init_dense(ko, d, d)}


def init_params(key, cfg):
    Dv, Dt = cfg["vis_dim"], cfg["txt_dim"]
    P, C = cfg["patch"], cfg["in_chans"]
    Np = (cfg["image_res"] // P) ** 2
    keys = jax.random.split(key, 64)
    ki = iter(keys)

    vision = {
        "patch_embed": _init_dense(next(ki), C * P * P, Dv),
        "cls_token": jax.random.normal(next(ki), (1, 1, Dv), jnp.float32) * 0.02,
        "pos_embed": jax.random.normal(next(ki), (1, Np + 1, Dv), jnp.float32) * 0.02,
        "blocks": [],
    }
    for _ in range(cfg["vis_depth"]):
        vision["blocks"].append({
            "ln1_g": jnp.ones((Dv,), jnp.float32), "ln1_b": jnp.zeros((Dv,), jnp.float32),
            "attn": _init_self_attn(next(ki), Dv),
            "ln2_g": jnp.ones((Dv,), jnp.float32), "ln2_b": jnp.zeros((Dv,), jnp.float32),
            "fc1": _init_dense(next(ki), Dv, Dv * cfg["mlp_ratio"]),
            "fc2": _init_dense(next(ki), Dv * cfg["mlp_ratio"], Dv),
        })

    text = {
        "word_emb": jax.random.normal(next(ki), (cfg["vocab"], Dt), jnp.float32) * 0.02,
        "pos_emb": jax.random.normal(next(ki), (cfg["seq_len"], Dt), jnp.float32) * 0.02,
        "emb_ln_g": jnp.ones((Dt,), jnp.float32), "emb_ln_b": jnp.zeros((Dt,), jnp.float32),
        "layers": [],
        "mlm_transform": _init_dense(next(ki), Dt, Dt),
        "mlm_ln_g": jnp.ones((Dt,), jnp.float32), "mlm_ln_b": jnp.zeros((Dt,), jnp.float32),
        "mlm_decoder": _init_dense(next(ki), Dt, cfg["vocab"]),
        "det_head": _init_dense(next(ki), Dt, 2),
    }
    n_layers = cfg["txt_only_layers"] + cfg["fusion_layers"]
    for li in range(n_layers):
        layer = {
            "self": _init_self_attn(next(ki), Dt),
            "ln_self_g": jnp.ones((Dt,), jnp.float32), "ln_self_b": jnp.zeros((Dt,), jnp.float32),
            "fc1": _init_dense(next(ki), Dt, Dt * cfg["mlp_ratio"]),
            "fc2": _init_dense(next(ki), Dt * cfg["mlp_ratio"], Dt),
            "ln_ffn_g": jnp.ones((Dt,), jnp.float32), "ln_ffn_b": jnp.zeros((Dt,), jnp.float32),
        }
        if li >= cfg["txt_only_layers"]:     # fusion layers get cross-attention
            layer["cross"] = _init_cross_attn(next(ki), Dt)
            layer["ln_cross_g"] = jnp.ones((Dt,), jnp.float32)
            layer["ln_cross_b"] = jnp.zeros((Dt,), jnp.float32)
        text["layers"].append(layer)

    return {"vision": vision, "text": text}


def cast_matmul_weights_bf16(tree):
    """Pre-cast 2-D dense weight matrices to bf16 ONCE (outside the traced
    forward) so linear()/linear_masked_ce never re-cast or duplicate them."""
    if isinstance(tree, dict):
        out = {}
        for k, v in tree.items():
            if k == "w" and hasattr(v, "ndim") and v.ndim == 2:
                out[k] = v.astype(jnp.bfloat16)
            else:
                out[k] = cast_matmul_weights_bf16(v)
        return out
    if isinstance(tree, list):
        return [cast_matmul_weights_bf16(v) for v in tree]
    return tree


# ----------------------------------------------------------------------------
# Main
# ----------------------------------------------------------------------------
if __name__ == "__main__":
    cfg = {
        "image_res": 16, "patch": 8, "in_chans": 3,
        "vis_dim": 32, "vis_depth": 4, "vis_heads": 4, "mlp_ratio": 4,
        "txt_dim": 32, "txt_heads": 4,
        "txt_only_layers": 1, "fusion_layers": 2,   # fusion layers consume hidden[2:-1]
        "vocab": 64, "seq_len": 8, "pad_token_id": 0,
    }
    B, S = 2, cfg["seq_len"]

    key = jax.random.PRNGKey(0)
    kp, kimg, kids, krep, krepid = jax.random.split(key, 5)
    params = cast_matmul_weights_bf16(init_params(kp, cfg))

    image = jax.random.normal(kimg, (B, cfg["in_chans"], 16, 16), jnp.float32)
    input_ids = jax.random.randint(kids, (B, S), 2, cfg["vocab"], dtype=jnp.int32)
    rep_ids = (jax.random.uniform(krep, (B, S)) < 0.3).astype(jnp.int32)
    rep_ids = rep_ids.at[:, 0].set(0)
    replaced = jax.random.randint(krepid, (B, S), 2, cfg["vocab"], dtype=jnp.int32)
    rep_token_ids = jnp.where(rep_ids == 1, replaced, input_ids)

    # pad out the tail of the second sequence
    input_ids = input_ids.at[1, -2:].set(cfg["pad_token_id"])
    rep_token_ids = rep_token_ids.at[1, -2:].set(cfg["pad_token_id"])
    rep_ids = rep_ids.at[1, -2:].set(0)
    attention_mask = jnp.ones((B, S), jnp.int32).at[1, -2:].set(0)

    fwd = jax.jit(functools.partial(albef_forward, cfg=cfg))
    out = fwd(params, image, rep_token_ids, attention_mask, input_ids, rep_ids)
    out = jax.block_until_ready(out)

    assert jnp.isfinite(out["loss_tec"]) and jnp.isfinite(out["loss_det"])
    print("KERNEL_OK")
</pallas_src>

<mosaic_0001>
module attributes {stable_mosaic.version = 11 : i64} {
  func.func @_ln_kernel(%arg0: i32, %arg1: memref<16x32xf32, #tpu.memory_space<vmem>>, %arg2: memref<1x32xf32, #tpu.memory_space<vmem>>, %arg3: memref<1x32xf32, #tpu.memory_space<vmem>>, %arg4: memref<16x32xbf16, #tpu.memory_space<vmem>>) attributes {dimension_semantics = [#tpu.dimension_semantics<parallel>], iteration_bounds = array<i64: 1>, scalar_prefetch = 0 : i64, scratch_operands = 0 : i64, tpu.core_type = #tpu.core_type<tc>, window_params = [{transform_indices = @transform_0, window_bounds = array<i64: 16, 32>}, {pipeline_mode = #tpu.pipeline_mode<synchronous>, transform_indices = @transform_1, window_bounds = array<i64: 1, 32>}, {pipeline_mode = #tpu.pipeline_mode<synchronous>, transform_indices = @transform_2, window_bounds = array<i64: 1, 32>}, {transform_indices = @transform_3, window_bounds = array<i64: 16, 32>}]} {
    %c0 = arith.constant 0 : index
    %c0_0 = arith.constant 0 : index
    %0 = vector.load %arg1[%c0, %c0_0] : memref<16x32xf32, #tpu.memory_space<vmem>>, vector<16x32xf32>
    %cst = arith.constant dense<0.000000e+00> : vector<16xf32>
    %1 = vector.multi_reduction <add>, %0, %cst [1] : vector<16x32xf32> to vector<16xf32>
    %2 = vector.shape_cast %1 : vector<16xf32> to vector<16x1xf32>
    %cst_1 = arith.constant 3.200000e+01 : f32
    %3 = vector.broadcast %cst_1 : f32 to vector<16x1xf32>
    %4 = arith.divf %2, %3 : vector<16x1xf32>
    %5 = vector.broadcast %4 : vector<16x1xf32> to vector<16x32xf32>
    %6 = arith.subf %0, %5 : vector<16x32xf32>
    %7 = arith.mulf %6, %6 : vector<16x32xf32>
    %cst_2 = arith.constant dense<0.000000e+00> : vector<16xf32>
    %8 = vector.multi_reduction <add>, %7, %cst_2 [1] : vector<16x32xf32> to vector<16xf32>
    %9 = vector.shape_cast %8 : vector<16xf32> to vector<16x1xf32>
    %cst_3 = arith.constant 3.200000e+01 : f32
    %10 = vector.broadcast %cst_3 : f32 to vector<16x1xf32>
    %11 = arith.divf %9, %10 : vector<16x1xf32>
    %cst_4 = arith.constant 9.99999996E-13 : f32
    %12 = vector.broadcast %cst_4 : f32 to vector<16x1xf32>
    %13 = arith.addf %11, %12 : vector<16x1xf32>
    %14 = math.rsqrt %13 : vector<16x1xf32>
    %15 = vector.broadcast %14 : vector<16x1xf32> to vector<16x32xf32>
    %16 = arith.mulf %6, %15 : vector<16x32xf32>
    %c0_5 = arith.constant 0 : index
    %c0_6 = arith.constant 0 : index
    %17 = vector.load %arg2[%c0_5, %c0_6] : memref<1x32xf32, #tpu.memory_space<vmem>>, vector<1x32xf32>
    %18 = vector.broadcast %17 : vector<1x32xf32> to vector<16x32xf32>
    %19 = arith.mulf %16, %18 : vector<16x32xf32>
    %c0_7 = arith.constant 0 : index
    %c0_8 = arith.constant 0 : index
    %20 = vector.load %arg3[%c0_7, %c0_8] : memref<1x32xf32, #tpu.memory_space<vmem>>, vector<1x32xf32>
    %21 = vector.broadcast %20 : vector<1x32xf32> to vector<16x32xf32>
    %22 = arith.addf %19, %21 : vector<16x32xf32>
    %23 = arith.truncf %22 : vector<16x32xf32> to vector<16x32xbf16>
    %c0_9 = arith.constant 0 : index
    %c0_10 = arith.constant 0 : index
    %24 = vector.load %arg4[%c0_9, %c0_10] : memref<16x32xbf16, #tpu.memory_space<vmem>>, vector<16x32xbf16>
    tpu.vector_store %arg4[%c0_9, %c0_10], %23 {strides = array<i32>} : memref<16x32xbf16, #tpu.memory_space<vmem>>, vector<16x32xbf16>,
    return
  }
  func.func @transform_0(%arg0: i32) -> (i32, i32) {
    %c0_i32 = arith.constant 0 : i32
    %c0_i32_0 = arith.constant 0 : i32
    return %arg0, %c0_i32 : i32, i32
  }
  func.func @transform_1(%arg0: i32) -> (i32, i32) {
    %c0_i32 = arith.constant 0 : i32
    %c0_i32_0 = arith.constant 0 : i32
    %c0_i32_1 = arith.constant 0 : i32
    return %c0_i32, %c0_i32_0 : i32, i32
  }
  func.func @transform_2(%arg0: i32) -> (i32, i32) {
    %c0_i32 = arith.constant 0 : i32
    %c0_i32_0 = arith.constant 0 : i32
    %c0_i32_1 = arith.constant 0 : i32
    return %c0_i32, %c0_i32_0 : i32, i32
  }
  func.func @transform_3(%arg0: i32) -> (i32, i32) {
    %c0_i32 = arith.constant 0 : i32
    %c0_i32_0 = arith.constant 0 : i32
    return %arg0, %c0_i32 : i32, i32
  }
}

module attributes {stable_mosaic.version = 11 : i64} {
  func.func @_linear_kernel(%arg0: i32, %arg1: i32, %arg2: i32, %arg3: memref<16x128xbf16, #tpu.memory_space<vmem>>, %arg4: memref<128x256xbf16, #tpu.memory_space<vmem>>, %arg5: memref<1x256xf32, #tpu.memory_space<vmem>>, %arg6: memref<16x256xbf16, #tpu.memory_space<vmem>>, %arg7: memref<16x256xf32, #tpu.memory_space<vmem>>) attributes {dimension_semantics = [#tpu.dimension_semantics<parallel>, #tpu.dimension_semantics<parallel>, #tpu.dimension_semantics<arbitrary>], iteration_bounds = array<i64: 1, 1, 1>, scalar_prefetch = 0 : i64, scratch_operands = 1 : i64, tpu.core_type = #tpu.core_type<tc>, window_params = [{transform_indices = @transform_0, window_bounds = array<i64: 16, 128>}, {transform_indices = @transform_1, window_bounds = array<i64: 128, 256>}, {transform_indices = @transform_2, window_bounds = array<i64: 1, 256>}, {transform_indices = @transform_3, window_bounds = array<i64: 16, 256>}]} {
    %c0_i32 = arith.constant 0 : i32
    %0 = arith.cmpi eq, %arg2, %c0_i32 : i32
    %1 = arith.extui %0 : i1 to i32
    %c0_i32_0 = arith.constant 0 : i32
    %2 = arith.cmpi ne, %1, %c0_i32_0 : i32
    scf.if %2 {
      %cst_10 = arith.constant 0.000000e+00 : f32
      %12 = vector.broadcast %cst_10 : f32 to vector<16x256xf32>
      %c0_11 = arith.constant 0 : index
      %c0_12 = arith.constant 0 : index
      %13 = vector.load %arg7[%c0_11, %c0_12] : memref<16x256xf32, #tpu.memory_space<vmem>>, vector<16x256xf32>
      tpu.vector_store %arg7[%c0_11, %c0_12], %12 {strides = array<i32>} : memref<16x256xf32, #tpu.memory_space<vmem>>, vector<16x256xf32>,
    } else {
    }
    %c0 = arith.constant 0 : index
    %c0_1 = arith.constant 0 : index
    %3 = vector.load %arg7[%c0, %c0_1] : memref<16x256xf32, #tpu.memory_space<vmem>>, vector<16x256xf32>
    %c0_2 = arith.constant 0 : index
    %c0_3 = arith.constant 0 : index
    %4 = vector.load %arg3[%c0_2, %c0_3] : memref<16x128xbf16, #tpu.memory_space<vmem>>, vector<16x128xbf16>
    %c0_4 = arith.constant 0 : index
    %c0_5 = arith.constant 0 : index
    %5 = vector.load %arg4[%c0_4, %c0_5] : memref<128x256xbf16, #tpu.memory_space<vmem>>, vector<128x256xbf16>
    %cst = arith.constant dense<0.000000e+00> : vector<16x256xf32>
    %6 = tpu.matmul %4, %5, %cst {dimension_numbers = #tpu.dot_dimension_numbers<[1], [0], [0], [1], [0, 0, 1, 1], [], []>} : vector<16x128xbf16>, vector<128x256xbf16>, vector<16x256xf32> -> vector<16x256xf32>
    %7 = arith.addf %3, %6 : vector<16x256xf32>
    %c0_6 = arith.constant 0 : index
    %c0_7 = arith.constant 0 : index
    %8 = vector.load %arg7[%c0_6, %c0_7] : memref<16x256xf32, #tpu.memory_space<vmem>>, vector<16x256xf32>
    tpu.vector_store %arg7[%c0_6, %c0_7], %7 {strides = array<i32>} : memref<16x256xf32, #tpu.memory_space<vmem>>, vector<16x256xf32>,
    %c0_i32_8 = arith.constant 0 : i32
    %9 = arith.cmpi eq, %arg2, %c0_i32_8 : i32
    %10 = arith.extui %9 : i1 to i32
    %c0_i32_9 = arith.constant 0 : i32
    %11 = arith.cmpi ne, %10, %c0_i32_9 : i32
    scf.if %11 {
      %c0_10 = arith.constant 0 : index
      %c0_11 = arith.constant 0 : index
      %12 = vector.load %arg7[%c0_10, %c0_11] : memref<16x256xf32, #tpu.memory_space<vmem>>, vector<16x256xf32>
      %c0_12 = arith.constant 0 : index
      %c0_13 = arith.constant 0 : index
      %13 = vector.load %arg5[%c0_12, %c0_13] : memref<1x256xf32, #tpu.memory_space<vmem>>, vector<1x256xf32>
      %14 = vector.broadcast %13 : vector<1x256xf32> to vector<16x256xf32>
      %15 = arith.addf %12, %14 : vector<16x256xf32>
      %16 = arith.truncf %15 : vector<16x256xf32> to vector<16x256xbf16>
      %c0_14 = arith.constant 0 : index
      %c0_15 = arith.constant 0 : index
      %17 = vector.load %arg6[%c0_14, %c0_15] : memref<16x256xbf16, #tpu.memory_space<vmem>>, vector<16x256xbf16>
      tpu.vector_store %arg6[%c0_14, %c0_15], %16 {strides = array<i32>} : memref<16x256xbf16, #tpu.memory_space<vmem>>, vector<16x256xbf16>,
    } else {
    }
    return
  }
  func.func @transform_0(%arg0: i32, %arg1: i32, %arg2: i32) -> (i32, i32) {
    %c0_i32 = arith.constant 0 : i32
    return %arg0, %arg2 : i32, i32
  }
  func.func @transform_1(%arg0: i32, %arg1: i32, %arg2: i32) -> (i32, i32) {
    %c0_i32 = arith.constant 0 : i32
    return %arg2, %arg1 : i32, i32
  }
  func.func @transform_2(%arg0: i32, %arg1: i32, %arg2: i32) -> (i32, i32) {
    %c0_i32 = arith.constant 0 : i32
    %c0_i32_0 = arith.constant 0 : i32
    return %c0_i32, %arg1 : i32, i32
  }
  func.func @transform_3(%arg0: i32, %arg1: i32, %arg2: i32) -> (i32, i32) {
    %c0_i32 = arith.constant 0 : i32
    return %arg0, %arg1 : i32, i32
  }
}

module attributes {stable_mosaic.version = 11 : i64} {
  func.func @_attn_kernel(%arg0: i32, %arg1: i32, %arg2: memref<1x8x96xbf16, #tpu.memory_space<vmem>>, %arg3: memref<1x1x8xf32, #tpu.memory_space<vmem>>, %arg4: memref<1x8x32xbf16, #tpu.memory_space<vmem>>, %arg5: memref<8x32xf32, #tpu.memory_space<vmem>>) attributes {dimension_semantics = [#tpu.dimension_semantics<parallel>, #tpu.dimension_semantics<parallel>], iteration_bounds = array<i64: 2, 1>, scalar_prefetch = 0 : i64, scratch_operands = 1 : i64, tpu.core_type = #tpu.core_type<tc>, window_params = [{transform_indices = @transform_0, window_bounds = array<i64: 1, 8, 96>}, {transform_indices = @transform_1, window_bounds = array<i64: 1, 1, 8>}, {transform_indices = @transform_2, window_bounds = array<i64: 1, 8, 32>}]} {
    %c0 = arith.constant 0 : index
    %c0_0 = arith.constant 0 : index
    %c0_1 = arith.constant 0 : index
    %0 = vector.load %arg3[%c0, %c0_0, %c0_1] : memref<1x1x8xf32, #tpu.memory_space<vmem>>, vector<1x1x8xf32>
    %1 = vector.shape_cast %0 : vector<1x1x8xf32> to vector<1x8xf32>
    %c0_2 = arith.constant 0 : index
    %c0_3 = arith.constant 0 : index
    %c0_4 = arith.constant 0 : index
    %2 = vector.load %arg2[%c0_2, %c0_3, %c0_4] : memref<1x8x96xbf16, #tpu.memory_space<vmem>>, vector<1x8x8xbf16>
    %3 = vector.shape_cast %2 : vector<1x8x8xbf16> to vector<8x8xbf16>
    %cst = arith.constant 3.535160e-01 : bf16
    %4 = vector.broadcast %cst : bf16 to vector<8x8xbf16>
    %5 = arith.mulf %3, %4 : vector<8x8xbf16>
    %c0_5 = arith.constant 0 : index
    %c0_6 = arith.constant 0 : index
    %c32 = arith.constant 32 : index
    %6 = vector.load %arg2[%c0_5, %c0_6, %c32] : memref<1x8x96xbf16, #tpu.memory_space<vmem>>, vector<1x8x8xbf16>
    %7 = vector.shape_cast %6 : vector<1x8x8xbf16> to vector<8x8xbf16>
    %c0_7 = arith.constant 0 : index
    %c0_8 = arith.constant 0 : index
    %c64 = arith.constant 64 : index
    %8 = vector.load %arg2[%c0_7, %c0_8, %c64] : memref<1x8x96xbf16, #tpu.memory_space<vmem>>, vector<1x8x8xbf16>
    %9 = vector.shape_cast %8 : vector<1x8x8xbf16> to vector<8x8xbf16>
    %cst_9 = arith.constant dense<0.000000e+00> : vector<8x8xf32>
    %10 = tpu.matmul %5, %7, %cst_9 {dimension_numbers = #tpu.dot_dimension_numbers<[1], [1], [0], [0], [0, 0, 1, 0], [], []>} : vector<8x8xbf16>, vector<8x8xbf16>, vector<8x8xf32> -> vector<8x8xf32>
    %11 = vector.broadcast %1 : vector<1x8xf32> to vector<8x8xf32>
    %12 = arith.addf %10, %11 : vector<8x8xf32>
    %cst_10 = arith.constant dense<0xFF800000> : vector<8xf32>
    %13 = vector.multi_reduction <maximumf>, %12, %cst_10 [1] : vector<8x8xf32> to vector<8xf32>
    %14 = vector.shape_cast %13 : vector<8xf32> to vector<8x1xf32>
    %15 = vector.broadcast %14 : vector<8x1xf32> to vector<8x8xf32>
    %16 = arith.subf %12, %15 : vector<8x8xf32>
    %17 = math.exp %16 : vector<8x8xf32>
    %cst_11 = arith.constant dense<0.000000e+00> : vector<8xf32>
    %18 = vector.multi_reduction <add>, %17, %cst_11 [1] : vector<8x8xf32> to vector<8xf32>
    %19 = vector.shape_cast %18 : vector<8xf32> to vector<8x1xf32>
    %20 = tpu.reciprocal %19 {approx = true} : vector<8x1xf32> -> vector<8x1xf32>
    %21 = vector.broadcast %20 : vector<8x1xf32> to vector<8x8xf32>
    %22 = arith.mulf %17, %21 : vector<8x8xf32>
    %23 = arith.truncf %22 : vector<8x8xf32> to vector<8x8xbf16>
    %cst_12 = arith.constant dense<0.000000e+00> : vector<8x8xf32>
    %24 = tpu.matmul %23, %9, %cst_12 {dimension_numbers = #tpu.dot_dimension_numbers<[1], [0], [0], [1], [0, 0, 1, 1], [], []>} : vector<8x8xbf16>, vector<8x8xbf16>, vector<8x8xf32> -> vector<8x8xf32>
    %c0_13 = arith.constant 0 : index
    %c0_14 = arith.constant 0 : index
    %25 = vector.load %arg5[%c0_13, %c0_14] : memref<8x32xf32, #tpu.memory_space<vmem>>, vector<8x8xf32>
    tpu.vector_store %arg5[%c0_13, %c0_14], %24 {strides = array<i32>} : memref<8x32xf32, #tpu.memory_space<vmem>>, vector<8x8xf32>,
    %c0_15 = arith.constant 0 : index
    %c0_16 = arith.constant 0 : index
    %c8 = arith.constant 8 : index
    %26 = vector.load %arg2[%c0_15, %c0_16, %c8] : memref<1x8x96xbf16, #tpu.memory_space<vmem>>, vector<1x8x8xbf16>
    %27 = vector.shape_cast %26 : vector<1x8x8xbf16> to vector<8x8xbf16>
    %cst_17 = arith.constant 3.535160e-01 : bf16
    %28 = vector.broadcast %cst_17 : bf16 to vector<8x8xbf16>
    %29 = arith.mulf %27, %28 : vector<8x8xbf16>
    %c0_18 = arith.constant 0 : index
    %c0_19 = arith.constant 0 : index
    %c40 = arith.constant 40 : index
    %30 = vector.load %arg2[%c0_18, %c0_19, %c40] : memref<1x8x96xbf16, #tpu.memory_space<vmem>>, vector<1x8x8xbf16>
    %31 = vector.shape_cast %30 : vector<1x8x8xbf16> to vector<8x8xbf16>
    %c0_20 = arith.constant 0 : index
    %c0_21 = arith.constant 0 : index
    %c72 = arith.constant 72 : index
    %32 = vector.load %arg2[%c0_20, %c0_21, %c72] : memref<1x8x96xbf16, #tpu.memory_space<vmem>>, vector<1x8x8xbf16>
    %33 = vector.shape_cast %32 : vector<1x8x8xbf16> to vector<8x8xbf16>
    %cst_22 = arith.constant dense<0.000000e+00> : vector<8x8xf32>
    %34 = tpu.matmul %29, %31, %cst_22 {dimension_numbers = #tpu.dot_dimension_numbers<[1], [1], [0], [0], [0, 0, 1, 0], [], []>} : vector<8x8xbf16>, vector<8x8xbf16>, vector<8x8xf32> -> vector<8x8xf32>
    %35 = vector.broadcast %1 : vector<1x8xf32> to vector<8x8xf32>
    %36 = arith.addf %34, %35 : vector<8x8xf32>
    %cst_23 = arith.constant dense<0xFF800000> : vector<8xf32>
    %37 = vector.multi_reduction <maximumf>, %36, %cst_23 [1] : vector<8x8xf32> to vector<8xf32>
    %38 = vector.shape_cast %37 : vector<8xf32> to vector<8x1xf32>
    %39 = vector.broadcast %38 : vector<8x1xf32> to vector<8x8xf32>
    %40 = arith.subf %36, %39 : vector<8x8xf32>
    %41 = math.exp %40 : vector<8x8xf32>
    %cst_24 = arith.constant dense<0.000000e+00> : vector<8xf32>
    %42 = vector.multi_reduction <add>, %41, %cst_24 [1] : vector<8x8xf32> to vector<8xf32>
    %43 = vector.shape_cast %42 : vector<8xf32> to vector<8x1xf32>
    %44 = tpu.reciprocal %43 {approx = true} : vector<8x1xf32> -> vector<8x1xf32>
    %45 = vector.broadcast %44 : vector<8x1xf32> to vector<8x8xf32>
    %46 = arith.mulf %41, %45 : vector<8x8xf32>
    %47 = arith.truncf %46 : vector<8x8xf32> to vector<8x8xbf16>
    %cst_25 = arith.constant dense<0.000000e+00> : vector<8x8xf32>
    %48 = tpu.matmul %47, %33, %cst_25 {dimension_numbers = #tpu.dot_dimension_numbers<[1], [0], [0], [1], [0, 0, 1, 1], [], []>} : vector<8x8xbf16>, vector<8x8xbf16>, vector<8x8xf32> -> vector<8x8xf32>
    %c0_26 = arith.constant 0 : index
    %c8_27 = arith.constant 8 : index
    %49 = vector.load %arg5[%c0_26, %c8_27] : memref<8x32xf32, #tpu.memory_space<vmem>>, vector<8x8xf32>
    tpu.vector_store %arg5[%c0_26, %c8_27], %48 {strides = array<i32>} : memref<8x32xf32, #tpu.memory_space<vmem>>, vector<8x8xf32>,
    %c0_28 = arith.constant 0 : index
    %c0_29 = arith.constant 0 : index
    %c16 = arith.constant 16 : index
    %50 = vector.load %arg2[%c0_28, %c0_29, %c16] : memref<1x8x96xbf16, #tpu.memory_space<vmem>>, vector<1x8x8xbf16>
    %51 = vector.shape_cast %50 : vector<1x8x8xbf16> to vector<8x8xbf16>
    %cst_30 = arith.constant 3.535160e-01 : bf16
    %52 = vector.broadcast %cst_30 : bf16 to vector<8x8xbf16>
    %53 = arith.mulf %51, %52 : vector<8x8xbf16>
    %c0_31 = arith.constant 0 : index
    %c0_32 = arith.constant 0 : index
    %c48 = arith.constant 48 : index
    %54 = vector.load %arg2[%c0_31, %c0_32, %c48] : memref<1x8x96xbf16, #tpu.memory_space<vmem>>, vector<1x8x8xbf16>
    %55 = vector.shape_cast %54 : vector<1x8x8xbf16> to vector<8x8xbf16>
    %c0_33 = arith.constant 0 : index
    %c0_34 = arith.constant 0 : index
    %c80 = arith.constant 80 : index
    %56 = vector.load %arg2[%c0_33, %c0_34, %c80] : memref<1x8x96xbf16, #tpu.memory_space<vmem>>, vector<1x8x8xbf16>
    %57 = vector.shape_cast %56 : vector<1x8x8xbf16> to vector<8x8xbf16>
    %cst_35 = arith.constant dense<0.000000e+00> : vector<8x8xf32>
    %58 = tpu.matmul %53, %55, %cst_35 {dimension_numbers = #tpu.dot_dimension_numbers<[1], [1], [0], [0], [0, 0, 1, 0], [], []>} : vector<8x8xbf16>, vector<8x8xbf16>, vector<8x8xf32> -> vector<8x8xf32>
    %59 = vector.broadcast %1 : vector<1x8xf32> to vector<8x8xf32>
    %60 = arith.addf %58, %59 : vector<8x8xf32>
    %cst_36 = arith.constant dense<0xFF800000> : vector<8xf32>
    %61 = vector.multi_reduction <maximumf>, %60, %cst_36 [1] : vector<8x8xf32> to vector<8xf32>
    %62 = vector.shape_cast %61 : vector<8xf32> to vector<8x1xf32>
    %63 = vector.broadcast %62 : vector<8x1xf32> to vector<8x8xf32>
    %64 = arith.subf %60, %63 : vector<8x8xf32>
    %65 = math.exp %64 : vector<8x8xf32>
    %cst_37 = arith.constant dense<0.000000e+00> : vector<8xf32>
    %66 = vector.multi_reduction <add>, %65, %cst_37 [1] : vector<8x8xf32> to vector<8xf32>
    %67 = vector.shape_cast %66 : vector<8xf32> to vector<8x1xf32>
    %68 = tpu.reciprocal %67 {approx = true} : vector<8x1xf32> -> vector<8x1xf32>
    %69 = vector.broadcast %68 : vector<8x1xf32> to vector<8x8xf32>
    %70 = arith.mulf %65, %69 : vector<8x8xf32>
    %71 = arith.truncf %70 : vector<8x8xf32> to vector<8x8xbf16>
    %cst_38 = arith.constant dense<0.000000e+00> : vector<8x8xf32>
    %72 = tpu.matmul %71, %57, %cst_38 {dimension_numbers = #tpu.dot_dimension_numbers<[1], [0], [0], [1], [0, 0, 1, 1], [], []>} : vector<8x8xbf16>, vector<8x8xbf16>, vector<8x8xf32> -> vector<8x8xf32>
    %c0_39 = arith.constant 0 : index
    %c16_40 = arith.constant 16 : index
    %73 = vector.load %arg5[%c0_39, %c16_40] : memref<8x32xf32, #tpu.memory_space<vmem>>, vector<8x8xf32>
    tpu.vector_store %arg5[%c0_39, %c16_40], %72 {strides = array<i32>} : memref<8x32xf32, #tpu.memory_space<vmem>>, vector<8x8xf32>,
    %c0_41 = arith.constant 0 : index
    %c0_42 = arith.constant 0 : index
    %c24 = arith.constant 24 : index
    %74 = vector.load %arg2[%c0_41, %c0_42, %c24] : memref<1x8x96xbf16, #tpu.memory_space<vmem>>, vector<1x8x8xbf16>
    %75 = vector.shape_cast %74 : vector<1x8x8xbf16> to vector<8x8xbf16>
    %cst_43 = arith.constant 3.535160e-01 : bf16
    %76 = vector.broadcast %cst_43 : bf16 to vector<8x8xbf16>
    %77 = arith.mulf %75, %76 : vector<8x8xbf16>
    %c0_44 = arith.constant 0 : index
    %c0_45 = arith.constant 0 : index
    %c56 = arith.constant 56 : index
    %78 = vector.load %arg2[%c0_44, %c0_45, %c56] : memref<1x8x96xbf16, #tpu.memory_space<vmem>>, vector<1x8x8xbf16>
    %79 = vector.shape_cast %78 : vector<1x8x8xbf16> to vector<8x8xbf16>
    %c0_46 = arith.constant 0 : index
    %c0_47 = arith.constant 0 : index
    %c88 = arith.constant 88 : index
    %80 = vector.load %arg2[%c0_46, %c0_47, %c88] : memref<1x8x96xbf16, #tpu.memory_space<vmem>>, vector<1x8x8xbf16>
    %81 = vector.shape_cast %80 : vector<1x8x8xbf16> to vector<8x8xbf16>
    %cst_48 = arith.constant dense<0.000000e+00> : vector<8x8xf32>
    %82 = tpu.matmul %77, %79, %cst_48 {dimension_numbers = #tpu.dot_dimension_numbers<[1], [1], [0], [0], [0, 0, 1, 0], [], []>} : vector<8x8xbf16>, vector<8x8xbf16>, vector<8x8xf32> -> vector<8x8xf32>
    %83 = vector.broadcast %1 : vector<1x8xf32> to vector<8x8xf32>
    %84 = arith.addf %82, %83 : vector<8x8xf32>
    %cst_49 = arith.constant dense<0xFF800000> : vector<8xf32>
    %85 = vector.multi_reduction <maximumf>, %84, %cst_49 [1] : vector<8x8xf32> to vector<8xf32>
    %86 = vector.shape_cast %85 : vector<8xf32> to vector<8x1xf32>
    %87 = vector.broadcast %86 : vector<8x1xf32> to vector<8x8xf32>
    %88 = arith.subf %84, %87 : vector<8x8xf32>
    %89 = math.exp %88 : vector<8x8xf32>
    %cst_50 = arith.constant dense<0.000000e+00> : vector<8xf32>
    %90 = vector.multi_reduction <add>, %89, %cst_50 [1] : vector<8x8xf32> to vector<8xf32>
    %91 = vector.shape_cast %90 : vector<8xf32> to vector<8x1xf32>
    %92 = tpu.reciprocal %91 {approx = true} : vector<8x1xf32> -> vector<8x1xf32>
    %93 = vector.broadcast %92 : vector<8x1xf32> to vector<8x8xf32>
    %94 = arith.mulf %89, %93 : vector<8x8xf32>
    %95 = arith.truncf %94 : vector<8x8xf32> to vector<8x8xbf16>
    %cst_51 = arith.constant dense<0.000000e+00> : vector<8x8xf32>
    %96 = tpu.matmul %95, %81, %cst_51 {dimension_numbers = #tpu.dot_dimension_numbers<[1], [0], [0], [1], [0, 0, 1, 1], [], []>} : vector<8x8xbf16>, vector<8x8xbf16>, vector<8x8xf32> -> vector<8x8xf32>
    %c0_52 = arith.constant 0 : index
    %c24_53 = arith.constant 24 : index
    %97 = vector.load %arg5[%c0_52, %c24_53] : memref<8x32xf32, #tpu.memory_space<vmem>>, vector<8x8xf32>
    tpu.vector_store %arg5[%c0_52, %c24_53], %96 {strides = array<i32>} : memref<8x32xf32, #tpu.memory_space<vmem>>, vector<8x8xf32>,
    %c0_54 = arith.constant 0 : index
    %c0_55 = arith.constant 0 : index
    %98 = vector.load %arg5[%c0_54, %c0_55] : memref<8x32xf32, #tpu.memory_space<vmem>>, vector<8x32xf32>
    %99 = arith.truncf %98 : vector<8x32xf32> to vector<8x32xbf16>
    %c0_56 = arith.constant 0 : index
    %c0_57 = arith.constant 0 : index
    %c0_58 = arith.constant 0 : index
    %100 = vector.load %arg4[%c0_56, %c0_57, %c0_58] : memref<1x8x32xbf16, #tpu.memory_space<vmem>>, vector<1x8x32xbf16>
    %101 = vector.shape_cast %100 : vector<1x8x32xbf16> to vector<8x32xbf16>
    %102 = vector.shape_cast %99 : vector<8x32xbf16> to vector<1x8x32xbf16>
    tpu.vector_store %arg4[%c0_56, %c0_57, %c0_58], %102 {strides = array<i32>} : memref<1x8x32xbf16, #tpu.memory_space<vmem>>, vector<1x8x32xbf16>,
    return
  }
  func.func @transform_0(%arg0: i32, %arg1: i32) -> (i32, i32, i32) {
    %c0_i32 = arith.constant 0 : i32
    %c0_i32_0 = arith.constant 0 : i32
    %c0_i32_1 = arith.constant 0 : i32
    return %arg0, %c0_i32, %c0_i32_0 : i32, i32, i32
  }
  func.func @transform_1(%arg0: i32, %arg1: i32) -> (i32, i32, i32) {
    %c0_i32 = arith.constant 0 : i32
    %c0_i32_0 = arith.constant 0 : i32
    %c0_i32_1 = arith.constant 0 : i32
    return %arg0, %c0_i32, %c0_i32_0 : i32, i32, i32
  }
  func.func @transform_2(%arg0: i32, %arg1: i32) -> (i32, i32, i32) {
    %c0_i32 = arith.constant 0 : i32
    %c0_i32_0 = arith.constant 0 : i32
    return %arg0, %arg1, %c0_i32 : i32, i32, i32
  }
}

module attributes {stable_mosaic.version = 11 : i64} {
  func.func @_ln_kernel(%arg0: i32, %arg1: memref<16x32xbf16, #tpu.memory_space<vmem>>, %arg2: memref<16x32xbf16, #tpu.memory_space<vmem>>, %arg3: memref<1x32xf32, #tpu.memory_space<vmem>>, %arg4: memref<1x32xf32, #tpu.memory_space<vmem>>, %arg5: memref<16x32xbf16, #tpu.memory_space<vmem>>) attributes {dimension_semantics = [#tpu.dimension_semantics<parallel>], iteration_bounds = array<i64: 1>, scalar_prefetch = 0 : i64, scratch_operands = 0 : i64, tpu.core_type = #tpu.core_type<tc>, window_params = [{transform_indices = @transform_0, window_bounds = array<i64: 16, 32>}, {transform_indices = @transform_1, window_bounds = array<i64: 16, 32>}, {pipeline_mode = #tpu.pipeline_mode<synchronous>, transform_indices = @transform_2, window_bounds = array<i64: 1, 32>}, {pipeline_mode = #tpu.pipeline_mode<synchronous>, transform_indices = @transform_3, window_bounds = array<i64: 1, 32>}, {transform_indices = @transform_4, window_bounds = array<i64: 16, 32>}]} {
    %c0 = arith.constant 0 : index
    %c0_0 = arith.constant 0 : index
    %0 = vector.load %arg1[%c0, %c0_0] : memref<16x32xbf16, #tpu.memory_space<vmem>>, vector<16x32xbf16>
    %1 = arith.extf %0 : vector<16x32xbf16> to vector<16x32xf32>
    %c0_1 = arith.constant 0 : index
    %c0_2 = arith.constant 0 : index
    %2 = vector.load %arg2[%c0_1, %c0_2] : memref<16x32xbf16, #tpu.memory_space<vmem>>, vector<16x32xbf16>
    %3 = arith.extf %2 : vector<16x32xbf16> to vector<16x32xf32>
    %4 = arith.addf %1, %3 : vector<16x32xf32>
    %cst = arith.constant dense<0.000000e+00> : vector<16xf32>
    %5 = vector.multi_reduction <add>, %4, %cst [1] : vector<16x32xf32> to vector<16xf32>
    %6 = vector.shape_cast %5 : vector<16xf32> to vector<16x1xf32>
    %cst_3 = arith.constant 3.200000e+01 : f32
    %7 = vector.broadcast %cst_3 : f32 to vector<16x1xf32>
    %8 = arith.divf %6, %7 : vector<16x1xf32>
    %9 = vector.broadcast %8 : vector<16x1xf32> to vector<16x32xf32>
    %10 = arith.subf %4, %9 : vector<16x32xf32>
    %11 = arith.mulf %10, %10 : vector<16x32xf32>
    %cst_4 = arith.constant dense<0.000000e+00> : vector<16xf32>
    %12 = vector.multi_reduction <add>, %11, %cst_4 [1] : vector<16x32xf32> to vector<16xf32>
    %13 = vector.shape_cast %12 : vector<16xf32> to vector<16x1xf32>
    %cst_5 = arith.constant 3.200000e+01 : f32
    %14 = vector.broadcast %cst_5 : f32 to vector<16x1xf32>
    %15 = arith.divf %13, %14 : vector<16x1xf32>
    %cst_6 = arith.constant 9.99999996E-13 : f32
    %16 = vector.broadcast %cst_6 : f32 to vector<16x1xf32>
    %17 = arith.addf %15, %16 : vector<16x1xf32>
    %18 = math.rsqrt %17 : vector<16x1xf32>
    %19 = vector.broadcast %18 : vector<16x1xf32> to vector<16x32xf32>
    %20 = arith.mulf %10, %19 : vector<16x32xf32>
    %c0_7 = arith.constant 0 : index
    %c0_8 = arith.constant 0 : index
    %21 = vector.load %arg3[%c0_7, %c0_8] : memref<1x32xf32, #tpu.memory_space<vmem>>, vector<1x32xf32>
    %22 = vector.broadcast %21 : vector<1x32xf32> to vector<16x32xf32>
    %23 = arith.mulf %20, %22 : vector<16x32xf32>
    %c0_9 = arith.constant 0 : index
    %c0_10 = arith.constant 0 : index
    %24 = vector.load %arg4[%c0_9, %c0_10] : memref<1x32xf32, #tpu.memory_space<vmem>>, vector<1x32xf32>
    %25 = vector.broadcast %24 : vector<1x32xf32> to vector<16x32xf32>
    %26 = arith.addf %23, %25 : vector<16x32xf32>
    %27 = arith.truncf %26 : vector<16x32xf32> to vector<16x32xbf16>
    %c0_11 = arith.constant 0 : index
    %c0_12 = arith.constant 0 : index
    %28 = vector.load %arg5[%c0_11, %c0_12] : memref<16x32xbf16, #tpu.memory_space<vmem>>, vector<16x32xbf16>
    tpu.vector_store %arg5[%c0_11, %c0_12], %27 {strides = array<i32>} : memref<16x32xbf16, #tpu.memory_space<vmem>>, vector<16x32xbf16>,
    return
  }
  func.func @transform_0(%arg0: i32) -> (i32, i32) {
    %c0_i32 = arith.constant 0 : i32
    %c0_i32_0 = arith.constant 0 : i32
    return %arg0, %c0_i32 : i32, i32
  }
  func.func @transform_1(%arg0: i32) -> (i32, i32) {
    %c0_i32 = arith.constant 0 : i32
    %c0_i32_0 = arith.constant 0 : i32
    return %arg0, %c0_i32 : i32, i32
  }
  func.func @transform_2(%arg0: i32) -> (i32, i32) {
    %c0_i32 = arith.constant 0 : i32
    %c0_i32_0 = arith.constant 0 : i32
    %c0_i32_1 = arith.constant 0 : i32
    return %c0_i32, %c0_i32_0 : i32, i32
  }
  func.func @transform_3(%arg0: i32) -> (i32, i32) {
    %c0_i32 = arith.constant 0 : i32
    %c0_i32_0 = arith.constant 0 : i32
    %c0_i32_1 = arith.constant 0 : i32
    return %c0_i32, %c0_i32_0 : i32, i32
  }
  func.func @transform_4(%arg0: i32) -> (i32, i32) {
    %c0_i32 = arith.constant 0 : i32
    %c0_i32_0 = arith.constant 0 : i32
    return %arg0, %c0_i32 : i32, i32
  }
}

module attributes {stable_mosaic.version = 11 : i64} {
  func.func @_linear_kernel(%arg0: i32, %arg1: i32, %arg2: i32, %arg3: memref<16x128xbf16, #tpu.memory_space<vmem>>, %arg4: memref<128x256xbf16, #tpu.memory_space<vmem>>, %arg5: memref<1x256xf32, #tpu.memory_space<vmem>>, %arg6: memref<16x256xbf16, #tpu.memory_space<vmem>>, %arg7: memref<16x256xf32, #tpu.memory_space<vmem>>) attributes {dimension_semantics = [#tpu.dimension_semantics<parallel>, #tpu.dimension_semantics<parallel>, #tpu.dimension_semantics<arbitrary>], iteration_bounds = array<i64: 1, 1, 1>, scalar_prefetch = 0 : i64, scratch_operands = 1 : i64, tpu.core_type = #tpu.core_type<tc>, window_params = [{transform_indices = @transform_0, window_bounds = array<i64: 16, 128>}, {transform_indices = @transform_1, window_bounds = array<i64: 128, 256>}, {transform_indices = @transform_2, window_bounds = array<i64: 1, 256>}, {transform_indices = @transform_3, window_bounds = array<i64: 16, 256>}]} {
    %c0_i32 = arith.constant 0 : i32
    %0 = arith.cmpi eq, %arg2, %c0_i32 : i32
    %1 = arith.extui %0 : i1 to i32
    %c0_i32_0 = arith.constant 0 : i32
    %2 = arith.cmpi ne, %1, %c0_i32_0 : i32
    scf.if %2 {
      %cst_10 = arith.constant 0.000000e+00 : f32
      %12 = vector.broadcast %cst_10 : f32 to vector<16x256xf32>
      %c0_11 = arith.constant 0 : index
      %c0_12 = arith.constant 0 : index
      %13 = vector.load %arg7[%c0_11, %c0_12] : memref<16x256xf32, #tpu.memory_space<vmem>>, vector<16x256xf32>
      tpu.vector_store %arg7[%c0_11, %c0_12], %12 {strides = array<i32>} : memref<16x256xf32, #tpu.memory_space<vmem>>, vector<16x256xf32>,
    } else {
    }
    %c0 = arith.constant 0 : index
    %c0_1 = arith.constant 0 : index
    %3 = vector.load %arg7[%c0, %c0_1] : memref<16x256xf32, #tpu.memory_space<vmem>>, vector<16x256xf32>
    %c0_2 = arith.constant 0 : index
    %c0_3 = arith.constant 0 : index
    %4 = vector.load %arg3[%c0_2, %c0_3] : memref<16x128xbf16, #tpu.memory_space<vmem>>, vector<16x128xbf16>
    %c0_4 = arith.constant 0 : index
    %c0_5 = arith.constant 0 : index
    %5 = vector.load %arg4[%c0_4, %c0_5] : memref<128x256xbf16, #tpu.memory_space<vmem>>, vector<128x256xbf16>
    %cst = arith.constant dense<0.000000e+00> : vector<16x256xf32>
    %6 = tpu.matmul %4, %5, %cst {dimension_numbers = #tpu.dot_dimension_numbers<[1], [0], [0], [1], [0, 0, 1, 1], [], []>} : vector<16x128xbf16>, vector<128x256xbf16>, vector<16x256xf32> -> vector<16x256xf32>
    %7 = arith.addf %3, %6 : vector<16x256xf32>
    %c0_6 = arith.constant 0 : index
    %c0_7 = arith.constant 0 : index
    %8 = vector.load %arg7[%c0_6, %c0_7] : memref<16x256xf32, #tpu.memory_space<vmem>>, vector<16x256xf32>
    tpu.vector_store %arg7[%c0_6, %c0_7], %7 {strides = array<i32>} : memref<16x256xf32, #tpu.memory_space<vmem>>, vector<16x256xf32>,
    %c0_i32_8 = arith.constant 0 : i32
    %9 = arith.cmpi eq, %arg2, %c0_i32_8 : i32
    %10 = arith.extui %9 : i1 to i32
    %c0_i32_9 = arith.constant 0 : i32
    %11 = arith.cmpi ne, %10, %c0_i32_9 : i32
    scf.if %11 {
      %c0_10 = arith.constant 0 : index
      %c0_11 = arith.constant 0 : index
      %12 = vector.load %arg7[%c0_10, %c0_11] : memref<16x256xf32, #tpu.memory_space<vmem>>, vector<16x256xf32>
      %c0_12 = arith.constant 0 : index
      %c0_13 = arith.constant 0 : index
      %13 = vector.load %arg5[%c0_12, %c0_13] : memref<1x256xf32, #tpu.memory_space<vmem>>, vector<1x256xf32>
      %14 = vector.broadcast %13 : vector<1x256xf32> to vector<16x256xf32>
      %15 = arith.addf %12, %14 : vector<16x256xf32>
      %16 = arith.mulf %15, %15 : vector<16x256xf32>
      %17 = arith.mulf %15, %16 : vector<16x256xf32>
      %cst_14 = arith.constant 4.471500e-02 : f32
      %18 = vector.broadcast %cst_14 : f32 to vector<16x256xf32>
      %19 = arith.mulf %18, %17 : vector<16x256xf32>
      %20 = arith.addf %15, %19 : vector<16x256xf32>
      %cst_15 = arith.constant 0.797884583 : f32
      %21 = vector.broadcast %cst_15 : f32 to vector<16x256xf32>
      %22 = arith.mulf %21, %20 : vector<16x256xf32>
      %23 = math.tanh %22 : vector<16x256xf32>
      %cst_16 = arith.constant 1.000000e+00 : f32
      %24 = vector.broadcast %cst_16 : f32 to vector<16x256xf32>
      %25 = arith.addf %24, %23 : vector<16x256xf32>
      %cst_17 = arith.constant 5.000000e-01 : f32
      %26 = vector.broadcast %cst_17 : f32 to vector<16x256xf32>
      %27 = arith.mulf %26, %25 : vector<16x256xf32>
      %28 = arith.mulf %15, %27 : vector<16x256xf32>
      %29 = arith.truncf %28 : vector<16x256xf32> to vector<16x256xbf16>
      %c0_18 = arith.constant 0 : index
      %c0_19 = arith.constant 0 : index
      %30 = vector.load %arg6[%c0_18, %c0_19] : memref<16x256xbf16, #tpu.memory_space<vmem>>, vector<16x256xbf16>
      tpu.vector_store %arg6[%c0_18, %c0_19], %29 {strides = array<i32>} : memref<16x256xbf16, #tpu.memory_space<vmem>>, vector<16x256xbf16>,
    } else {
    }
    return
  }
  func.func @transform_0(%arg0: i32, %arg1: i32, %arg2: i32) -> (i32, i32) {
    %c0_i32 = arith.constant 0 : i32
    return %arg0, %arg2 : i32, i32
  }
  func.func @transform_1(%arg0: i32, %arg1: i32, %arg2: i32) -> (i32, i32) {
    %c0_i32 = arith.constant 0 : i32
    return %arg2, %arg1 : i32, i32
  }
  func.func @transform_2(%arg0: i32, %arg1: i32, %arg2: i32) -> (i32, i32) {
    %c0_i32 = arith.constant 0 : i32
    %c0_i32_0 = arith.constant 0 : i32
    return %c0_i32, %arg1 : i32, i32
  }
  func.func @transform_3(%arg0: i32, %arg1: i32, %arg2: i32) -> (i32, i32) {
    %c0_i32 = arith.constant 0 : i32
    return %arg0, %arg1 : i32, i32
  }
}

module attributes {stable_mosaic.version = 11 : i64} {
  func.func @_linear_kernel(%arg0: i32, %arg1: i32, %arg2: i32, %arg3: memref<8x256xbf16, #tpu.memory_space<vmem>>, %arg4: memref<256x256xbf16, #tpu.memory_space<vmem>>, %arg5: memref<1x256xf32, #tpu.memory_space<vmem>>, %arg6: memref<8x256xf32, #tpu.memory_space<vmem>>, %arg7: memref<8x256xf32, #tpu.memory_space<vmem>>) attributes {dimension_semantics = [#tpu.dimension_semantics<parallel>, #tpu.dimension_semantics<parallel>, #tpu.dimension_semantics<arbitrary>], iteration_bounds = array<i64: 1, 1, 1>, scalar_prefetch = 0 : i64, scratch_operands = 1 : i64, tpu.core_type = #tpu.core_type<tc>, window_params = [{transform_indices = @transform_0, window_bounds = array<i64: 8, 256>}, {transform_indices = @transform_1, window_bounds = array<i64: 256, 256>}, {transform_indices = @transform_2, window_bounds = array<i64: 1, 256>}, {transform_indices = @transform_3, window_bounds = array<i64: 8, 256>}]} {
    %c0_i32 = arith.constant 0 : i32
    %0 = arith.cmpi eq, %arg2, %c0_i32 : i32
    %1 = arith.extui %0 : i1 to i32
    %c0_i32_0 = arith.constant 0 : i32
    %2 = arith.cmpi ne, %1, %c0_i32_0 : i32
    scf.if %2 {
      %cst_10 = arith.constant 0.000000e+00 : f32
      %12 = vector.broadcast %cst_10 : f32 to vector<8x256xf32>
      %c0_11 = arith.constant 0 : index
      %c0_12 = arith.constant 0 : index
      %13 = vector.load %arg7[%c0_11, %c0_12] : memref<8x256xf32, #tpu.memory_space<vmem>>, vector<8x256xf32>
      tpu.vector_store %arg7[%c0_11, %c0_12], %12 {strides = array<i32>} : memref<8x256xf32, #tpu.memory_space<vmem>>, vector<8x256xf32>,
    } else {
    }
    %c0 = arith.constant 0 : index
    %c0_1 = arith.constant 0 : index
    %3 = vector.load %arg7[%c0, %c0_1] : memref<8x256xf32, #tpu.memory_space<vmem>>, vector<8x256xf32>
    %c0_2 = arith.constant 0 : index
    %c0_3 = arith.constant 0 : index
    %4 = vector.load %arg3[%c0_2, %c0_3] : memref<8x256xbf16, #tpu.memory_space<vmem>>, vector<8x256xbf16>
    %c0_4 = arith.constant 0 : index
    %c0_5 = arith.constant 0 : index
    %5 = vector.load %arg4[%c0_4, %c0_5] : memref<256x256xbf16, #tpu.memory_space<vmem>>, vector<256x256xbf16>
    %cst = arith.constant dense<0.000000e+00> : vector<8x256xf32>
    %6 = tpu.matmul %4, %5, %cst {dimension_numbers = #tpu.dot_dimension_numbers<[1], [0], [0], [1], [0, 0, 1, 1], [], []>} : vector<8x256xbf16>, vector<256x256xbf16>, vector<8x256xf32> -> vector<8x256xf32>
    %7 = arith.addf %3, %6 : vector<8x256xf32>
    %c0_6 = arith.constant 0 : index
    %c0_7 = arith.constant 0 : index
    %8 = vector.load %arg7[%c0_6, %c0_7] : memref<8x256xf32, #tpu.memory_space<vmem>>, vector<8x256xf32>
    tpu.vector_store %arg7[%c0_6, %c0_7], %7 {strides = array<i32>} : memref<8x256xf32, #tpu.memory_space<vmem>>, vector<8x256xf32>,
    %c0_i32_8 = arith.constant 0 : i32
    %9 = arith.cmpi eq, %arg2, %c0_i32_8 : i32
    %10 = arith.extui %9 : i1 to i32
    %c0_i32_9 = arith.constant 0 : i32
    %11 = arith.cmpi ne, %10, %c0_i32_9 : i32
    scf.if %11 {
      %c0_10 = arith.constant 0 : index
      %c0_11 = arith.constant 0 : index
      %12 = vector.load %arg7[%c0_10, %c0_11] : memref<8x256xf32, #tpu.memory_space<vmem>>, vector<8x256xf32>
      %c0_12 = arith.constant 0 : index
      %c0_13 = arith.constant 0 : index
      %13 = vector.load %arg5[%c0_12, %c0_13] : memref<1x256xf32, #tpu.memory_space<vmem>>, vector<1x256xf32>
      %14 = vector.broadcast %13 : vector<1x256xf32> to vector<8x256xf32>
      %15 = arith.addf %12, %14 : vector<8x256xf32>
      %c0_14 = arith.constant 0 : index
      %c0_15 = arith.constant 0 : index
      %16 = vector.load %arg6[%c0_14, %c0_15] : memref<8x256xf32, #tpu.memory_space<vmem>>, vector<8x256xf32>
      tpu.vector_store %arg6[%c0_14, %c0_15], %15 {strides = array<i32>} : memref<8x256xf32, #tpu.memory_space<vmem>>, vector<8x256xf32>,
    } else {
    }
    return
  }
  func.func @transform_0(%arg0: i32, %arg1: i32, %arg2: i32) -> (i32, i32) {
    %c0_i32 = arith.constant 0 : i32
    return %arg0, %arg2 : i32, i32
  }
  func.func @transform_1(%arg0: i32, %arg1: i32, %arg2: i32) -> (i32, i32) {
    %c0_i32 = arith.constant 0 : i32
    return %arg2, %arg1 : i32, i32
  }
  func.func @transform_2(%arg0: i32, %arg1: i32, %arg2: i32) -> (i32, i32) {
    %c0_i32 = arith.constant 0 : i32
    %c0_i32_0 = arith.constant 0 : i32
    return %c0_i32, %arg1 : i32, i32
  }
  func.func @transform_3(%arg0: i32, %arg1: i32, %arg2: i32) -> (i32, i32) {
    %c0_i32 = arith.constant 0 : i32
    return %arg0, %arg1 : i32, i32
  }
}

module attributes {stable_mosaic.version = 11 : i64} {
  func.func @_ln_kernel(%arg0: i32, %arg1: memref<16x32xf32, #tpu.memory_space<vmem>>, %arg2: memref<1x32xf32, #tpu.memory_space<vmem>>, %arg3: memref<1x32xf32, #tpu.memory_space<vmem>>, %arg4: memref<16x32xbf16, #tpu.memory_space<vmem>>) attributes {dimension_semantics = [#tpu.dimension_semantics<parallel>], iteration_bounds = array<i64: 1>, scalar_prefetch = 0 : i64, scratch_operands = 0 : i64, tpu.core_type = #tpu.core_type<tc>, window_params = [{transform_indices = @transform_0, window_bounds = array<i64: 16, 32>}, {pipeline_mode = #tpu.pipeline_mode<synchronous>, transform_indices = @transform_1, window_bounds = array<i64: 1, 32>}, {pipeline_mode = #tpu.pipeline_mode<synchronous>, transform_indices = @transform_2, window_bounds = array<i64: 1, 32>}, {transform_indices = @transform_3, window_bounds = array<i64: 16, 32>}]} {
    %c0 = arith.constant 0 : index
    %c0_0 = arith.constant 0 : index
    %0 = vector.load %arg1[%c0, %c0_0] : memref<16x32xf32, #tpu.memory_space<vmem>>, vector<16x32xf32>
    %cst = arith.constant dense<0.000000e+00> : vector<16xf32>
    %1 = vector.multi_reduction <add>, %0, %cst [1] : vector<16x32xf32> to vector<16xf32>
    %2 = vector.shape_cast %1 : vector<16xf32> to vector<16x1xf32>
    %cst_1 = arith.constant 3.200000e+01 : f32
    %3 = vector.broadcast %cst_1 : f32 to vector<16x1xf32>
    %4 = arith.divf %2, %3 : vector<16x1xf32>
    %5 = vector.broadcast %4 : vector<16x1xf32> to vector<16x32xf32>
    %6 = arith.subf %0, %5 : vector<16x32xf32>
    %7 = arith.mulf %6, %6 : vector<16x32xf32>
    %cst_2 = arith.constant dense<0.000000e+00> : vector<16xf32>
    %8 = vector.multi_reduction <add>, %7, %cst_2 [1] : vector<16x32xf32> to vector<16xf32>
    %9 = vector.shape_cast %8 : vector<16xf32> to vector<16x1xf32>
    %cst_3 = arith.constant 3.200000e+01 : f32
    %10 = vector.broadcast %cst_3 : f32 to vector<16x1xf32>
    %11 = arith.divf %9, %10 : vector<16x1xf32>
    %cst_4 = arith.constant 9.99999997E-7 : f32
    %12 = vector.broadcast %cst_4 : f32 to vector<16x1xf32>
    %13 = arith.addf %11, %12 : vector<16x1xf32>
    %14 = math.rsqrt %13 : vector<16x1xf32>
    %15 = vector.broadcast %14 : vector<16x1xf32> to vector<16x32xf32>
    %16 = arith.mulf %6, %15 : vector<16x32xf32>
    %c0_5 = arith.constant 0 : index
    %c0_6 = arith.constant 0 : index
    %17 = vector.load %arg2[%c0_5, %c0_6] : memref<1x32xf32, #tpu.memory_space<vmem>>, vector<1x32xf32>
    %18 = vector.broadcast %17 : vector<1x32xf32> to vector<16x32xf32>
    %19 = arith.mulf %16, %18 : vector<16x32xf32>
    %c0_7 = arith.constant 0 : index
    %c0_8 = arith.constant 0 : index
    %20 = vector.load %arg3[%c0_7, %c0_8] : memref<1x32xf32, #tpu.memory_space<vmem>>, vector<1x32xf32>
    %21 = vector.broadcast %20 : vector<1x32xf32> to vector<16x32xf32>
    %22 = arith.addf %19, %21 : vector<16x32xf32>
    %23 = arith.truncf %22 : vector<16x32xf32> to vector<16x32xbf16>
    %c0_9 = arith.constant 0 : index
    %c0_10 = arith.constant 0 : index
    %24 = vector.load %arg4[%c0_9, %c0_10] : memref<16x32xbf16, #tpu.memory_space<vmem>>, vector<16x32xbf16>
    tpu.vector_store %arg4[%c0_9, %c0_10], %23 {strides = array<i32>} : memref<16x32xbf16, #tpu.memory_space<vmem>>, vector<16x32xbf16>,
    return
  }
  func.func @transform_0(%arg0: i32) -> (i32, i32) {
    %c0_i32 = arith.constant 0 : i32
    %c0_i32_0 = arith.constant 0 : i32
    return %arg0, %c0_i32 : i32, i32
  }
  func.func @transform_1(%arg0: i32) -> (i32, i32) {
    %c0_i32 = arith.constant 0 : i32
    %c0_i32_0 = arith.constant 0 : i32
    %c0_i32_1 = arith.constant 0 : i32
    return %c0_i32, %c0_i32_0 : i32, i32
  }
  func.func @transform_2(%arg0: i32) -> (i32, i32) {
    %c0_i32 = arith.constant 0 : i32
    %c0_i32_0 = arith.constant 0 : i32
    %c0_i32_1 = arith.constant 0 : i32
    return %c0_i32, %c0_i32_0 : i32, i32
  }
  func.func @transform_3(%arg0: i32) -> (i32, i32) {
    %c0_i32 = arith.constant 0 : i32
    %c0_i32_0 = arith.constant 0 : i32
    return %arg0, %c0_i32 : i32, i32
  }
}

module attributes {stable_mosaic.version = 11 : i64} {
  func.func @_attn_kernel(%arg0: i32, %arg1: i32, %arg2: memref<1x5x96xbf16, #tpu.memory_space<vmem>>, %arg3: memref<1x5x32xbf16, #tpu.memory_space<vmem>>, %arg4: memref<5x32xf32, #tpu.memory_space<vmem>>) attributes {dimension_semantics = [#tpu.dimension_semantics<parallel>, #tpu.dimension_semantics<parallel>], iteration_bounds = array<i64: 2, 1>, scalar_prefetch = 0 : i64, scratch_operands = 1 : i64, tpu.core_type = #tpu.core_type<tc>, window_params = [{transform_indices = @transform_0, window_bounds = array<i64: 1, 5, 96>}, {transform_indices = @transform_1, window_bounds = array<i64: 1, 5, 32>}]} {
    %c0 = arith.constant 0 : index
    %c0_0 = arith.constant 0 : index
    %c0_1 = arith.constant 0 : index
    %0 = vector.load %arg2[%c0, %c0_0, %c0_1] : memref<1x5x96xbf16, #tpu.memory_space<vmem>>, vector<1x5x8xbf16>
    %1 = vector.shape_cast %0 : vector<1x5x8xbf16> to vector<5x8xbf16>
    %cst = arith.constant 3.535160e-01 : bf16
    %2 = vector.broadcast %cst : bf16 to vector<5x8xbf16>
    %3 = arith.mulf %1, %2 : vector<5x8xbf16>
    %c0_2 = arith.constant 0 : index
    %c0_3 = arith.constant 0 : index
    %c32 = arith.constant 32 : index
    %4 = vector.load %arg2[%c0_2, %c0_3, %c32] : memref<1x5x96xbf16, #tpu.memory_space<vmem>>, vector<1x5x8xbf16>
    %5 = vector.shape_cast %4 : vector<1x5x8xbf16> to vector<5x8xbf16>
    %c0_4 = arith.constant 0 : index
    %c0_5 = arith.constant 0 : index
    %c64 = arith.constant 64 : index
    %6 = vector.load %arg2[%c0_4, %c0_5, %c64] : memref<1x5x96xbf16, #tpu.memory_space<vmem>>, vector<1x5x8xbf16>
    %7 = vector.shape_cast %6 : vector<1x5x8xbf16> to vector<5x8xbf16>
    %cst_6 = arith.constant dense<0.000000e+00> : vector<5x5xf32>
    %8 = tpu.matmul %3, %5, %cst_6 {dimension_numbers = #tpu.dot_dimension_numbers<[1], [1], [0], [0], [0, 0, 1, 0], [], []>} : vector<5x8xbf16>, vector<5x8xbf16>, vector<5x5xf32> -> vector<5x5xf32>
    %cst_7 = arith.constant dense<0xFF800000> : vector<5xf32>
    %9 = vector.multi_reduction <maximumf>, %8, %cst_7 [1] : vector<5x5xf32> to vector<5xf32>
    %10 = vector.shape_cast %9 : vector<5xf32> to vector<5x1xf32>
    %11 = vector.broadcast %10 : vector<5x1xf32> to vector<5x5xf32>
    %12 = arith.subf %8, %11 : vector<5x5xf32>
    %13 = math.exp %12 : vector<5x5xf32>
    %cst_8 = arith.constant dense<0.000000e+00> : vector<5xf32>
    %14 = vector.multi_reduction <add>, %13, %cst_8 [1] : vector<5x5xf32> to vector<5xf32>
    %15 = vector.shape_cast %14 : vector<5xf32> to vector<5x1xf32>
    %16 = tpu.reciprocal %15 {approx = true} : vector<5x1xf32> -> vector<5x1xf32>
    %17 = vector.broadcast %16 : vector<5x1xf32> to vector<5x5xf32>
    %18 = arith.mulf %13, %17 : vector<5x5xf32>
    %19 = arith.truncf %18 : vector<5x5xf32> to vector<5x5xbf16>
    %cst_9 = arith.constant dense<0.000000e+00> : vector<5x8xf32>
    %20 = tpu.matmul %19, %7, %cst_9 {dimension_numbers = #tpu.dot_dimension_numbers<[1], [0], [0], [1], [0, 0, 1, 1], [], []>} : vector<5x5xbf16>, vector<5x8xbf16>, vector<5x8xf32> -> vector<5x8xf32>
    %c0_10 = arith.constant 0 : index
    %c0_11 = arith.constant 0 : index
    %21 = vector.load %arg4[%c0_10, %c0_11] : memref<5x32xf32, #tpu.memory_space<vmem>>, vector<5x8xf32>
    tpu.vector_store %arg4[%c0_10, %c0_11], %20 {strides = array<i32>} : memref<5x32xf32, #tpu.memory_space<vmem>>, vector<5x8xf32>,
    %c0_12 = arith.constant 0 : index
    %c0_13 = arith.constant 0 : index
    %c8 = arith.constant 8 : index
    %22 = vector.load %arg2[%c0_12, %c0_13, %c8] : memref<1x5x96xbf16, #tpu.memory_space<vmem>>, vector<1x5x8xbf16>
    %23 = vector.shape_cast %22 : vector<1x5x8xbf16> to vector<5x8xbf16>
    %cst_14 = arith.constant 3.535160e-01 : bf16
    %24 = vector.broadcast %cst_14 : bf16 to vector<5x8xbf16>
    %25 = arith.mulf %23, %24 : vector<5x8xbf16>
    %c0_15 = arith.constant 0 : index
    %c0_16 = arith.constant 0 : index
    %c40 = arith.constant 40 : index
    %26 = vector.load %arg2[%c0_15, %c0_16, %c40] : memref<1x5x96xbf16, #tpu.memory_space<vmem>>, vector<1x5x8xbf16>
    %27 = vector.shape_cast %26 : vector<1x5x8xbf16> to vector<5x8xbf16>
    %c0_17 = arith.constant 0 : index
    %c0_18 = arith.constant 0 : index
    %c72 = arith.constant 72 : index
    %28 = vector.load %arg2[%c0_17, %c0_18, %c72] : memref<1x5x96xbf16, #tpu.memory_space<vmem>>, vector<1x5x8xbf16>
    %29 = vector.shape_cast %28 : vector<1x5x8xbf16> to vector<5x8xbf16>
    %cst_19 = arith.constant dense<0.000000e+00> : vector<5x5xf32>
    %30 = tpu.matmul %25, %27, %cst_19 {dimension_numbers = #tpu.dot_dimension_numbers<[1], [1], [0], [0], [0, 0, 1, 0], [], []>} : vector<5x8xbf16>, vector<5x8xbf16>, vector<5x5xf32> -> vector<5x5xf32>
    %cst_20 = arith.constant dense<0xFF800000> : vector<5xf32>
    %31 = vector.multi_reduction <maximumf>, %30, %cst_20 [1] : vector<5x5xf32> to vector<5xf32>
    %32 = vector.shape_cast %31 : vector<5xf32> to vector<5x1xf32>
    %33 = vector.broadcast %32 : vector<5x1xf32> to vector<5x5xf32>
    %34 = arith.subf %30, %33 : vector<5x5xf32>
    %35 = math.exp %34 : vector<5x5xf32>
    %cst_21 = arith.constant dense<0.000000e+00> : vector<5xf32>
    %36 = vector.multi_reduction <add>, %35, %cst_21 [1] : vector<5x5xf32> to vector<5xf32>
    %37 = vector.shape_cast %36 : vector<5xf32> to vector<5x1xf32>
    %38 = tpu.reciprocal %37 {approx = true} : vector<5x1xf32> -> vector<5x1xf32>
    %39 = vector.broadcast %38 : vector<5x1xf32> to vector<5x5xf32>
    %40 = arith.mulf %35, %39 : vector<5x5xf32>
    %41 = arith.truncf %40 : vector<5x5xf32> to vector<5x5xbf16>
    %cst_22 = arith.constant dense<0.000000e+00> : vector<5x8xf32>
    %42 = tpu.matmul %41, %29, %cst_22 {dimension_numbers = #tpu.dot_dimension_numbers<[1], [0], [0], [1], [0, 0, 1, 1], [], []>} : vector<5x5xbf16>, vector<5x8xbf16>, vector<5x8xf32> -> vector<5x8xf32>
    %c0_23 = arith.constant 0 : index
    %c8_24 = arith.constant 8 : index
    %43 = vector.load %arg4[%c0_23, %c8_24] : memref<5x32xf32, #tpu.memory_space<vmem>>, vector<5x8xf32>
    tpu.vector_store %arg4[%c0_23, %c8_24], %42 {strides = array<i32>} : memref<5x32xf32, #tpu.memory_space<vmem>>, vector<5x8xf32>,
    %c0_25 = arith.constant 0 : index
    %c0_26 = arith.constant 0 : index
    %c16 = arith.constant 16 : index
    %44 = vector.load %arg2[%c0_25, %c0_26, %c16] : memref<1x5x96xbf16, #tpu.memory_space<vmem>>, vector<1x5x8xbf16>
    %45 = vector.shape_cast %44 : vector<1x5x8xbf16> to vector<5x8xbf16>
    %cst_27 = arith.constant 3.535160e-01 : bf16
    %46 = vector.broadcast %cst_27 : bf16 to vector<5x8xbf16>
    %47 = arith.mulf %45, %46 : vector<5x8xbf16>
    %c0_28 = arith.constant 0 : index
    %c0_29 = arith.constant 0 : index
    %c48 = arith.constant 48 : index
    %48 = vector.load %arg2[%c0_28, %c0_29, %c48] : memref<1x5x96xbf16, #tpu.memory_space<vmem>>, vector<1x5x8xbf16>
    %49 = vector.shape_cast %48 : vector<1x5x8xbf16> to vector<5x8xbf16>
    %c0_30 = arith.constant 0 : index
    %c0_31 = arith.constant 0 : index
    %c80 = arith.constant 80 : index
    %50 = vector.load %arg2[%c0_30, %c0_31, %c80] : memref<1x5x96xbf16, #tpu.memory_space<vmem>>, vector<1x5x8xbf16>
    %51 = vector.shape_cast %50 : vector<1x5x8xbf16> to vector<5x8xbf16>
    %cst_32 = arith.constant dense<0.000000e+00> : vector<5x5xf32>
    %52 = tpu.matmul %47, %49, %cst_32 {dimension_numbers = #tpu.dot_dimension_numbers<[1], [1], [0], [0], [0, 0, 1, 0], [], []>} : vector<5x8xbf16>, vector<5x8xbf16>, vector<5x5xf32> -> vector<5x5xf32>
    %cst_33 = arith.constant dense<0xFF800000> : vector<5xf32>
    %53 = vector.multi_reduction <maximumf>, %52, %cst_33 [1] : vector<5x5xf32> to vector<5xf32>
    %54 = vector.shape_cast %53 : vector<5xf32> to vector<5x1xf32>
    %55 = vector.broadcast %54 : vector<5x1xf32> to vector<5x5xf32>
    %56 = arith.subf %52, %55 : vector<5x5xf32>
    %57 = math.exp %56 : vector<5x5xf32>
    %cst_34 = arith.constant dense<0.000000e+00> : vector<5xf32>
    %58 = vector.multi_reduction <add>, %57, %cst_34 [1] : vector<5x5xf32> to vector<5xf32>
    %59 = vector.shape_cast %58 : vector<5xf32> to vector<5x1xf32>
    %60 = tpu.reciprocal %59 {approx = true} : vector<5x1xf32> -> vector<5x1xf32>
    %61 = vector.broadcast %60 : vector<5x1xf32> to vector<5x5xf32>
    %62 = arith.mulf %57, %61 : vector<5x5xf32>
    %63 = arith.truncf %62 : vector<5x5xf32> to vector<5x5xbf16>
    %cst_35 = arith.constant dense<0.000000e+00> : vector<5x8xf32>
    %64 = tpu.matmul %63, %51, %cst_35 {dimension_numbers = #tpu.dot_dimension_numbers<[1], [0], [0], [1], [0, 0, 1, 1], [], []>} : vector<5x5xbf16>, vector<5x8xbf16>, vector<5x8xf32> -> vector<5x8xf32>
    %c0_36 = arith.constant 0 : index
    %c16_37 = arith.constant 16 : index
    %65 = vector.load %arg4[%c0_36, %c16_37] : memref<5x32xf32, #tpu.memory_space<vmem>>, vector<5x8xf32>
    tpu.vector_store %arg4[%c0_36, %c16_37], %64 {strides = array<i32>} : memref<5x32xf32, #tpu.memory_space<vmem>>, vector<5x8xf32>,
    %c0_38 = arith.constant 0 : index
    %c0_39 = arith.constant 0 : index
    %c24 = arith.constant 24 : index
    %66 = vector.load %arg2[%c0_38, %c0_39, %c24] : memref<1x5x96xbf16, #tpu.memory_space<vmem>>, vector<1x5x8xbf16>
    %67 = vector.shape_cast %66 : vector<1x5x8xbf16> to vector<5x8xbf16>
    %cst_40 = arith.constant 3.535160e-01 : bf16
    %68 = vector.broadcast %cst_40 : bf16 to vector<5x8xbf16>
    %69 = arith.mulf %67, %68 : vector<5x8xbf16>
    %c0_41 = arith.constant 0 : index
    %c0_42 = arith.constant 0 : index
    %c56 = arith.constant 56 : index
    %70 = vector.load %arg2[%c0_41, %c0_42, %c56] : memref<1x5x96xbf16, #tpu.memory_space<vmem>>, vector<1x5x8xbf16>
    %71 = vector.shape_cast %70 : vector<1x5x8xbf16> to vector<5x8xbf16>
    %c0_43 = arith.constant 0 : index
    %c0_44 = arith.constant 0 : index
    %c88 = arith.constant 88 : index
    %72 = vector.load %arg2[%c0_43, %c0_44, %c88] : memref<1x5x96xbf16, #tpu.memory_space<vmem>>, vector<1x5x8xbf16>
    %73 = vector.shape_cast %72 : vector<1x5x8xbf16> to vector<5x8xbf16>
    %cst_45 = arith.constant dense<0.000000e+00> : vector<5x5xf32>
    %74 = tpu.matmul %69, %71, %cst_45 {dimension_numbers = #tpu.dot_dimension_numbers<[1], [1], [0], [0], [0, 0, 1, 0], [], []>} : vector<5x8xbf16>, vector<5x8xbf16>, vector<5x5xf32> -> vector<5x5xf32>
    %cst_46 = arith.constant dense<0xFF800000> : vector<5xf32>
    %75 = vector.multi_reduction <maximumf>, %74, %cst_46 [1] : vector<5x5xf32> to vector<5xf32>
    %76 = vector.shape_cast %75 : vector<5xf32> to vector<5x1xf32>
    %77 = vector.broadcast %76 : vector<5x1xf32> to vector<5x5xf32>
    %78 = arith.subf %74, %77 : vector<5x5xf32>
    %79 = math.exp %78 : vector<5x5xf32>
    %cst_47 = arith.constant dense<0.000000e+00> : vector<5xf32>
    %80 = vector.multi_reduction <add>, %79, %cst_47 [1] : vector<5x5xf32> to vector<5xf32>
    %81 = vector.shape_cast %80 : vector<5xf32> to vector<5x1xf32>
    %82 = tpu.reciprocal %81 {approx = true} : vector<5x1xf32> -> vector<5x1xf32>
    %83 = vector.broadcast %82 : vector<5x1xf32> to vector<5x5xf32>
    %84 = arith.mulf %79, %83 : vector<5x5xf32>
    %85 = arith.truncf %84 : vector<5x5xf32> to vector<5x5xbf16>
    %cst_48 = arith.constant dense<0.000000e+00> : vector<5x8xf32>
    %86 = tpu.matmul %85, %73, %cst_48 {dimension_numbers = #tpu.dot_dimension_numbers<[1], [0], [0], [1], [0, 0, 1, 1], [], []>} : vector<5x5xbf16>, vector<5x8xbf16>, vector<5x8xf32> -> vector<5x8xf32>
    %c0_49 = arith.constant 0 : index
    %c24_50 = arith.constant 24 : index
    %87 = vector.load %arg4[%c0_49, %c24_50] : memref<5x32xf32, #tpu.memory_space<vmem>>, vector<5x8xf32>
    tpu.vector_store %arg4[%c0_49, %c24_50], %86 {strides = array<i32>} : memref<5x32xf32, #tpu.memory_space<vmem>>, vector<5x8xf32>,
    %c0_51 = arith.constant 0 : index
    %c0_52 = arith.constant 0 : index
    %88 = vector.load %arg4[%c0_51, %c0_52] : memref<5x32xf32, #tpu.memory_space<vmem>>, vector<5x32xf32>
    %89 = arith.truncf %88 : vector<5x32xf32> to vector<5x32xbf16>
    %c0_53 = arith.constant 0 : index
    %c0_54 = arith.constant 0 : index
    %c0_55 = arith.constant 0 : index
    %90 = vector.load %arg3[%c0_53, %c0_54, %c0_55] : memref<1x5x32xbf16, #tpu.memory_space<vmem>>, vector<1x5x32xbf16>
    %91 = vector.shape_cast %90 : vector<1x5x32xbf16> to vector<5x32xbf16>
    %92 = vector.shape_cast %89 : vector<5x32xbf16> to vector<1x5x32xbf16>
    tpu.vector_store %arg3[%c0_53, %c0_54, %c0_55], %92 {strides = array<i32>} : memref<1x5x32xbf16, #tpu.memory_space<vmem>>, vector<1x5x32xbf16>,
    return
  }
  func.func @transform_0(%arg0: i32, %arg1: i32) -> (i32, i32, i32) {
    %c0_i32 = arith.constant 0 : i32
    %c0_i32_0 = arith.constant 0 : i32
    %c0_i32_1 = arith.constant 0 : i32
    return %arg0, %c0_i32, %c0_i32_0 : i32, i32, i32
  }
  func.func @transform_1(%arg0: i32, %arg1: i32) -> (i32, i32, i32) {
    %c0_i32 = arith.constant 0 : i32
    %c0_i32_0 = arith.constant 0 : i32
    return %arg0, %arg1, %c0_i32 : i32, i32, i32
  }
}

module attributes {stable_mosaic.version = 11 : i64} {
  func.func @_linear_kernel(%arg0: i32, %arg1: i32, %arg2: i32, %arg3: memref<16x128xbf16, #tpu.memory_space<vmem>>, %arg4: memref<128x256xbf16, #tpu.memory_space<vmem>>, %arg5: memref<1x256xf32, #tpu.memory_space<vmem>>, %arg6: memref<16x256xf32, #tpu.memory_space<vmem>>, %arg7: memref<16x256xf32, #tpu.memory_space<vmem>>, %arg8: memref<16x256xf32, #tpu.memory_space<vmem>>) attributes {dimension_semantics = [#tpu.dimension_semantics<parallel>, #tpu.dimension_semantics<parallel>, #tpu.dimension_semantics<arbitrary>], iteration_bounds = array<i64: 1, 1, 1>, scalar_prefetch = 0 : i64, scratch_operands = 1 : i64, tpu.core_type = #tpu.core_type<tc>, window_params = [{transform_indices = @transform_0, window_bounds = array<i64: 16, 128>}, {transform_indices = @transform_1, window_bounds = array<i64: 128, 256>}, {transform_indices = @transform_2, window_bounds = array<i64: 1, 256>}, {transform_indices = @transform_3, window_bounds = array<i64: 16, 256>}, {transform_indices = @transform_4, window_bounds = array<i64: 16, 256>}]} {
    %c0_i32 = arith.constant 0 : i32
    %0 = arith.cmpi eq, %arg2, %c0_i32 : i32
    %1 = arith.extui %0 : i1 to i32
    %c0_i32_0 = arith.constant 0 : i32
    %2 = arith.cmpi ne, %1, %c0_i32_0 : i32
    scf.if %2 {
      %cst_10 = arith.constant 0.000000e+00 : f32
      %12 = vector.broadcast %cst_10 : f32 to vector<16x256xf32>
      %c0_11 = arith.constant 0 : index
      %c0_12 = arith.constant 0 : index
      %13 = vector.load %arg8[%c0_11, %c0_12] : memref<16x256xf32, #tpu.memory_space<vmem>>, vector<16x256xf32>
      tpu.vector_store %arg8[%c0_11, %c0_12], %12 {strides = array<i32>} : memref<16x256xf32, #tpu.memory_space<vmem>>, vector<16x256xf32>,
    } else {
    }
    %c0 = arith.constant 0 : index
    %c0_1 = arith.constant 0 : index
    %3 = vector.load %arg8[%c0, %c0_1] : memref<16x256xf32, #tpu.memory_space<vmem>>, vector<16x256xf32>
    %c0_2 = arith.constant 0 : index
    %c0_3 = arith.constant 0 : index
    %4 = vector.load %arg3[%c0_2, %c0_3] : memref<16x128xbf16, #tpu.memory_space<vmem>>, vector<16x128xbf16>
    %c0_4 = arith.constant 0 : index
    %c0_5 = arith.constant 0 : index
    %5 = vector.load %arg4[%c0_4, %c0_5] : memref<128x256xbf16, #tpu.memory_space<vmem>>, vector<128x256xbf16>
    %cst = arith.constant dense<0.000000e+00> : vector<16x256xf32>
    %6 = tpu.matmul %4, %5, %cst {dimension_numbers = #tpu.dot_dimension_numbers<[1], [0], [0], [1], [0, 0, 1, 1], [], []>} : vector<16x128xbf16>, vector<128x256xbf16>, vector<16x256xf32> -> vector<16x256xf32>
    %7 = arith.addf %3, %6 : vector<16x256xf32>
    %c0_6 = arith.constant 0 : index
    %c0_7 = arith.constant 0 : index
    %8 = vector.load %arg8[%c0_6, %c0_7] : memref<16x256xf32, #tpu.memory_space<vmem>>, vector<16x256xf32>
    tpu.vector_store %arg8[%c0_6, %c0_7], %7 {strides = array<i32>} : memref<16x256xf32, #tpu.memory_space<vmem>>, vector<16x256xf32>,
    %c0_i32_8 = arith.constant 0 : i32
    %9 = arith.cmpi eq, %arg2, %c0_i32_8 : i32
    %10 = arith.extui %9 : i1 to i32
    %c0_i32_9 = arith.constant 0 : i32
    %11 = arith.cmpi ne, %10, %c0_i32_9 : i32
    scf.if %11 {
      %c0_10 = arith.constant 0 : index
      %c0_11 = arith.constant 0 : index
      %12 = vector.load %arg8[%c0_10, %c0_11] : memref<16x256xf32, #tpu.memory_space<vmem>>, vector<16x256xf32>
      %c0_12 = arith.constant 0 : index
      %c0_13 = arith.constant 0 : index
      %13 = vector.load %arg5[%c0_12, %c0_13] : memref<1x256xf32, #tpu.memory_space<vmem>>, vector<1x256xf32>
      %14 = vector.broadcast %13 : vector<1x256xf32> to vector<16x256xf32>
      %15 = arith.addf %12, %14 : vector<16x256xf32>
      %c0_14 = arith.constant 0 : index
      %c0_15 = arith.constant 0 : index
      %16 = vector.load %arg6[%c0_14, %c0_15] : memref<16x256xf32, #tpu.memory_space<vmem>>, vector<16x256xf32>
      %17 = arith.addf %15, %16 : vector<16x256xf32>
      %c0_16 = arith.constant 0 : index
      %c0_17 = arith.constant 0 : index
      %18 = vector.load %arg7[%c0_16, %c0_17] : memref<16x256xf32, #tpu.memory_space<vmem>>, vector<16x256xf32>
      tpu.vector_store %arg7[%c0_16, %c0_17], %17 {strides = array<i32>} : memref<16x256xf32, #tpu.memory_space<vmem>>, vector<16x256xf32>,
    } else {
    }
    return
  }
  func.func @transform_0(%arg0: i32, %arg1: i32, %arg2: i32) -> (i32, i32) {
    %c0_i32 = arith.constant 0 : i32
    return %arg0, %arg2 : i32, i32
  }
  func.func @transform_1(%arg0: i32, %arg1: i32, %arg2: i32) -> (i32, i32) {
    %c0_i32 = arith.constant 0 : i32
    return %arg2, %arg1 : i32, i32
  }
  func.func @transform_2(%arg0: i32, %arg1: i32, %arg2: i32) -> (i32, i32) {
    %c0_i32 = arith.constant 0 : i32
    %c0_i32_0 = arith.constant 0 : i32
    return %c0_i32, %arg1 : i32, i32
  }
  func.func @transform_3(%arg0: i32, %arg1: i32, %arg2: i32) -> (i32, i32) {
    %c0_i32 = arith.constant 0 : i32
    return %arg0, %arg1 : i32, i32
  }
  func.func @transform_4(%arg0: i32, %arg1: i32, %arg2: i32) -> (i32, i32) {
    %c0_i32 = arith.constant 0 : i32
    return %arg0, %arg1 : i32, i32
  }
}

module attributes {stable_mosaic.version = 11 : i64} {
  func.func @_attn_kernel(%arg0: i32, %arg1: i32, %arg2: memref<1x8x32xbf16, #tpu.memory_space<vmem>>, %arg3: memref<1x5x64xbf16, #tpu.memory_space<vmem>>, %arg4: memref<1x8x32xbf16, #tpu.memory_space<vmem>>, %arg5: memref<8x32xf32, #tpu.memory_space<vmem>>) attributes {dimension_semantics = [#tpu.dimension_semantics<parallel>, #tpu.dimension_semantics<parallel>], iteration_bounds = array<i64: 2, 1>, scalar_prefetch = 0 : i64, scratch_operands = 1 : i64, tpu.core_type = #tpu.core_type<tc>, window_params = [{transform_indices = @transform_0, window_bounds = array<i64: 1, 8, 32>}, {transform_indices = @transform_1, window_bounds = array<i64: 1, 5, 64>}, {transform_indices = @transform_2, window_bounds = array<i64: 1, 8, 32>}]} {
    %c0 = arith.constant 0 : index
    %c0_0 = arith.constant 0 : index
    %c0_1 = arith.constant 0 : index
    %0 = vector.load %arg2[%c0, %c0_0, %c0_1] : memref<1x8x32xbf16, #tpu.memory_space<vmem>>, vector<1x8x8xbf16>
    %1 = vector.shape_cast %0 : vector<1x8x8xbf16> to vector<8x8xbf16>
    %cst = arith.constant 3.535160e-01 : bf16
    %2 = vector.broadcast %cst : bf16 to vector<8x8xbf16>
    %3 = arith.mulf %1, %2 : vector<8x8xbf16>
    %c0_2 = arith.constant 0 : index
    %c0_3 = arith.constant 0 : index
    %c0_4 = arith.constant 0 : index
    %4 = vector.load %arg3[%c0_2, %c0_3, %c0_4] : memref<1x5x64xbf16, #tpu.memory_space<vmem>>, vector<1x5x8xbf16>
    %5 = vector.shape_cast %4 : vector<1x5x8xbf16> to vector<5x8xbf16>
    %c0_5 = arith.constant 0 : index
    %c0_6 = arith.constant 0 : index
    %c32 = arith.constant 32 : index
    %6 = vector.load %arg3[%c0_5, %c0_6, %c32] : memref<1x5x64xbf16, #tpu.memory_space<vmem>>, vector<1x5x8xbf16>
    %7 = vector.shape_cast %6 : vector<1x5x8xbf16> to vector<5x8xbf16>
    %cst_7 = arith.constant dense<0.000000e+00> : vector<8x5xf32>
    %8 = tpu.matmul %3, %5, %cst_7 {dimension_numbers = #tpu.dot_dimension_numbers<[1], [1], [0], [0], [0, 0, 1, 0], [], []>} : vector<8x8xbf16>, vector<5x8xbf16>, vector<8x5xf32> -> vector<8x5xf32>
    %cst_8 = arith.constant dense<0xFF800000> : vector<8xf32>
    %9 = vector.multi_reduction <maximumf>, %8, %cst_8 [1] : vector<8x5xf32> to vector<8xf32>
    %10 = vector.shape_cast %9 : vector<8xf32> to vector<8x1xf32>
    %11 = vector.broadcast %10 : vector<8x1xf32> to vector<8x5xf32>
    %12 = arith.subf %8, %11 : vector<8x5xf32>
    %13 = math.exp %12 : vector<8x5xf32>
    %cst_9 = arith.constant dense<0.000000e+00> : vector<8xf32>
    %14 = vector.multi_reduction <add>, %13, %cst_9 [1] : vector<8x5xf32> to vector<8xf32>
    %15 = vector.shape_cast %14 : vector<8xf32> to vector<8x1xf32>
    %16 = tpu.reciprocal %15 {approx = true} : vector<8x1xf32> -> vector<8x1xf32>
    %17 = vector.broadcast %16 : vector<8x1xf32> to vector<8x5xf32>
    %18 = arith.mulf %13, %17 : vector<8x5xf32>
    %19 = arith.truncf %18 : vector<8x5xf32> to vector<8x5xbf16>
    %cst_10 = arith.constant dense<0.000000e+00> : vector<8x8xf32>
    %20 = tpu.matmul %19, %7, %cst_10 {dimension_numbers = #tpu.dot_dimension_numbers<[1], [0], [0], [1], [0, 0, 1, 1], [], []>} : vector<8x5xbf16>, vector<5x8xbf16>, vector<8x8xf32> -> vector<8x8xf32>
    %c0_11 = arith.constant 0 : index
    %c0_12 = arith.constant 0 : index
    %21 = vector.load %arg5[%c0_11, %c0_12] : memref<8x32xf32, #tpu.memory_space<vmem>>, vector<8x8xf32>
    tpu.vector_store %arg5[%c0_11, %c0_12], %20 {strides = array<i32>} : memref<8x32xf32, #tpu.memory_space<vmem>>, vector<8x8xf32>,
    %c0_13 = arith.constant 0 : index
    %c0_14 = arith.constant 0 : index
    %c8 = arith.constant 8 : index
    %22 = vector.load %arg2[%c0_13, %c0_14, %c8] : memref<1x8x32xbf16, #tpu.memory_space<vmem>>, vector<1x8x8xbf16>
    %23 = vector.shape_cast %22 : vector<1x8x8xbf16> to vector<8x8xbf16>
    %cst_15 = arith.constant 3.535160e-01 : bf16
    %24 = vector.broadcast %cst_15 : bf16 to vector<8x8xbf16>
    %25 = arith.mulf %23, %24 : vector<8x8xbf16>
    %c0_16 = arith.constant 0 : index
    %c0_17 = arith.constant 0 : index
    %c8_18 = arith.constant 8 : index
    %26 = vector.load %arg3[%c0_16, %c0_17, %c8_18] : memref<1x5x64xbf16, #tpu.memory_space<vmem>>, vector<1x5x8xbf16>
    %27 = vector.shape_cast %26 : vector<1x5x8xbf16> to vector<5x8xbf16>
    %c0_19 = arith.constant 0 : index
    %c0_20 = arith.constant 0 : index
    %c40 = arith.constant 40 : index
    %28 = vector.load %arg3[%c0_19, %c0_20, %c40] : memref<1x5x64xbf16, #tpu.memory_space<vmem>>, vector<1x5x8xbf16>
    %29 = vector.shape_cast %28 : vector<1x5x8xbf16> to vector<5x8xbf16>
    %cst_21 = arith.constant dense<0.000000e+00> : vector<8x5xf32>
    %30 = tpu.matmul %25, %27, %cst_21 {dimension_numbers = #tpu.dot_dimension_numbers<[1], [1], [0], [0], [0, 0, 1, 0], [], []>} : vector<8x8xbf16>, vector<5x8xbf16>, vector<8x5xf32> -> vector<8x5xf32>
    %cst_22 = arith.constant dense<0xFF800000> : vector<8xf32>
    %31 = vector.multi_reduction <maximumf>, %30, %cst_22 [1] : vector<8x5xf32> to vector<8xf32>
    %32 = vector.shape_cast %31 : vector<8xf32> to vector<8x1xf32>
    %33 = vector.broadcast %32 : vector<8x1xf32> to vector<8x5xf32>
    %34 = arith.subf %30, %33 : vector<8x5xf32>
    %35 = math.exp %34 : vector<8x5xf32>
    %cst_23 = arith.constant dense<0.000000e+00> : vector<8xf32>
    %36 = vector.multi_reduction <add>, %35, %cst_23 [1] : vector<8x5xf32> to vector<8xf32>
    %37 = vector.shape_cast %36 : vector<8xf32> to vector<8x1xf32>
    %38 = tpu.reciprocal %37 {approx = true} : vector<8x1xf32> -> vector<8x1xf32>
    %39 = vector.broadcast %38 : vector<8x1xf32> to vector<8x5xf32>
    %40 = arith.mulf %35, %39 : vector<8x5xf32>
    %41 = arith.truncf %40 : vector<8x5xf32> to vector<8x5xbf16>
    %cst_24 = arith.constant dense<0.000000e+00> : vector<8x8xf32>
    %42 = tpu.matmul %41, %29, %cst_24 {dimension_numbers = #tpu.dot_dimension_numbers<[1], [0], [0], [1], [0, 0, 1, 1], [], []>} : vector<8x5xbf16>, vector<5x8xbf16>, vector<8x8xf32> -> vector<8x8xf32>
    %c0_25 = arith.constant 0 : index
    %c8_26 = arith.constant 8 : index
    %43 = vector.load %arg5[%c0_25, %c8_26] : memref<8x32xf32, #tpu.memory_space<vmem>>, vector<8x8xf32>
    tpu.vector_store %arg5[%c0_25, %c8_26], %42 {strides = array<i32>} : memref<8x32xf32, #tpu.memory_space<vmem>>, vector<8x8xf32>,
    %c0_27 = arith.constant 0 : index
    %c0_28 = arith.constant 0 : index
    %c16 = arith.constant 16 : index
    %44 = vector.load %arg2[%c0_27, %c0_28, %c16] : memref<1x8x32xbf16, #tpu.memory_space<vmem>>, vector<1x8x8xbf16>
    %45 = vector.shape_cast %44 : vector<1x8x8xbf16> to vector<8x8xbf16>
    %cst_29 = arith.constant 3.535160e-01 : bf16
    %46 = vector.broadcast %cst_29 : bf16 to vector<8x8xbf16>
    %47 = arith.mulf %45, %46 : vector<8x8xbf16>
    %c0_30 = arith.constant 0 : index
    %c0_31 = arith.constant 0 : index
    %c16_32 = arith.constant 16 : index
    %48 = vector.load %arg3[%c0_30, %c0_31, %c16_32] : memref<1x5x64xbf16, #tpu.memory_space<vmem>>, vector<1x5x8xbf16>
    %49 = vector.shape_cast %48 : vector<1x5x8xbf16> to vector<5x8xbf16>
    %c0_33 = arith.constant 0 : index
    %c0_34 = arith.constant 0 : index
    %c48 = arith.constant 48 : index
    %50 = vector.load %arg3[%c0_33, %c0_34, %c48] : memref<1x5x64xbf16, #tpu.memory_space<vmem>>, vector<1x5x8xbf16>
    %51 = vector.shape_cast %50 : vector<1x5x8xbf16> to vector<5x8xbf16>
    %cst_35 = arith.constant dense<0.000000e+00> : vector<8x5xf32>
    %52 = tpu.matmul %47, %49, %cst_35 {dimension_numbers = #tpu.dot_dimension_numbers<[1], [1], [0], [0], [0, 0, 1, 0], [], []>} : vector<8x8xbf16>, vector<5x8xbf16>, vector<8x5xf32> -> vector<8x5xf32>
    %cst_36 = arith.constant dense<0xFF800000> : vector<8xf32>
    %53 = vector.multi_reduction <maximumf>, %52, %cst_36 [1] : vector<8x5xf32> to vector<8xf32>
    %54 = vector.shape_cast %53 : vector<8xf32> to vector<8x1xf32>
    %55 = vector.broadcast %54 : vector<8x1xf32> to vector<8x5xf32>
    %56 = arith.subf %52, %55 : vector<8x5xf32>
    %57 = math.exp %56 : vector<8x5xf32>
    %cst_37 = arith.constant dense<0.000000e+00> : vector<8xf32>
    %58 = vector.multi_reduction <add>, %57, %cst_37 [1] : vector<8x5xf32> to vector<8xf32>
    %59 = vector.shape_cast %58 : vector<8xf32> to vector<8x1xf32>
    %60 = tpu.reciprocal %59 {approx = true} : vector<8x1xf32> -> vector<8x1xf32>
    %61 = vector.broadcast %60 : vector<8x1xf32> to vector<8x5xf32>
    %62 = arith.mulf %57, %61 : vector<8x5xf32>
    %63 = arith.truncf %62 : vector<8x5xf32> to vector<8x5xbf16>
    %cst_38 = arith.constant dense<0.000000e+00> : vector<8x8xf32>
    %64 = tpu.matmul %63, %51, %cst_38 {dimension_numbers = #tpu.dot_dimension_numbers<[1], [0], [0], [1], [0, 0, 1, 1], [], []>} : vector<8x5xbf16>, vector<5x8xbf16>, vector<8x8xf32> -> vector<8x8xf32>
    %c0_39 = arith.constant 0 : index
    %c16_40 = arith.constant 16 : index
    %65 = vector.load %arg5[%c0_39, %c16_40] : memref<8x32xf32, #tpu.memory_space<vmem>>, vector<8x8xf32>
    tpu.vector_store %arg5[%c0_39, %c16_40], %64 {strides = array<i32>} : memref<8x32xf32, #tpu.memory_space<vmem>>, vector<8x8xf32>,
    %c0_41 = arith.constant 0 : index
    %c0_42 = arith.constant 0 : index
    %c24 = arith.constant 24 : index
    %66 = vector.load %arg2[%c0_41, %c0_42, %c24] : memref<1x8x32xbf16, #tpu.memory_space<vmem>>, vector<1x8x8xbf16>
    %67 = vector.shape_cast %66 : vector<1x8x8xbf16> to vector<8x8xbf16>
    %cst_43 = arith.constant 3.535160e-01 : bf16
    %68 = vector.broadcast %cst_43 : bf16 to vector<8x8xbf16>
    %69 = arith.mulf %67, %68 : vector<8x8xbf16>
    %c0_44 = arith.constant 0 : index
    %c0_45 = arith.constant 0 : index
    %c24_46 = arith.constant 24 : index
    %70 = vector.load %arg3[%c0_44, %c0_45, %c24_46] : memref<1x5x64xbf16, #tpu.memory_space<vmem>>, vector<1x5x8xbf16>
    %71 = vector.shape_cast %70 : vector<1x5x8xbf16> to vector<5x8xbf16>
    %c0_47 = arith.constant 0 : index
    %c0_48 = arith.constant 0 : index
    %c56 = arith.constant 56 : index
    %72 = vector.load %arg3[%c0_47, %c0_48, %c56] : memref<1x5x64xbf16, #tpu.memory_space<vmem>>, vector<1x5x8xbf16>
    %73 = vector.shape_cast %72 : vector<1x5x8xbf16> to vector<5x8xbf16>
    %cst_49 = arith.constant dense<0.000000e+00> : vector<8x5xf32>
    %74 = tpu.matmul %69, %71, %cst_49 {dimension_numbers = #tpu.dot_dimension_numbers<[1], [1], [0], [0], [0, 0, 1, 0], [], []>} : vector<8x8xbf16>, vector<5x8xbf16>, vector<8x5xf32> -> vector<8x5xf32>
    %cst_50 = arith.constant dense<0xFF800000> : vector<8xf32>
    %75 = vector.multi_reduction <maximumf>, %74, %cst_50 [1] : vector<8x5xf32> to vector<8xf32>
    %76 = vector.shape_cast %75 : vector<8xf32> to vector<8x1xf32>
    %77 = vector.broadcast %76 : vector<8x1xf32> to vector<8x5xf32>
    %78 = arith.subf %74, %77 : vector<8x5xf32>
    %79 = math.exp %78 : vector<8x5xf32>
    %cst_51 = arith.constant dense<0.000000e+00> : vector<8xf32>
    %80 = vector.multi_reduction <add>, %79, %cst_51 [1] : vector<8x5xf32> to vector<8xf32>
    %81 = vector.shape_cast %80 : vector<8xf32> to vector<8x1xf32>
    %82 = tpu.reciprocal %81 {approx = true} : vector<8x1xf32> -> vector<8x1xf32>
    %83 = vector.broadcast %82 : vector<8x1xf32> to vector<8x5xf32>
    %84 = arith.mulf %79, %83 : vector<8x5xf32>
    %85 = arith.truncf %84 : vector<8x5xf32> to vector<8x5xbf16>
    %cst_52 = arith.constant dense<0.000000e+00> : vector<8x8xf32>
    %86 = tpu.matmul %85, %73, %cst_52 {dimension_numbers = #tpu.dot_dimension_numbers<[1], [0], [0], [1], [0, 0, 1, 1], [], []>} : vector<8x5xbf16>, vector<5x8xbf16>, vector<8x8xf32> -> vector<8x8xf32>
    %c0_53 = arith.constant 0 : index
    %c24_54 = arith.constant 24 : index
    %87 = vector.load %arg5[%c0_53, %c24_54] : memref<8x32xf32, #tpu.memory_space<vmem>>, vector<8x8xf32>
    tpu.vector_store %arg5[%c0_53, %c24_54], %86 {strides = array<i32>} : memref<8x32xf32, #tpu.memory_space<vmem>>, vector<8x8xf32>,
    %c0_55 = arith.constant 0 : index
    %c0_56 = arith.constant 0 : index
    %88 = vector.load %arg5[%c0_55, %c0_56] : memref<8x32xf32, #tpu.memory_space<vmem>>, vector<8x32xf32>
    %89 = arith.truncf %88 : vector<8x32xf32> to vector<8x32xbf16>
    %c0_57 = arith.constant 0 : index
    %c0_58 = arith.constant 0 : index
    %c0_59 = arith.constant 0 : index
    %90 = vector.load %arg4[%c0_57, %c0_58, %c0_59] : memref<1x8x32xbf16, #tpu.memory_space<vmem>>, vector<1x8x32xbf16>
    %91 = vector.shape_cast %90 : vector<1x8x32xbf16> to vector<8x32xbf16>
    %92 = vector.shape_cast %89 : vector<8x32xbf16> to vector<1x8x32xbf16>
    tpu.vector_store %arg4[%c0_57, %c0_58, %c0_59], %92 {strides = array<i32>} : memref<1x8x32xbf16, #tpu.memory_space<vmem>>, vector<1x8x32xbf16>,
    return
  }
  func.func @transform_0(%arg0: i32, %arg1: i32) -> (i32, i32, i32) {
    %c0_i32 = arith.constant 0 : i32
    %c0_i32_0 = arith.constant 0 : i32
    %c0_i32_1 = arith.constant 0 : i32
    return %arg0, %c0_i32, %c0_i32_0 : i32, i32, i32
  }
  func.func @transform_1(%arg0: i32, %arg1: i32) -> (i32, i32, i32) {
    %c0_i32 = arith.constant 0 : i32
    %c0_i32_0 = arith.constant 0 : i32
    %c0_i32_1 = arith.constant 0 : i32
    return %arg0, %c0_i32, %c0_i32_0 : i32, i32, i32
  }
  func.func @transform_2(%arg0: i32, %arg1: i32) -> (i32, i32, i32) {
    %c0_i32 = arith.constant 0 : i32
    %c0_i32_0 = arith.constant 0 : i32
    return %arg0, %arg1, %c0_i32 : i32, i32, i32
  }
}

module attributes {stable_mosaic.version = 11 : i64} {
  func.func @_lin_ce_kernel(%arg0: i32, %arg1: i32, %arg2: memref<16x32xbf16, #tpu.memory_space<vmem>>, %arg3: memref<32x512xbf16, #tpu.memory_space<vmem>>, %arg4: memref<1x512xf32, #tpu.memory_space<vmem>>, %arg5: memref<16x1xi32, #tpu.memory_space<vmem>>, %arg6: memref<16x1xf32, #tpu.memory_space<vmem>>, %arg7: memref<16x1xf32, #tpu.memory_space<vmem>>, %arg8: memref<16x1xf32, #tpu.memory_space<vmem>>, %arg9: memref<16x1xf32, #tpu.memory_space<vmem>>, %arg10: memref<16x1xf32, #tpu.memory_space<vmem>>) attributes {dimension_semantics = [#tpu.dimension_semantics<parallel>, #tpu.dimension_semantics<arbitrary>], iteration_bounds = array<i64: 1, 1>, scalar_prefetch = 0 : i64, scratch_operands = 3 : i64, tpu.core_type = #tpu.core_type<tc>, window_params = [{transform_indices = @transform_0, window_bounds = array<i64: 16, 32>}, {transform_indices = @transform_1, window_bounds = array<i64: 32, 512>}, {transform_indices = @transform_2, window_bounds = array<i64: 1, 512>}, {transform_indices = @transform_3, window_bounds = array<i64: 16, 1>}, {transform_indices = @transform_4, window_bounds = array<i64: 16, 1>}, {transform_indices = @transform_5, window_bounds = array<i64: 16, 1>}]} {
    %c0_i32 = arith.constant 0 : i32
    %0 = arith.cmpi eq, %arg1, %c0_i32 : i32
    %1 = arith.extui %0 : i1 to i32
    %c0_i32_0 = arith.constant 0 : i32
    %2 = arith.cmpi ne, %1, %c0_i32_0 : i32
    scf.if %2 {
      %cst_28 = arith.constant 0xFF800000 : f32
      %43 = vector.broadcast %cst_28 : f32 to vector<16x1xf32>
      %c0_29 = arith.constant 0 : index
      %c0_30 = arith.constant 0 : index
      %44 = vector.load %arg8[%c0_29, %c0_30] : memref<16x1xf32, #tpu.memory_space<vmem>>, vector<16x1xf32>
      tpu.vector_store %arg8[%c0_29, %c0_30], %43 {strides = array<i32>} : memref<16x1xf32, #tpu.memory_space<vmem>>, vector<16x1xf32>,
      %cst_31 = arith.constant 0.000000e+00 : f32
      %45 = vector.broadcast %cst_31 : f32 to vector<16x1xf32>
      %c0_32 = arith.constant 0 : index
      %c0_33 = arith.constant 0 : index
      %46 = vector.load %arg9[%c0_32, %c0_33] : memref<16x1xf32, #tpu.memory_space<vmem>>, vector<16x1xf32>
      tpu.vector_store %arg9[%c0_32, %c0_33], %45 {strides = array<i32>} : memref<16x1xf32, #tpu.memory_space<vmem>>, vector<16x1xf32>,
      %cst_34 = arith.constant 0.000000e+00 : f32
      %47 = vector.broadcast %cst_34 : f32 to vector<16x1xf32>
      %c0_35 = arith.constant 0 : index
      %c0_36 = arith.constant 0 : index
      %48 = vector.load %arg10[%c0_35, %c0_36] : memref<16x1xf32, #tpu.memory_space<vmem>>, vector<16x1xf32>
      tpu.vector_store %arg10[%c0_35, %c0_36], %47 {strides = array<i32>} : memref<16x1xf32, #tpu.memory_space<vmem>>, vector<16x1xf32>,
    } else {
    }
    %c0 = arith.constant 0 : index
    %c0_1 = arith.constant 0 : index
    %3 = vector.load %arg2[%c0, %c0_1] : memref<16x32xbf16, #tpu.memory_space<vmem>>, vector<16x32xbf16>
    %c0_2 = arith.constant 0 : index
    %c0_3 = arith.constant 0 : index
    %4 = vector.load %arg3[%c0_2, %c0_3] : memref<32x512xbf16, #tpu.memory_space<vmem>>, vector<32x512xbf16>
    %cst = arith.constant dense<0.000000e+00> : vector<16x512xf32>
    %5 = tpu.matmul %3, %4, %cst {dimension_numbers = #tpu.dot_dimension_numbers<[1], [0], [0], [1], [0, 0, 1, 1], [], []>} : vector<16x32xbf16>, vector<32x512xbf16>, vector<16x512xf32> -> vector<16x512xf32>
    %c0_4 = arith.constant 0 : index
    %c0_5 = arith.constant 0 : index
    %6 = vector.load %arg4[%c0_4, %c0_5] : memref<1x512xf32, #tpu.memory_space<vmem>>, vector<1x512xf32>
    %7 = vector.broadcast %6 : vector<1x512xf32> to vector<16x512xf32>
    %8 = arith.addf %5, %7 : vector<16x512xf32>
    %c0_6 = arith.constant 0 : index
    %c0_7 = arith.constant 0 : index
    %9 = vector.load %arg5[%c0_6, %c0_7] : memref<16x1xi32, #tpu.memory_space<vmem>>, vector<16x1xi32>
    %10 = tpu.iota {dimensions = array<i32: 1>} : vector<16x512xi32>
    %c512_i32 = arith.constant 512 : i32
    %11 = arith.muli %arg1, %c512_i32 : i32
    %12 = vector.broadcast %11 : i32 to vector<16x512xi32>
    %13 = arith.addi %10, %12 : vector<16x512xi32>
    %c0_8 = arith.constant 0 : index
    %c0_9 = arith.constant 0 : index
    %14 = vector.load %arg10[%c0_8, %c0_9] : memref<16x1xf32, #tpu.memory_space<vmem>>, vector<16x1xf32>
    %15 = vector.broadcast %9 : vector<16x1xi32> to vector<16x512xi32>
    %16 = arith.cmpi eq, %13, %15 : vector<16x512xi32>
    %cst_10 = arith.constant 0.000000e+00 : f32
    %17 = vector.broadcast %cst_10 : f32 to vector<16x512xf32>
    %18 = arith.select %16, %8, %17 : vector<16x512xi1>, vector<16x512xf32>
    %cst_11 = arith.constant dense<0.000000e+00> : vector<16xf32>
    %19 = vector.multi_reduction <add>, %18, %cst_11 [1] : vector<16x512xf32> to vector<16xf32>
    %20 = vector.shape_cast %19 : vector<16xf32> to vector<16x1xf32>
    %21 = arith.addf %14, %20 : vector<16x1xf32>
    %c0_12 = arith.constant 0 : index
    %c0_13 = arith.constant 0 : index
    %22 = vector.load %arg10[%c0_12, %c0_13] : memref<16x1xf32, #tpu.memory_space<vmem>>, vector<16x1xf32>
    tpu.vector_store %arg10[%c0_12, %c0_13], %21 {strides = array<i32>} : memref<16x1xf32, #tpu.memory_space<vmem>>, vector<16x1xf32>,
    %c0_14 = arith.constant 0 : index
    %c0_15 = arith.constant 0 : index
    %23 = vector.load %arg8[%c0_14, %c0_15] : memref<16x1xf32, #tpu.memory_space<vmem>>, vector<16x1xf32>
    %cst_16 = arith.constant dense<0xFF800000> : vector<16xf32>
    %24 = vector.multi_reduction <maximumf>, %8, %cst_16 [1] : vector<16x512xf32> to vector<16xf32>
    %25 = vector.shape_cast %24 : vector<16xf32> to vector<16x1xf32>
    %26 = arith.maximumf %23, %25 : vector<16x1xf32>
    %c0_17 = arith.constant 0 : index
    %c0_18 = arith.constant 0 : index
    %27 = vector.load %arg9[%c0_17, %c0_18] : memref<16x1xf32, #tpu.memory_space<vmem>>, vector<16x1xf32>
    %c0_19 = arith.constant 0 : index
    %c0_20 = arith.constant 0 : index
    %28 = vector.load %arg8[%c0_19, %c0_20] : memref<16x1xf32, #tpu.memory_space<vmem>>, vector<16x1xf32>
    %29 = arith.subf %28, %26 : vector<16x1xf32>
    %30 = math.exp %29 : vector<16x1xf32>
    %31 = arith.mulf %27, %30 : vector<16x1xf32>
    %32 = vector.broadcast %26 : vector<16x1xf32> to vector<16x512xf32>
    %33 = arith.subf %8, %32 : vector<16x512xf32>
    %34 = math.exp %33 : vector<16x512xf32>
    %cst_21 = arith.constant dense<0.000000e+00> : vector<16xf32>
    %35 = vector.multi_reduction <add>, %34, %cst_21 [1] : vector<16x512xf32> to vector<16xf32>
    %36 = vector.shape_cast %35 : vector<16xf32> to vector<16x1xf32>
    %37 = arith.addf %31, %36 : vector<16x1xf32>
    %c0_22 = arith.constant 0 : index
    %c0_23 = arith.constant 0 : index
    %38 = vector.load %arg9[%c0_22, %c0_23] : memref<16x1xf32, #tpu.memory_space<vmem>>, vector<16x1xf32>
    tpu.vector_store %arg9[%c0_22, %c0_23], %37 {strides = array<i32>} : memref<16x1xf32, #tpu.memory_space<vmem>>, vector<16x1xf32>,
    %c0_24 = arith.constant 0 : index
    %c0_25 = arith.constant 0 : index
    %39 = vector.load %arg8[%c0_24, %c0_25] : memref<16x1xf32, #tpu.memory_space<vmem>>, vector<16x1xf32>
    tpu.vector_store %arg8[%c0_24, %c0_25], %26 {strides = array<i32>} : memref<16x1xf32, #tpu.memory_space<vmem>>, vector<16x1xf32>,
    %c0_i32_26 = arith.constant 0 : i32
    %40 = arith.cmpi eq, %arg1, %c0_i32_26 : i32
    %41 = arith.extui %40 : i1 to i32
    %c0_i32_27 = arith.constant 0 : i32
    %42 = arith.cmpi ne, %41, %c0_i32_27 : i32
    scf.if %42 {
      %c-100_i32 = arith.constant -100 : i32
      %43 = vector.broadcast %c-100_i32 : i32 to vector<16x1xi32>
      %44 = arith.cmpi ne, %9, %43 : vector<16x1xi32>
      %45 = arith.extui %44 : vector<16x1xi1> to vector<16x1xi32>
      %46 = arith.sitofp %45 : vector<16x1xi32> to vector<16x1xf32>
      %c0_28 = arith.constant 0 : index
      %c0_29 = arith.constant 0 : index
      %47 = vector.load %arg8[%c0_28, %c0_29] : memref<16x1xf32, #tpu.memory_space<vmem>>, vector<16x1xf32>
      %c0_30 = arith.constant 0 : index
      %c0_31 = arith.constant 0 : index
      %48 = vector.load %arg9[%c0_30, %c0_31] : memref<16x1xf32, #tpu.memory_space<vmem>>, vector<16x1xf32>
      %49 = math.log %48 : vector<16x1xf32>
      %50 = arith.addf %47, %49 : vector<16x1xf32>
      %c0_32 = arith.constant 0 : index
      %c0_33 = arith.constant 0 : index
      %51 = vector.load %arg10[%c0_32, %c0_33] : memref<16x1xf32, #tpu.memory_space<vmem>>, vector<16x1xf32>
      %52 = arith.subf %50, %51 : vector<16x1xf32>
      %53 = arith.mulf %52, %46 : vector<16x1xf32>
      %c0_34 = arith.constant 0 : index
      %c0_35 = arith.constant 0 : index
      %54 = vector.load %arg6[%c0_34, %c0_35] : memref<16x1xf32, #tpu.memory_space<vmem>>, vector<16x1xf32>
      tpu.vector_store %arg6[%c0_34, %c0_35], %53 {strides = array<i32>} : memref<16x1xf32, #tpu.memory_space<vmem>>, vector<16x1xf32>,
      %c0_36 = arith.constant 0 : index
      %c0_37 = arith.constant 0 : index
      %55 = vector.load %arg7[%c0_36, %c0_37] : memref<16x1xf32, #tpu.memory_space<vmem>>, vector<16x1xf32>
      tpu.vector_store %arg7[%c0_36, %c0_37], %46 {strides = array<i32>} : memref<16x1xf32, #tpu.memory_space<vmem>>, vector<16x1xf32>,
    } else {
    }
    return
  }
  func.func @transform_0(%arg0: i32, %arg1: i32) -> (i32, i32) {
    %c0_i32 = arith.constant 0 : i32
    %c0_i32_0 = arith.constant 0 : i32
    return %arg0, %c0_i32 : i32, i32
  }
  func.func @transform_1(%arg0: i32, %arg1: i32) -> (i32, i32) {
    %c0_i32 = arith.constant 0 : i32
    %c0_i32_0 = arith.constant 0 : i32
    return %c0_i32, %arg1 : i32, i32
  }
  func.func @transform_2(%arg0: i32, %arg1: i32) -> (i32, i32) {
    %c0_i32 = arith.constant 0 : i32
    %c0_i32_0 = arith.constant 0 : i32
    return %c0_i32, %arg1 : i32, i32
  }
  func.func @transform_3(%arg0: i32, %arg1: i32) -> (i32, i32) {
    %c0_i32 = arith.constant 0 : i32
    %c0_i32_0 = arith.constant 0 : i32
    return %arg0, %c0_i32 : i32, i32
  }
  func.func @transform_4(%arg0: i32, %arg1: i32) -> (i32, i32) {
    %c0_i32 = arith.constant 0 : i32
    %c0_i32_0 = arith.constant 0 : i32
    return %arg0, %c0_i32 : i32, i32
  }
  func.func @transform_5(%arg0: i32, %arg1: i32) -> (i32, i32) {
    %c0_i32 = arith.constant 0 : i32
    %c0_i32_0 = arith.constant 0 : i32
    return %arg0, %c0_i32 : i32, i32
  }
}

module attributes {stable_mosaic.version = 11 : i64} {
  func.func @_ln_kernel(%arg0: i32, %arg1: memref<16x32xbf16, #tpu.memory_space<vmem>>, %arg2: memref<1x32xf32, #tpu.memory_space<vmem>>, %arg3: memref<1x32xf32, #tpu.memory_space<vmem>>, %arg4: memref<16x32xbf16, #tpu.memory_space<vmem>>) attributes {dimension_semantics = [#tpu.dimension_semantics<parallel>], iteration_bounds = array<i64: 1>, scalar_prefetch = 0 : i64, scratch_operands = 0 : i64, tpu.core_type = #tpu.core_type<tc>, window_params = [{transform_indices = @transform_0, window_bounds = array<i64: 16, 32>}, {pipeline_mode = #tpu.pipeline_mode<synchronous>, transform_indices = @transform_1, window_bounds = array<i64: 1, 32>}, {pipeline_mode = #tpu.pipeline_mode<synchronous>, transform_indices = @transform_2, window_bounds = array<i64: 1, 32>}, {transform_indices = @transform_3, window_bounds = array<i64: 16, 32>}]} {
    %c0 = arith.constant 0 : index
    %c0_0 = arith.constant 0 : index
    %0 = vector.load %arg1[%c0, %c0_0] : memref<16x32xbf16, #tpu.memory_space<vmem>>, vector<16x32xbf16>
    %1 = arith.extf %0 : vector<16x32xbf16> to vector<16x32xf32>
    %cst = arith.constant dense<0.000000e+00> : vector<16xf32>
    %2 = vector.multi_reduction <add>, %1, %cst [1] : vector<16x32xf32> to vector<16xf32>
    %3 = vector.shape_cast %2 : vector<16xf32> to vector<16x1xf32>
    %cst_1 = arith.constant 3.200000e+01 : f32
    %4 = vector.broadcast %cst_1 : f32 to vector<16x1xf32>
    %5 = arith.divf %3, %4 : vector<16x1xf32>
    %6 = vector.broadcast %5 : vector<16x1xf32> to vector<16x32xf32>
    %7 = arith.subf %1, %6 : vector<16x32xf32>
    %8 = arith.mulf %7, %7 : vector<16x32xf32>
    %cst_2 = arith.constant dense<0.000000e+00> : vector<16xf32>
    %9 = vector.multi_reduction <add>, %8, %cst_2 [1] : vector<16x32xf32> to vector<16xf32>
    %10 = vector.shape_cast %9 : vector<16xf32> to vector<16x1xf32>
    %cst_3 = arith.constant 3.200000e+01 : f32
    %11 = vector.broadcast %cst_3 : f32 to vector<16x1xf32>
    %12 = arith.divf %10, %11 : vector<16x1xf32>
    %cst_4 = arith.constant 9.99999996E-13 : f32
    %13 = vector.broadcast %cst_4 : f32 to vector<16x1xf32>
    %14 = arith.addf %12, %13 : vector<16x1xf32>
    %15 = math.rsqrt %14 : vector<16x1xf32>
    %16 = vector.broadcast %15 : vector<16x1xf32> to vector<16x32xf32>
    %17 = arith.mulf %7, %16 : vector<16x32xf32>
    %c0_5 = arith.constant 0 : index
    %c0_6 = arith.constant 0 : index
    %18 = vector.load %arg2[%c0_5, %c0_6] : memref<1x32xf32, #tpu.memory_space<vmem>>, vector<1x32xf32>
    %19 = vector.broadcast %18 : vector<1x32xf32> to vector<16x32xf32>
    %20 = arith.mulf %17, %19 : vector<16x32xf32>
    %c0_7 = arith.constant 0 : index
    %c0_8 = arith.constant 0 : index
    %21 = vector.load %arg3[%c0_7, %c0_8] : memref<1x32xf32, #tpu.memory_space<vmem>>, vector<1x32xf32>
    %22 = vector.broadcast %21 : vector<1x32xf32> to vector<16x32xf32>
    %23 = arith.addf %20, %22 : vector<16x32xf32>
    %24 = arith.truncf %23 : vector<16x32xf32> to vector<16x32xbf16>
    %c0_9 = arith.constant 0 : index
    %c0_10 = arith.constant 0 : index
    %25 = vector.load %arg4[%c0_9, %c0_10] : memref<16x32xbf16, #tpu.memory_space<vmem>>, vector<16x32xbf16>
    tpu.vector_store %arg4[%c0_9, %c0_10], %24 {strides = array<i32>} : memref<16x32xbf16, #tpu.memory_space<vmem>>, vector<16x32xbf16>,
    return
  }
  func.func @transform_0(%arg0: i32) -> (i32, i32) {
    %c0_i32 = arith.constant 0 : i32
    %c0_i32_0 = arith.constant 0 : i32
    return %arg0, %c0_i32 : i32, i32
  }
  func.func @transform_1(%arg0: i32) -> (i32, i32) {
    %c0_i32 = arith.constant 0 : i32
    %c0_i32_0 = arith.constant 0 : i32
    %c0_i32_1 = arith.constant 0 : i32
    return %c0_i32, %c0_i32_0 : i32, i32
  }
  func.func @transform_2(%arg0: i32) -> (i32, i32) {
    %c0_i32 = arith.constant 0 : i32
    %c0_i32_0 = arith.constant 0 : i32
    %c0_i32_1 = arith.constant 0 : i32
    return %c0_i32, %c0_i32_0 : i32, i32
  }
  func.func @transform_3(%arg0: i32) -> (i32, i32) {
    %c0_i32 = arith.constant 0 : i32
    %c0_i32_0 = arith.constant 0 : i32
    return %arg0, %c0_i32 : i32, i32
  }
}

</mosaic_0001>

<llo_original>
// kernel: albef_forward.80
$region0: #{albef_forward.80}
  #allocation0 [shape = 'u32[]', space=smem, size = 0x4, offset = 0x4, fixed_abs, tag = 'smem constant byte address 0x4 - core index']
  #allocation1 [shape = 'u32[144,128]{1,0:T(1,128)}', space=vmem, size = 0x12000, scoped, tag = 'internal scratch']
  %s0 = inlined_call_operand.vmem [shape: f32[16,32], index: 0, kind: input, shape index: {}]
  %s1 = inlined_call_operand.vmem [shape: f32[1,32], index: 1, kind: input, shape index: {}]
  %s2 = inlined_call_operand.vmem [shape: f32[1,32], index: 2, kind: input, shape index: {}]
  %s3 = inlined_call_operand.vmem [shape: bf16[16,32], index: 3, kind: output, shape index: {}]
  %s4 = sld [smem:[#allocation0]]
  $region22: #{albef_forward.80} parent=0
    _
  %s6 = ssub.s32 1, %s4
  %s7 = scalar_select 0, %s6, %s4
  // Predicated region
  $region2: #{albef_forward.80} parent=0 // pred_check
    _
  $region3: #{albef_forward.80} parent=0 // pred_check_branch
    %9 = sbr.rel (0) target = $region5
  $region4: #{albef_forward.80} parent=0 // pred_region
    _
  $region5: #{albef_forward.80} parent=0 // pred_fallthru
    _
  // Predicated region
  $region6: #{albef_forward.80} parent=0 // pred_check
    _
  $region7: #{albef_forward.80} parent=0 // pred_check_branch
    %11 = sbr.rel (0) target = $region9
  $region8: #{albef_forward.80} parent=0 // pred_region
    _
  $region9: #{albef_forward.80} parent=0 // pred_fallthru
    _
  // Predicated region
  $region10: #{albef_forward.80} parent=0 // pred_check
    _
  $region11: #{albef_forward.80} parent=0 // pred_check_branch
    %13 = sbr.rel (0) target = $region13
  $region12: #{albef_forward.80} parent=0 // pred_region
    _
  $region13: #{albef_forward.80} parent=0 // pred_fallthru
    _
  %v14 = vld [vmem:[%s0] sm:$0xff]
  %v15 = vld [vmem:[%s0 + $0x8] sm:$0xff]
  %vm16 = vcmask 261120
  %v17 = vsel %vm16, %v14, 0.0
  %18 = vadd.xlane.f32.xlu0 %v17
  %v19 = vpop.xlane.xlu0 %18
  %v20 = vsel %vm16, %v15, 0.0
  %21 = vadd.xlane.f32.xlu0 %v20
  %v22 = vpop.xlane.xlu0 %21
  %v23 = vrcp.pop 32.0
  %v24 = vmul.f32 %v19, %v23
  %v25 = vmul.f32 %v22, %v23
  %v26 = vsub.f32 %v14, %v24
  %v27 = vsub.f32 %v15, %v25
  %v28 = vmul.f32 %v26, %v26
  %v29 = vmul.f32 %v27, %v27
  %v30 = vsel %vm16, %v28, 0.0
  %31 = vadd.xlane.f32.xlu0 %v30
  %v32 = vpop.xlane.xlu0 %31
  %v33 = vsel %vm16, %v29, 0.0
  %34 = vadd.xlane.f32.xlu0 %v33
  %v35 = vpop.xlane.xlu0 %34
  %v36 = vmul.f32 %v32, %v23
  %v37 = vmul.f32 %v35, %v23
  %v38 = vadd.f32 %v36, 1e-12
  %v39 = vadd.f32 %v37, 1e-12
  %v40 = vrsqrt.pop %v38
  %v41 = vrsqrt.pop %v39
  %v42 = vmul.f32 %v26, %v40
  %v43 = vmul.f32 %v27, %v41
  %v44 = vld [vmem:[%s1] sm:$0x1]
  %v46 = vlaneseq
  %v47 = vshrl.u32 %v46, 7
  %v48 = vsub.s32 0, %v47
  %v49 = vrot.slane %v44, %v48
  %v51 = vmul.f32 %v42, %v49
  %v52 = vmul.f32 %v43, %v49
  %v53 = vld [vmem:[%s2] sm:$0x1]
  %v55 = vlaneseq
  %v56 = vshrl.u32 %v55, 7
  %v57 = vsub.s32 0, %v56
  %v58 = vrot.slane %v53, %v57
  %v60 = vadd.f32 %v51, %v58
  %v61 = vadd.f32 %v52, %v58
  %v62 = vpack.c.bf16 %v61, %v60
  %v64 = vunpack.c.l.b16 %v62
  %v65 = vunpack.c.h.b16 %v62
  %v66 = vpack.c.b16 %v64, %v64
  %v67 = vpack.c.b16 %v65, %v65
  %vm70 = vcmask 257024
  %71 = vst.msk [vmem:[%s3] sm:$0xf] %vm70, %v66
  %72 = vst.msk [vmem:[%s3 + $0x4] sm:$0xf] %vm70, %v67
  // Predicated region
  $region14: #{albef_forward.80} parent=0 // pred_check
    _
  $region15: #{albef_forward.80} parent=0 // pred_check_branch
    %74 = sbr.rel (0) target = $region17
  $region16: #{albef_forward.80} parent=0 // pred_region
    _
  $region17: #{albef_forward.80} parent=0 // pred_fallthru
    _
  // Predicated region
  $region18: #{albef_forward.80} parent=0 // pred_check
    _
  $region19: #{albef_forward.80} parent=0 // pred_check_branch
    %76 = sbr.rel (0) target = $region21
  $region20: #{albef_forward.80} parent=0 // pred_region
    _
  $region21: #{albef_forward.80} parent=0 // pred_fallthru
    _

// kernel: albef_forward.81
$region0: #{albef_forward.81}
  #allocation0 [shape = 'u32[]', space=smem, size = 0x4, offset = 0x4, fixed_abs, tag = 'smem constant byte address 0x4 - core index']
  #allocation1 [shape = 'u32[144,128]{1,0:T(1,128)}', space=vmem, size = 0x12000, scoped, tag = 'internal scratch']
  #allocation2 [shape = 'f32[16,256]{1,0:T(8,128)}', space=vmem, size = 0x4000, scoped, tag = 'scratch operand']
  %s0 = inlined_call_operand.vmem [shape: bf16[16,128], index: 0, kind: input, shape index: {}]
  %s1 = inlined_call_operand.vmem [shape: bf16[128,256], index: 1, kind: input, shape index: {}]
  %s2 = inlined_call_operand.vmem [shape: f32[1,256], index: 2, kind: input, shape index: {}]
  %s3 = inlined_call_operand.vmem [shape: bf16[16,256], index: 3, kind: output, shape index: {}]
  %s4 = sld [smem:[#allocation0]]
  $region30: #{albef_forward.81} parent=0
    _
  %s6 = ssub.s32 1, %s4
  %s7 = scalar_select 0, %s6, %s4
  // Predicated region
  $region2: #{albef_forward.81} parent=0 // pred_check
    _
  $region3: #{albef_forward.81} parent=0 // pred_check_branch
    %9 = sbr.rel (0) target = $region5
  $region4: #{albef_forward.81} parent=0 // pred_region
    _
  $region5: #{albef_forward.81} parent=0 // pred_fallthru
    _
  // Predicated region
  $region6: #{albef_forward.81} parent=0 // pred_check
    _
  $region7: #{albef_forward.81} parent=0 // pred_check_branch
    %11 = sbr.rel (0) target = $region9
  $region8: #{albef_forward.81} parent=0 // pred_region
    _
  $region9: #{albef_forward.81} parent=0 // pred_fallthru
    _
  // Predicated region
  $region10: #{albef_forward.81} parent=0 // pred_check
    _
  $region11: #{albef_forward.81} parent=0 // pred_check_branch
    %13 = sbr.rel (0) target = $region13
  $region12: #{albef_forward.81} parent=0 // pred_region
    _
  $region13: #{albef_forward.81} parent=0 // pred_fallthru
    _
  %p15 = scmp.eq.s32.totalorder 0, 0
  // Predicated region
  $region14: #{albef_forward.81} parent=0 // pred_check
    %p16 = pneg %p15
  $region15: #{albef_forward.81} parent=0 // pred_check_branch
    %18 = sbr.rel (%p16) target = $region17
  $region16: #{albef_forward.81} parent=0 // pred_region
    %19 = vst [vmem:[#allocation2] sm:$0xff] 0.0
    %20 = vst [vmem:[#allocation2 + $0x8] sm:$0xff] 0.0
    %21 = vst [vmem:[#allocation2 + $0x10] sm:$0xff] 0.0
    %22 = vst [vmem:[#allocation2 + $0x18] sm:$0xff] 0.0
  $region17: #{albef_forward.81} parent=0 // pred_fallthru
    _
  %v23 = vld [vmem:[#allocation2] sm:$0xff]
  %v24 = vld [vmem:[#allocation2 + $0x8] sm:$0xff]
  %v25 = vld [vmem:[#allocation2 + $0x10] sm:$0xff]
  %v26 = vld [vmem:[#allocation2 + $0x18] sm:$0xff]
  %v27 = vld [vmem:[%s0] sm:$0xf]
  %v28 = vld [vmem:[%s0 + $0x4] sm:$0xf]
  %v29 = vld [vmem:[%s1] sm:$0xff]
  %v30 = vld [vmem:[%s1 + $0x8] sm:$0xff]
  %v31 = vld [vmem:[%s1 + $0x10] sm:$0xff]
  %v32 = vld [vmem:[%s1 + $0x18] sm:$0xff]
  %v33 = vld [vmem:[%s1 + $0x20] sm:$0xff]
  %v34 = vld [vmem:[%s1 + $0x28] sm:$0xff]
  %v35 = vld [vmem:[%s1 + $0x30] sm:$0xff]
  %v36 = vld [vmem:[%s1 + $0x38] sm:$0xff]
  %v37 = vld [vmem:[%s1 + $0x40] sm:$0xff]
  %v38 = vld [vmem:[%s1 + $0x48] sm:$0xff]
  %v39 = vld [vmem:[%s1 + $0x50] sm:$0xff]
  %v40 = vld [vmem:[%s1 + $0x58] sm:$0xff]
  %v41 = vld [vmem:[%s1 + $0x60] sm:$0xff]
  %v42 = vld [vmem:[%s1 + $0x68] sm:$0xff]
  %v43 = vld [vmem:[%s1 + $0x70] sm:$0xff]
  %v44 = vld [vmem:[%s1 + $0x78] sm:$0xff]
  %v47 = vunpack.c.l.b16 %v27
  %v48 = vunpack.c.l.b16 %v28
  %v49 = vpack.c.b16 %v48, %v47
  %v67 = vunpack.c.l.b16 %v29
  %v68 = vunpack.c.h.b16 %v29
  %v69 = vunpack.c.l.b16 %v30
  %v70 = vunpack.c.h.b16 %v30
  %v71 = vunpack.c.l.b16 %v31
  %v72 = vunpack.c.h.b16 %v31
  %v73 = vunpack.c.l.b16 %v32
  %v74 = vunpack.c.h.b16 %v32
  %v75 = vunpack.c.l.b16 %v33
  %v76 = vunpack.c.h.b16 %v33
  %v77 = vunpack.c.l.b16 %v34
  %v78 = vunpack.c.h.b16 %v34
  %v79 = vunpack.c.l.b16 %v35
  %v80 = vunpack.c.h.b16 %v35
  %v81 = vunpack.c.l.b16 %v36
  %v82 = vunpack.c.h.b16 %v36
  %v83 = vunpack.c.l.b16 %v37
  %v84 = vunpack.c.h.b16 %v37
  %v85 = vunpack.c.l.b16 %v38
  %v86 = vunpack.c.h.b16 %v38
  %v87 = vunpack.c.l.b16 %v39
  %v88 = vunpack.c.h.b16 %v39
  %v89 = vunpack.c.l.b16 %v40
  %v90 = vunpack.c.h.b16 %v40
  %v91 = vunpack.c.l.b16 %v41
  %v92 = vunpack.c.h.b16 %v41
  %v93 = vunpack.c.l.b16 %v42
  %v94 = vunpack.c.h.b16 %v42
  %v95 = vunpack.c.l.b16 %v43
  %v96 = vunpack.c.h.b16 %v43
  %v97 = vunpack.c.l.b16 %v44
  %v98 = vunpack.c.h.b16 %v44
  %v99 = vpack.c.b16 %v69, %v67
  %v100 = vpack.c.b16 %v70, %v68
  %v101 = vpack.c.b16 %v73, %v71
  %v102 = vpack.c.b16 %v74, %v72
  %v103 = vpack.c.b16 %v77, %v75
  %v104 = vpack.c.b16 %v78, %v76
  %v105 = vpack.c.b16 %v81, %v79
  %v106 = vpack.c.b16 %v82, %v80
  %v107 = vpack.c.b16 %v85, %v83
  %v108 = vpack.c.b16 %v86, %v84
  %v109 = vpack.c.b16 %v89, %v87
  %v110 = vpack.c.b16 %v90, %v88
  %v111 = vpack.c.b16 %v93, %v91
  %v112 = vpack.c.b16 %v94, %v92
  %v113 = vpack.c.b16 %v97, %v95
  %v114 = vpack.c.b16 %v98, %v96
  %131 = vmatprep.subr.bf16.mxu0 %v114
  %132 = vmatpush1.bf16.msra.mxu0 %v113
  %133 = vmatprep.subr.bf16.mxu0 %v112
  %134 = vmatpush1.bf16.msra.mxu0 %v111
  %135 = vmatprep.subr.bf16.mxu0 %v110
  %136 = vmatpush1.bf16.msra.mxu0 %v109
  %137 = vmatprep.subr.bf16.mxu0 %v108
  %138 = vmatpush1.bf16.msra.mxu0 %v107
  %139 = vmatprep.subr.bf16.mxu0 %v106
  %140 = vmatpush1.bf16.msra.mxu0 %v105
  %141 = vmatprep.subr.bf16.mxu0 %v104
  %142 = vmatpush1.bf16.msra.mxu0 %v103
  %143 = vmatprep.subr.bf16.mxu0 %v102
  %144 = vmatpush1.bf16.msra.mxu0 %v101
  %145 = vmatprep.subr.bf16.mxu0 %v100
  %146 = vmatpush1.bf16.msra.mxu0 %v99
  %147 = vmatprep.subr.bf16.mxu0 0
  %148 = vmatpush2.bf16.msra.mxu0 0
  %149 = vmatprep.subr.bf16.mxu0 0
  %150 = vmatpush2.bf16.msra.mxu0 0
  %151 = vmatprep.subr.bf16.mxu0 0
  %152 = vmatpush2.bf16.msra.mxu0 0
  %153 = vmatprep.subr.bf16.mxu0 0
  %154 = vmatpush2.bf16.msra.mxu0 0
  %155 = vmatprep.subr.bf16.mxu0 0
  %156 = vmatpush2.bf16.msra.mxu0 0
  %157 = vmatprep.subr.bf16.mxu0 0
  %158 = vmatpush2.bf16.msra.mxu0 0
  %159 = vmatprep.subr.bf16.mxu0 0
  %160 = vmatpush2.bf16.msra.mxu0 0
  %161 = vmatprep.subr.bf16.mxu0 0
  %162 = vmatpush2.bf16.msra.mxu0 0
  %163 = vmatprep.mubr.bf16.mxu0 0
  %164 = vmatmul.mubr.bf16.gmra.mxu0 %v49
  %v165 = vpop.f32.mrf.mxu0
  %v166 = vadd.f32 0.0, %v165
  %v167 = vpop.f32.mrf.mxu0
  %v168 = vadd.f32 0.0, %v167
  %v169 = vpop.f32.mrf.mxu0
  %v170 = vadd.f32 0.0, %v169
  %v171 = vpop.f32.mrf.mxu0
  %v172 = vadd.f32 0.0, %v171
  %173 = vdwg.mxu0
  %v174 = vadd.f32 %v23, %v166
  %v175 = vadd.f32 %v24, %v168
  %v176 = vadd.f32 %v25, %v170
  %v177 = vadd.f32 %v26, %v172
  %178 = vst [vmem:[#allocation2] sm:$0xff] %v174
  %179 = vst [vmem:[#allocation2 + $0x8] sm:$0xff] %v175
  %180 = vst [vmem:[#allocation2 + $0x10] sm:$0xff] %v176
  %181 = vst [vmem:[#allocation2 + $0x18] sm:$0xff] %v177
  // Predicated region
  $region18: #{albef_forward.81} parent=0 // pred_check
    %p182 = pneg %p15
  $region19: #{albef_forward.81} parent=0 // pred_check_branch
    %184 = sbr.rel (%p182) target = $region21
  $region20: #{albef_forward.81} parent=0 // pred_region
    %v185 = vld [vmem:[#allocation2] sm:$0xff]
    %v186 = vld [vmem:[#allocation2 + $0x8] sm:$0xff]
    %v187 = vld [vmem:[#allocation2 + $0x10] sm:$0xff]
    %v188 = vld [vmem:[#allocation2 + $0x18] sm:$0xff]
    %v189 = vld [vmem:[%s2] sm:$0x3]
    %v191 = vlaneseq
    %v192 = vshrl.u32 %v191, 7
    %v193 = vsub.s32 0, %v192
    %v194 = vrot.slane %v189, %v193
    %v195 = vlaneseq
    %v196 = vshrl.u32 %v195, 7
    %v197 = vsub.s32 1, %v196
    %v198 = vrot.slane %v189, %v197
    %v201 = vadd.f32 %v185, %v194
    %v202 = vadd.f32 %v186, %v198
    %v203 = vadd.f32 %v187, %v194
    %v204 = vadd.f32 %v188, %v198
    %v205 = vpack.c.bf16 %v203, %v201
    %v206 = vpack.c.bf16 %v204, %v202
    %v209 = vunpack.c.l.b16 %v205
    %v210 = vunpack.c.l.b16 %v206
    %v211 = vunpack.c.h.b16 %v205
    %v212 = vunpack.c.h.b16 %v206
    %v213 = vpack.c.b16 %v210, %v209
    %v214 = vpack.c.b16 %v212, %v211
    %217 = vst [vmem:[%s3] sm:$0xff] %v213
    %218 = vst [vmem:[%s3 + $0x8] sm:$0xff] %v214
  $region21: #{albef_forward.81} parent=0 // pred_fallthru
    _
  // Predicated region
  $region22: #{albef_forward.81} parent=0 // pred_check
    _
  $region23: #{albef_forward.81} parent=0 // pred_check_branch
    %220 = sbr.rel (0) target = $region25
  $region24: #{albef_forward.81} parent=0 // pred_region
    _
  $region25: #{albef_forward.81} parent=0 // pred_fallthru
    _
  // Predicated region
  $region26: #{albef_forward.81} parent=0 // pred_check
    _
  $region27: #{albef_forward.81} parent=0 // pred_check_branch
    %222 = sbr.rel (0) target = $region29
  $region28: #{albef_forward.81} parent=0 // pred_region
    _
  $region29: #{albef_forward.81} parent=0 // pred_fallthru
    _

// kernel: albef_forward.84
$region0: #{albef_forward.84}
  #allocation0 [shape = 'u32[]', space=smem, size = 0x4, offset = 0x4, fixed_abs, tag = 'smem constant byte address 0x4 - core index']
  #allocation1 [shape = 'u32[144,128]{1,0:T(1,128)}', space=vmem, size = 0x12000, scoped, tag = 'internal scratch']
  %s0 = inlined_call_operand.vmem [shape: bf16[16,32], index: 0, kind: input, shape index: {}]
  %s1 = inlined_call_operand.vmem [shape: bf16[16,32], index: 1, kind: input, shape index: {}]
  %s2 = inlined_call_operand.vmem [shape: f32[1,32], index: 2, kind: input, shape index: {}]
  %s3 = inlined_call_operand.vmem [shape: f32[1,32], index: 3, kind: input, shape index: {}]
  %s4 = inlined_call_operand.vmem [shape: bf16[16,32], index: 4, kind: output, shape index: {}]
  %s5 = sld [smem:[#allocation0]]
  $region26: #{albef_forward.84} parent=0
    _
  %s7 = ssub.s32 1, %s5
  %s8 = scalar_select 0, %s7, %s5
  // Predicated region
  $region2: #{albef_forward.84} parent=0 // pred_check
    _
  $region3: #{albef_forward.84} parent=0 // pred_check_branch
    %10 = sbr.rel (0) target = $region5
  $region4: #{albef_forward.84} parent=0 // pred_region
    _
  $region5: #{albef_forward.84} parent=0 // pred_fallthru
    _
  // Predicated region
  $region6: #{albef_forward.84} parent=0 // pred_check
    _
  $region7: #{albef_forward.84} parent=0 // pred_check_branch
    %12 = sbr.rel (0) target = $region9
  $region8: #{albef_forward.84} parent=0 // pred_region
    _
  $region9: #{albef_forward.84} parent=0 // pred_fallthru
    _
  // Predicated region
  $region10: #{albef_forward.84} parent=0 // pred_check
    _
  $region11: #{albef_forward.84} parent=0 // pred_check_branch
    %14 = sbr.rel (0) target = $region13
  $region12: #{albef_forward.84} parent=0 // pred_region
    _
  $region13: #{albef_forward.84} parent=0 // pred_fallthru
    _
  // Predicated region
  $region14: #{albef_forward.84} parent=0 // pred_check
    _
  $region15: #{albef_forward.84} parent=0 // pred_check_branch
    %16 = sbr.rel (0) target = $region17
  $region16: #{albef_forward.84} parent=0 // pred_region
    _
  $region17: #{albef_forward.84} parent=0 // pred_fallthru
    _
  %v17 = vld [vmem:[%s0] sm:$0xf]
  %v18 = vld [vmem:[%s0 + $0x4] sm:$0xf]
  %v19 = vunpack.c.l.bf16 %v17
  %v20 = vunpack.c.l.bf16 %v18
  %v21 = vld [vmem:[%s1] sm:$0xf]
  %v22 = vld [vmem:[%s1 + $0x4] sm:$0xf]
  %v23 = vunpack.c.l.bf16 %v21
  %v24 = vunpack.c.l.bf16 %v22
  %v25 = vadd.f32 %v19, %v23
  %v26 = vadd.f32 %v20, %v24
  %vm27 = vcmask 261120
  %v28 = vsel %vm27, %v25, 0.0
  %29 = vadd.xlane.f32.xlu0 %v28
  %v30 = vpop.xlane.xlu0 %29
  %v31 = vsel %vm27, %v26, 0.0
  %32 = vadd.xlane.f32.xlu0 %v31
  %v33 = vpop.xlane.xlu0 %32
  %v34 = vrcp.pop 32.0
  %v35 = vmul.f32 %v30, %v34
  %v36 = vmul.f32 %v33, %v34
  %v37 = vsub.f32 %v25, %v35
  %v38 = vsub.f32 %v26, %v36
  %v39 = vmul.f32 %v37, %v37
  %v40 = vmul.f32 %v38, %v38
  %v41 = vsel %vm27, %v39, 0.0
  %42 = vadd.xlane.f32.xlu0 %v41
  %v43 = vpop.xlane.xlu0 %42
  %v44 = vsel %vm27, %v40, 0.0
  %45 = vadd.xlane.f32.xlu0 %v44
  %v46 = vpop.xlane.xlu0 %45
  %v47 = vmul.f32 %v43, %v34
  %v48 = vmul.f32 %v46, %v34
  %v49 = vadd.f32 %v47, 1e-12
  %v50 = vadd.f32 %v48, 1e-12
  %v51 = vrsqrt.pop %v49
  %v52 = vrsqrt.pop %v50
  %v53 = vmul.f32 %v37, %v51
  %v54 = vmul.f32 %v38, %v52
  %v55 = vld [vmem:[%s2] sm:$0x1]
  %v57 = vlaneseq
  %v58 = vshrl.u32 %v57, 7
  %v59 = vsub.s32 0, %v58
  %v60 = vrot.slane %v55, %v59
  %v62 = vmul.f32 %v53, %v60
  %v63 = vmul.f32 %v54, %v60
  %v64 = vld [vmem:[%s3] sm:$0x1]
  %v66 = vlaneseq
  %v67 = vshrl.u32 %v66, 7
  %v68 = vsub.s32 0, %v67
  %v69 = vrot.slane %v64, %v68
  %v71 = vadd.f32 %v62, %v69
  %v72 = vadd.f32 %v63, %v69
  %v73 = vpack.c.bf16 %v72, %v71
  %v75 = vunpack.c.l.b16 %v73
  %v76 = vunpack.c.h.b16 %v73
  %v77 = vpack.c.b16 %v75, %v75
  %v78 = vpack.c.b16 %v76, %v76
  %vm81 = vcmask 257024
  %82 = vst.msk [vmem:[%s4] sm:$0xf] %vm81, %v77
  %83 = vst.msk [vmem:[%s4 + $0x4] sm:$0xf] %vm81, %v78
  // Predicated region
  $region18: #{albef_forward.84} parent=0 // pred_check
    _
  $region19: #{albef_forward.84} parent=0 // pred_check_branch
    %85 = sbr.rel (0) target = $region21
  $region20: #{albef_forward.84} parent=0 // pred_region
    _
  $region21: #{albef_forward.84} parent=0 // pred_fallthru
    _
  // Predicated region
  $region22: #{albef_forward.84} parent=0 // pred_check
    _
  $region23: #{albef_forward.84} parent=0 // pred_check_branch
    %87 = sbr.rel (0) target = $region25
  $region24: #{albef_forward.84} parent=0 // pred_region
    _
  $region25: #{albef_forward.84} parent=0 // pred_fallthru
    _

// kernel: albef_forward.82
$region0: #{albef_forward.82}
  #allocation0 [shape = 'u32[]', space=smem, size = 0x4, offset = 0x4, fixed_abs, tag = 'smem constant byte address 0x4 - core index']
  #allocation1 [shape = 'u32[144,128]{1,0:T(1,128)}', space=vmem, size = 0x12000, scoped, tag = 'internal scratch']
  #allocation2 [shape = 'f32[8,32]{1,0:T(8,128)}', space=vmem, size = 0x1000, scoped, tag = 'scratch operand']
  %s0 = inlined_call_operand.vmem [shape: bf16[2,8,96], index: 0, kind: input, shape index: {}]
  %s1 = inlined_call_operand.vmem [shape: f32[2,1,8], index: 1, kind: input, shape index: {}]
  %s2 = inlined_call_operand.vmem [shape: bf16[2,8,32], index: 2, kind: output, shape index: {}]
  %s3 = sld [smem:[#allocation0]]
  $region41: #{albef_forward.82} parent=0
    _
  %s5 = ssub.s32 1, %s3
  %s6 = scalar_select 0, %s5, %s3
  loop: start=0, step=1, limit=4
  $region2: #{albef_forward.82} parent=0 // loop_pre_header
    _
  $region3: #{albef_forward.82} parent=0 // loop_header
    %s8 = sphi 0, %s12
    %p9 = scmp.ge.s32.totalorder %s8, 4
    %s15 = sphi 0, %s27
    %s16 = sphi 0, %s23
    %s17 = sphi 0, %s15
    %s18 = sphi 0, %s16
    %s19 = sphi 0, %s17
    %s20 = sphi 0, %s18
    %s30 = sphi 0, %s32
    %s33 = sphi 0, %s30
    %s34 = sphi 0, %s33
    %s50 = sphi 0, %s34
    %s56 = sphi 0, %s58
    %s59 = sphi 0, %s56
    %s60 = sphi 0, %s59
    %s76 = sphi 0, %s60
    %s84 = sphi 0, %s86
    %s87 = sphi 0, %s84
    %s88 = sphi 0, %s87
    %s104 = sphi 0, %s88
  $region4: #{albef_forward.82} parent=0 // loop_header_branch
    %11 = sbr.rel (%p9) target = $region8
  $region5: #{albef_forward.82} parent=0 // loop_body
    %s13 = ssub.s32 %s8, 1
    %s14 = ssub.s32 %s8, 2
    %s21 = sadd.s32 1, %s16
    %p22 = scmp.ge.s32.totalorder %s21, 1
    %s23 = scalar_select %p22, 0, %s21
    %s24 = sadd.s32 1, %s15
    %s25 = scalar_select %p22, %s24, %s15
    %p26 = scmp.ge.s32.totalorder %s25, 2
    %s27 = scalar_select %p26, 0, %s25
    %s28 = ssub.s32 %s15, %s27
    %p29 = scmp.eq.s32.totalorder %s28, 0
    %s31 = sadd.s32 %s30, 1
    %s32 = scalar_select %p29, %s30, %s31
    %p35 = pneg %p29
    %p36 = scmp.eq.s32.totalorder %s8, 1
    %p37 = por %p35, %p36
    %p38 = scmp.ne.s32.totalorder %s30, %s33
    %p39 = scmp.eq.s32.totalorder %s8, 0
    %p40 = por %p38, %p39
    %p41 = scmp.ne.s32.totalorder %s30, %s33
    %p42 = scmp.eq.s32.totalorder %s13, 1
    %p43 = por %p41, %p42
    %p44 = scmp.ne.s32.totalorder %s33, %s34
    %p45 = scmp.eq.s32.totalorder %s13, 0
    %p46 = por %p44, %p45
    %p47 = scmp.ne.s32.totalorder %s33, %s34
    %p48 = scmp.eq.s32.totalorder %s14, 1
    %p49 = por %p47, %p48
    %p51 = scmp.ne.s32.totalorder %s34, %s50
    %p52 = scmp.eq.s32.totalorder %s14, 0
    %p53 = por %p51, %p52
    %s54 = ssub.s32 %s15, %s27
    %p55 = scmp.eq.s32.totalorder %s54, 0
    %s57 = sadd.s32 %s56, 1
    %s58 = scalar_select %p55, %s56, %s57
    %p61 = pneg %p55
    %p62 = scmp.eq.s32.totalorder %s8, 1
    %p63 = por %p61, %p62
    %p64 = scmp.ne.s32.totalorder %s56, %s59
    %p65 = scmp.eq.s32.totalorder %s8, 0
    %p66 = por %p64, %p65
    %p67 = scmp.ne.s32.totalorder %s56, %s59
    %p68 = scmp.eq.s32.totalorder %s13, 1
    %p69 = por %p67, %p68
    %p70 = scmp.ne.s32.totalorder %s59, %s60
    %p71 = scmp.eq.s32.totalorder %s13, 0
    %p72 = por %p70, %p71
    %p73 = scmp.ne.s32.totalorder %s59, %s60
    %p74 = scmp.eq.s32.totalorder %s14, 1
    %p75 = por %p73, %p74
    %p77 = scmp.ne.s32.totalorder %s60, %s76
    %p78 = scmp.eq.s32.totalorder %s14, 0
    %p79 = por %p77, %p78
    %s80 = ssub.s32 %s15, %s27
    %s81 = ssub.s32 %s16, %s23
    %s82 = sor.u32 %s80, %s81
    %p83 = scmp.eq.s32.totalorder %s82, 0
    %s85 = sadd.s32 %s84, 1
    %s86 = scalar_select %p83, %s84, %s85
    %p89 = pneg %p83
    %p90 = scmp.eq.s32.totalorder %s8, 1
    %p91 = por %p89, %p90
    %p92 = scmp.ne.s32.totalorder %s84, %s87
    %p93 = scmp.eq.s32.totalorder %s8, 0
    %p94 = por %p92, %p93
    %p95 = scmp.ne.s32.totalorder %s84, %s87
    %p96 = scmp.eq.s32.totalorder %s13, 1
    %p97 = por %p95, %p96
    %p98 = scmp.ne.s32.totalorder %s87, %s88
    %p99 = scmp.eq.s32.totalorder %s13, 0
    %p100 = por %p98, %p99
    %p101 = scmp.ne.s32.totalorder %s87, %s88
    %p102 = scmp.eq.s32.totalorder %s14, 1
    %p103 = por %p101, %p102
    %p105 = scmp.ne.s32.totalorder %s88, %s104
    %p106 = scmp.eq.s32.totalorder %s14, 0
    %p107 = por %p105, %p106
    %p108 = scmp.le.s32.totalorder 1, %s8
    %p109 = scmp.lt.s32.totalorder %s8, 3
    %p110 = pnand %p108, %p109
    %p111 = pneg %p110
    // Predicated region
    $region9: #{albef_forward.82} parent=5 // pred_check
      _
    $region10: #{albef_forward.82} parent=5 // pred_check_branch
      %113 = sbr.rel (%p110) target = $region12
    $region11: #{albef_forward.82} parent=5 // pred_region
      %s114 = ssub.s32 %s8, 1
    $region12: #{albef_forward.82} parent=5 // pred_fallthru
      _
    %p115 = scmp.lt.s32.totalorder %s8, 2
    // Predicated region
    $region13: #{albef_forward.82} parent=5 // pred_check
      %p116 = pneg %p115
    $region14: #{albef_forward.82} parent=5 // pred_check_branch
      %118 = sbr.rel (%p116) target = $region16
    $region15: #{albef_forward.82} parent=5 // pred_region
      // Predicated region
      $region17: #{albef_forward.82} parent=15 // pred_check
        %p119 = pneg %p40
      $region18: #{albef_forward.82} parent=15 // pred_check_branch
        %121 = sbr.rel (%p119) target = $region20
      $region19: #{albef_forward.82} parent=15 // pred_region
        %p122 = scmp.lt.s32.totalorder %s15, 1
        %s123 = scalar_select %p122, %s15, 1
        %s124 = smul.addr %s123, 4
        %s125 = scalar_lea.vmem %s0, %s124
      $region20: #{albef_forward.82} parent=15 // pred_fallthru
        _
      // Predicated region
      $region21: #{albef_forward.82} parent=15 // pred_check
        %p126 = pneg %p66
      $region22: #{albef_forward.82} parent=15 // pred_check_branch
        %128 = sbr.rel (%p126) target = $region24
      $region23: #{albef_forward.82} parent=15 // pred_region
        %p129 = scmp.lt.s32.totalorder %s15, 1
        %s130 = scalar_select %p129, %s15, 1
        %s131 = scalar_lea.vmem %s1, %s130
      $region24: #{albef_forward.82} parent=15 // pred_fallthru
        _
    $region16: #{albef_forward.82} parent=5 // pred_fallthru
      _
    %p132 = scmp.le.s32.totalorder 1, %s8
    %p133 = scmp.lt.s32.totalorder %s8, 3
    %p134 = pnand %p132, %p133
    %p135 = pneg %p134
    // Predicated region
    $region25: #{albef_forward.82} parent=5 // pred_check
      _
    $region26: #{albef_forward.82} parent=5 // pred_check_branch
      %137 = sbr.rel (%p134) target = $region28
    $region27: #{albef_forward.82} parent=5 // pred_region
      %s138 = ssub.s32 %s8, 1
      %p139 = scmp.lt.s32.totalorder %s17, 1
      %s140 = scalar_select %p139, %s17, 1
      %s141 = smul.addr %s140, 4
      %s142 = scalar_lea.vmem %s0, %s141
      %p143 = pneg %p46
      %p144 = pneg %p43
      %p145 = scmp.lt.s32.totalorder %s17, 1
      %s146 = scalar_select %p145, %s17, 1
      %s147 = scalar_lea.vmem %s1, %s146
      %p148 = pneg %p72
      %p149 = pneg %p69
      %p150 = pneg %p100
      %p151 = pneg %p97
      %p152 = scmp.lt.s32.totalorder %s17, 1
      %s153 = scalar_select %p152, %s17, 1
      %p154 = scmp.lt.s32.totalorder %s18, 0
      %s155 = scalar_select %p154, %s18, 0
      %s156 = sadd.s32 %s155, %s153
      %s157 = smul.addr %s156, 4
      %s158 = scalar_lea.vmem %s2, %s157
      %p159 = scmp.lt.s32.totalorder %s17, 1
      %s160 = scalar_select %p159, %s17, 1
      %s161 = smul.addr %s160, 4
      %s162 = scalar_lea.vmem %s0, %s161
      %p163 = scmp.lt.s32.totalorder %s17, 1
      %s164 = scalar_select %p163, %s17, 1
      %s165 = scalar_lea.vmem %s1, %s164
      %p166 = scmp.lt.s32.totalorder %s17, 1
      %s167 = scalar_select %p166, %s17, 1
      %p168 = scmp.lt.s32.totalorder %s18, 0
      %s169 = scalar_select %p168, %s18, 0
      %s170 = sadd.s32 %s169, %s167
      %s171 = smul.addr %s170, 4
      %s172 = scalar_lea.vmem %s2, %s171
      %v175 = vld [vmem:[%s165] sm:$0x1]
      %v176 = vld [vmem:[%s162] sm:$0xf]
      %v177 = vmul.bf16 %v176, 1052065461
      %v179 = vlaneseq
      %v180 = vshrl.u32 %v179, 7
      %v181 = vsub.s32 0, %v180
      %v182 = vrot.slane %v175, %v181
      %v185 = vunpack.c.l.b16 %v176
      %v186 = vpack.c.b16 %v185, %v185
      %187 = vrot.lane.b32.xlu0 %v186, 96
      %v188 = vpop.permute.xlu0 %187
      %vm189 = vcmask 64512
      %v191 = vsel %vm189, %v177, 0
      %v194 = vsel %vm189, %v188, 0
      %196 = vmatprep.subr.bf16.mxu0 0
      %197 = vmatpush1.bf16.xpose.msra.mxu0 0
      %198 = vmatprep.subr.bf16.mxu0 0
      %199 = vmatpush1.bf16.xpose.msra.mxu0 0
      %200 = vmatprep.subr.bf16.mxu0 0
      %201 = vmatpush1.bf16.xpose.msra.mxu0 0
      %202 = vmatprep.subr.bf16.mxu0 0
      %203 = vmatpush1.bf16.xpose.msra.mxu0 0
      %204 = vmatprep.subr.bf16.mxu0 0
      %205 = vmatpush1.bf16.xpose.msra.mxu0 0
      %206 = vmatprep.subr.bf16.mxu0 0
      %207 = vmatpush1.bf16.xpose.msra.mxu0 0
      %208 = vmatprep.subr.bf16.mxu0 0
      %209 = vmatpush1.bf16.xpose.msra.mxu0 0
      %210 = vmatprep.subr.bf16.mxu0 0
      %211 = vmatpush1.bf16.xpose.msra.mxu0 %v194
      %212 = vmatprep.subr.bf16.mxu0 0
      %213 = vmatpush2.bf16.xpose.msra.mxu0 0
      %214 = vmatprep.subr.bf16.mxu0 0
      %215 = vmatpush2.bf16.xpose.msra.mxu0 0
      %216 = vmatprep.subr.bf16.mxu0 0
      %217 = vmatpush2.bf16.xpose.msra.mxu0 0
      %218 = vmatprep.subr.bf16.mxu0 0
      %219 = vmatpush2.bf16.xpose.msra.mxu0 0
      %220 = vmatprep.subr.bf16.mxu0 0
      %221 = vmatpush2.bf16.xpose.msra.mxu0 0
      %222 = vmatprep.subr.bf16.mxu0 0
      %223 = vmatpush2.bf16.xpose.msra.mxu0 0
      %224 = vmatprep.subr.bf16.mxu0 0
      %225 = vmatpush2.bf16.xpose.msra.mxu0 0
      %226 = vmatprep.subr.bf16.mxu0 0
      %227 = vmatpush2.bf16.xpose.msra.mxu0 0
      %228 = vmatprep.mubr.bf16.mxu0 0
      %229 = vmatmul.mubr.bf16.gmra.mxu0 %v191
      %v230 = vpop.f32.mrf.mxu0
      %v231 = vadd.f32 %v182, %v230
      %v232 = vpop.f32.mrf.mxu0
      %v233 = vpop.f32.mrf.mxu0
      %v234 = vpop.f32.mrf.mxu0
      %235 = vdwg.mxu0
      %v236 = vsel %vm189, %v231, -inf
      %237 = vmax.xlane.f32.xlu0 %v236
      %v238 = vpop.xlane.xlu0 %237
      %v239 = vsub.f32 %v231, %v238
      %v240 = vmul.f32 %v239, 1.442695
      %v241 = vpow.pop %v240
      %v242 = vsel %vm189, %v241, 0.0
      %243 = vadd.xlane.f32.xlu0 %v242
      %v244 = vpop.xlane.xlu0 %243
      %v245 = vrcp.pop %v244
      %v246 = vmul.f32 %v241, %v245
      %v247 = vpack.c.bf16 %v246, %v246
      %248 = vrot.lane.b32.xlu0 %v186, 64
      %v249 = vpop.permute.xlu0 %248
      %v251 = vsel %vm189, %v247, 0
      %vm253 = vcmask 1043456
      %v255 = vsel %vm253, %v249, 0
      %257 = vmatprep.subr.bf16.mxu0 0
      %258 = vmatpush1.bf16.msra.mxu0 0
      %259 = vmatprep.subr.bf16.mxu0 0
      %260 = vmatpush1.bf16.msra.mxu0 0
      %261 = vmatprep.subr.bf16.mxu0 0
      %262 = vmatpush1.bf16.msra.mxu0 0
      %263 = vmatprep.subr.bf16.mxu0 0
      %264 = vmatpush1.bf16.msra.mxu0 0
      %265 = vmatprep.subr.bf16.mxu0 0
      %266 = vmatpush1.bf16.msra.mxu0 0
      %267 = vmatprep.subr.bf16.mxu0 0
      %268 = vmatpush1.bf16.msra.mxu0 0
      %269 = vmatprep.subr.bf16.mxu0 0
      %270 = vmatpush1.bf16.msra.mxu0 0
      %271 = vmatprep.subr.bf16.mxu0 0
      %272 = vmatpush1.bf16.msra.mxu0 %v255
      %273 = vmatprep.subr.bf16.mxu0 0
      %274 = vmatpush2.bf16.msra.mxu0 0
      %275 = vmatprep.subr.bf16.mxu0 0
      %276 = vmatpush2.bf16.msra.mxu0 0
      %277 = vmatprep.subr.bf16.mxu0 0
      %278 = vmatpush2.bf16.msra.mxu0 0
      %279 = vmatprep.subr.bf16.mxu0 0
      %280 = vmatpush2.bf16.msra.mxu0 0
      %281 = vmatprep.subr.bf16.mxu0 0
      %282 = vmatpush2.bf16.msra.mxu0 0
      %283 = vmatprep.subr.bf16.mxu0 0
      %284 = vmatpush2.bf16.msra.mxu0 0
      %285 = vmatprep.subr.bf16.mxu0 0
      %286 = vmatpush2.bf16.msra.mxu0 0
      %287 = vmatprep.subr.bf16.mxu0 0
      %288 = vmatpush2.bf16.msra.mxu0 0
      %289 = vmatprep.mubr.bf16.mxu0 0
      %290 = vmatmul.mubr.bf16.gmra.mxu0 %v251
      %v291 = vpop.f32.mrf.mxu0
      %v292 = vadd.f32 0.0, %v291
      %v293 = vpop.f32.mrf.mxu0
      %v294 = vpop.f32.mrf.mxu0
      %v295 = vpop.f32.mrf.mxu0
      %296 = vdwg.mxu0
      %297 = vst.msk [vmem:[#allocation2] sm:$0xff] %vm189, %v292
      %v298 = vld [vmem:[%s162] sm:$0xf]
      %v299 = vmul.bf16 %v298, 1052065461
      %v301 = vunpack.c.l.b16 %v299
      %v302 = vpack.c.b16 %v301, %v301
      %303 = vrot.lane.b32.xlu0 %v302, 120
      %v304 = vpop.permute.xlu0 %303
      %v306 = vunpack.c.l.b16 %v298
      %v307 = vpack.c.b16 %v306, %v306
      %308 = vrot.lane.b32.xlu0 %v307, 88
      %v309 = vpop.permute.xlu0 %308
      %v311 = vsel %vm189, %v304, 0
      %v314 = vsel %vm189, %v309, 0
      %316 = vmatprep.subr.bf16.mxu0 0
      %317 = vmatpush1.bf16.xpose.msra.mxu0 0
      %318 = vmatprep.subr.bf16.mxu0 0
      %319 = vmatpush1.bf16.xpose.msra.mxu0 0
      %320 = vmatprep.subr.bf16.mxu0 0
      %321 = vmatpush1.bf16.xpose.msra.mxu0 0
      %322 = vmatprep.subr.bf16.mxu0 0
      %323 = vmatpush1.bf16.xpose.msra.mxu0 0
      %324 = vmatprep.subr.bf16.mxu0 0
      %325 = vmatpush1.bf16.xpose.msra.mxu0 0
      %326 = vmatprep.subr.bf16.mxu0 0
      %327 = vmatpush1.bf16.xpose.msra.mxu0 0
      %328 = vmatprep.subr.bf16.mxu0 0
      %329 = vmatpush1.bf16.xpose.msra.mxu0 0
      %330 = vmatprep.subr.bf16.mxu0 0
      %331 = vmatpush1.bf16.xpose.msra.mxu0 %v314
      %332 = vmatprep.subr.bf16.mxu0 0
      %333 = vmatpush2.bf16.xpose.msra.mxu0 0
      %334 = vmatprep.subr.bf16.mxu0 0
      %335 = vmatpush2.bf16.xpose.msra.mxu0 0
      %336 = vmatprep.subr.bf16.mxu0 0
      %337 = vmatpush2.bf16.xpose.msra.mxu0 0
      %338 = vmatprep.subr.bf16.mxu0 0
      %339 = vmatpush2.bf16.xpose.msra.mxu0 0
      %340 = vmatprep.subr.bf16.mxu0 0
      %341 = vmatpush2.bf16.xpose.msra.mxu0 0
      %342 = vmatprep.subr.bf16.mxu0 0
      %343 = vmatpush2.bf16.xpose.msra.mxu0 0
      %344 = vmatprep.subr.bf16.mxu0 0
      %345 = vmatpush2.bf16.xpose.msra.mxu0 0
      %346 = vmatprep.subr.bf16.mxu0 0
      %347 = vmatpush2.bf16.xpose.msra.mxu0 0
      %348 = vmatprep.mubr.bf16.mxu0 0
      %349 = vmatmul.mubr.bf16.gmra.mxu0 %v311
      %v350 = vpop.f32.mrf.mxu0
      %v351 = vadd.f32 %v182, %v350
      %v352 = vpop.f32.mrf.mxu0
      %v353 = vpop.f32.mrf.mxu0
      %v354 = vpop.f32.mrf.mxu0
      %355 = vdwg.mxu0
      %v356 = vsel %vm189, %v351, -inf
      %357 = vmax.xlane.f32.xlu0 %v356
      %v358 = vpop.xlane.xlu0 %357
      %v359 = vsub.f32 %v351, %v358
      %v360 = vmul.f32 %v359, 1.442695
      %v361 = vpow.pop %v360
      %v362 = vsel %vm189, %v361, 0.0
      %363 = vadd.xlane.f32.xlu0 %v362
      %v364 = vpop.xlane.xlu0 %363
      %v365 = vrcp.pop %v364
      %v366 = vmul.f32 %v361, %v365
      %v367 = vpack.c.bf16 %v366, %v366
      %368 = vrot.lane.b32.xlu0 %v307, 56
      %v369 = vpop.permute.xlu0 %368
      %v371 = vsel %vm189, %v367, 0
      %v374 = vsel %vm253, %v369, 0
      %376 = vmatprep.subr.bf16.mxu0 0
      %377 = vmatpush1.bf16.msra.mxu0 0
      %378 = vmatprep.subr.bf16.mxu0 0
      %379 = vmatpush1.bf16.msra.mxu0 0
      %380 = vmatprep.subr.bf16.mxu0 0
      %381 = vmatpush1.bf16.msra.mxu0 0
      %382 = vmatprep.subr.bf16.mxu0 0
      %383 = vmatpush1.bf16.msra.mxu0 0
      %384 = vmatprep.subr.bf16.mxu0 0
      %385 = vmatpush1.bf16.msra.mxu0 0
      %386 = vmatprep.subr.bf16.mxu0 0
      %387 = vmatpush1.bf16.msra.mxu0 0
      %388 = vmatprep.subr.bf16.mxu0 0
      %389 = vmatpush1.bf16.msra.mxu0 0
      %390 = vmatprep.subr.bf16.mxu0 0
      %391 = vmatpush1.bf16.msra.mxu0 %v374
      %392 = vmatprep.subr.bf16.mxu0 0
      %393 = vmatpush2.bf16.msra.mxu0 0
      %394 = vmatprep.subr.bf16.mxu0 0
      %395 = vmatpush2.bf16.msra.mxu0 0
      %396 = vmatprep.subr.bf16.mxu0 0
      %397 = vmatpush2.bf16.msra.mxu0 0
      %398 = vmatprep.subr.bf16.mxu0 0
      %399 = vmatpush2.bf16.msra.mxu0 0
      %400 = vmatprep.subr.bf16.mxu0 0
      %401 = vmatpush2.bf16.msra.mxu0 0
      %402 = vmatprep.subr.bf16.mxu0 0
      %403 = vmatpush2.bf16.msra.mxu0 0
      %404 = vmatprep.subr.bf16.mxu0 0
      %405 = vmatpush2.bf16.msra.mxu0 0
      %406 = vmatprep.subr.bf16.mxu0 0
      %407 = vmatpush2.bf16.msra.mxu0 0
      %408 = vmatprep.mubr.bf16.mxu0 0
      %409 = vmatmul.mubr.bf16.gmra.mxu0 %v371
      %v410 = vpop.f32.mrf.mxu0
      %v411 = vadd.f32 0.0, %v410
      %v412 = vpop.f32.mrf.mxu0
      %v413 = vpop.f32.mrf.mxu0
      %v414 = vpop.f32.mrf.mxu0
      %415 = vdwg.mxu0
      %417 = vrot.lane.b32.xlu0 %v411, 8
      %v418 = vpop.permute.xlu0 %417
      %vm420 = vcmask 130112
      %421 = vst.msk [vmem:[#allocation2] sm:$0xff] %vm420, %v418
      %v422 = vld [vmem:[%s162] sm:$0xf]
      %v423 = vmul.bf16 %v422, 1052065461
      %v425 = vunpack.c.l.b16 %v423
      %v426 = vpack.c.b16 %v425, %v425
      %427 = vrot.lane.b32.xlu0 %v426, 112
      %v428 = vpop.permute.xlu0 %427
      %v430 = vunpack.c.l.b16 %v422
      %v431 = vpack.c.b16 %v430, %v430
      %432 = vrot.lane.b32.xlu0 %v431, 80
      %v433 = vpop.permute.xlu0 %432
      %v435 = vsel %vm189, %v428, 0
      %v438 = vsel %vm189, %v433, 0
      %440 = vmatprep.subr.bf16.mxu0 0
      %441 = vmatpush1.bf16.xpose.msra.mxu0 0
      %442 = vmatprep.subr.bf16.mxu0 0
      %443 = vmatpush1.bf16.xpose.msra.mxu0 0
      %444 = vmatprep.subr.bf16.mxu0 0
      %445 = vmatpush1.bf16.xpose.msra.mxu0 0
      %446 = vmatprep.subr.bf16.mxu0 0
      %447 = vmatpush1.bf16.xpose.msra.mxu0 0
      %448 = vmatprep.subr.bf16.mxu0 0
      %449 = vmatpush1.bf16.xpose.msra.mxu0 0
      %450 = vmatprep.subr.bf16.mxu0 0
      %451 = vmatpush1.bf16.xpose.msra.mxu0 0
      %452 = vmatprep.subr.bf16.mxu0 0
      %453 = vmatpush1.bf16.xpose.msra.mxu0 0
      %454 = vmatprep.subr.bf16.mxu0 0
      %455 = vmatpush1.bf16.xpose.msra.mxu0 %v438
      %456 = vmatprep.subr.bf16.mxu0 0
      %457 = vmatpush2.bf16.xpose.msra.mxu0 0
      %458 = vmatprep.subr.bf16.mxu0 0
      %459 = vmatpush2.bf16.xpose.msra.mxu0 0
      %460 = vmatprep.subr.bf16.mxu0 0
      %461 = vmatpush2.bf16.xpose.msra.mxu0 0
      %462 = vmatprep.subr.bf16.mxu0 0
      %463 = vmatpush2.bf16.xpose.msra.mxu0 0
      %464 = vmatprep.subr.bf16.mxu0 0
      %465 = vmatpush2.bf16.xpose.msra.mxu0 0
      %466 = vmatprep.subr.bf16.mxu0 0
      %467 = vmatpush2.bf16.xpose.msra.mxu0 0
      %468 = vmatprep.subr.bf16.mxu0 0
      %469 = vmatpush2.bf16.xpose.msra.mxu0 0
      %470 = vmatprep.subr.bf16.mxu0 0
      %471 = vmatpush2.bf16.xpose.msra.mxu0 0
      %472 = vmatprep.mubr.bf16.mxu0 0
      %473 = vmatmul.mubr.bf16.gmra.mxu0 %v435
      %v474 = vpop.f32.mrf.mxu0
      %v475 = vadd.f32 %v182, %v474
      %v476 = vpop.f32.mrf.mxu0
      %v477 = vpop.f32.mrf.mxu0
      %v478 = vpop.f32.mrf.mxu0
      %479 = vdwg.mxu0
      %v480 = vsel %vm189, %v475, -inf
      %481 = vmax.xlane.f32.xlu0 %v480
      %v482 = vpop.xlane.xlu0 %481
      %v483 = vsub.f32 %v475, %v482
      %v484 = vmul.f32 %v483, 1.442695
      %v485 = vpow.pop %v484
      %v486 = vsel %vm189, %v485, 0.0
      %487 = vadd.xlane.f32.xlu0 %v486
      %v488 = vpop.xlane.xlu0 %487
      %v489 = vrcp.pop %v488
      %v490 = vmul.f32 %v485, %v489
      %v491 = vpack.c.bf16 %v490, %v490
      %492 = vrot.lane.b32.xlu0 %v431, 48
      %v493 = vpop.permute.xlu0 %492
      %v495 = vsel %vm189, %v491, 0
      %v498 = vsel %vm253, %v493, 0
      %500 = vmatprep.subr.bf16.mxu0 0
      %501 = vmatpush1.bf16.msra.mxu0 0
      %502 = vmatprep.subr.bf16.mxu0 0
      %503 = vmatpush1.bf16.msra.mxu0 0
      %504 = vmatprep.subr.bf16.mxu0 0
      %505 = vmatpush1.bf16.msra.mxu0 0
      %506 = vmatprep.subr.bf16.mxu0 0
      %507 = vmatpush1.bf16.msra.mxu0 0
      %508 = vmatprep.subr.bf16.mxu0 0
      %509 = vmatpush1.bf16.msra.mxu0 0
      %510 = vmatprep.subr.bf16.mxu0 0
      %511 = vmatpush1.bf16.msra.mxu0 0
      %512 = vmatprep.subr.bf16.mxu0 0
      %513 = vmatpush1.bf16.msra.mxu0 0
      %514 = vmatprep.subr.bf16.mxu0 0
      %515 = vmatpush1.bf16.msra.mxu0 %v498
      %516 = vmatprep.subr.bf16.mxu0 0
      %517 = vmatpush2.bf16.msra.mxu0 0
      %518 = vmatprep.subr.bf16.mxu0 0
      %519 = vmatpush2.bf16.msra.mxu0 0
      %520 = vmatprep.subr.bf16.mxu0 0
      %521 = vmatpush2.bf16.msra.mxu0 0
      %522 = vmatprep.subr.bf16.mxu0 0
      %523 = vmatpush2.bf16.msra.mxu0 0
      %524 = vmatprep.subr.bf16.mxu0 0
      %525 = vmatpush2.bf16.msra.mxu0 0
      %526 = vmatprep.subr.bf16.mxu0 0
      %527 = vmatpush2.bf16.msra.mxu0 0
      %528 = vmatprep.subr.bf16.mxu0 0
      %529 = vmatpush2.bf16.msra.mxu0 0
      %530 = vmatprep.subr.bf16.mxu0 0
      %531 = vmatpush2.bf16.msra.mxu0 0
      %532 = vmatprep.mubr.bf16.mxu0 0
      %533 = vmatmul.mubr.bf16.gmra.mxu0 %v495
      %v534 = vpop.f32.mrf.mxu0
      %v535 = vadd.f32 0.0, %v534
      %v536 = vpop.f32.mrf.mxu0
      %v537 = vpop.f32.mrf.mxu0
      %v538 = vpop.f32.mrf.mxu0
      %539 = vdwg.mxu0
      %541 = vrot.lane.b32.xlu0 %v535, 16
      %v542 = vpop.permute.xlu0 %541
      %vm544 = vcmask 195712
      %545 = vst.msk [vmem:[#allocation2] sm:$0xff] %vm544, %v542
      %v546 = vld [vmem:[%s162] sm:$0xf]
      %v547 = vmul.bf16 %v546, 1052065461
      %v549 = vunpack.c.l.b16 %v547
      %v550 = vpack.c.b16 %v549, %v549
      %551 = vrot.lane.b32.xlu0 %v550, 104
      %v552 = vpop.permute.xlu0 %551
      %v554 = vunpack.c.l.b16 %v546
      %v555 = vpack.c.b16 %v554, %v554
      %556 = vrot.lane.b32.xlu0 %v555, 72
      %v557 = vpop.permute.xlu0 %556
      %v559 = vsel %vm189, %v552, 0
      %v562 = vsel %vm189, %v557, 0
      %564 = vmatprep.subr.bf16.mxu0 0
      %565 = vmatpush1.bf16.xpose.msra.mxu0 0
      %566 = vmatprep.subr.bf16.mxu0 0
      %567 = vmatpush1.bf16.xpose.msra.mxu0 0
      %568 = vmatprep.subr.bf16.mxu0 0
      %569 = vmatpush1.bf16.xpose.msra.mxu0 0
      %570 = vmatprep.subr.bf16.mxu0 0
      %571 = vmatpush1.bf16.xpose.msra.mxu0 0
      %572 = vmatprep.subr.bf16.mxu0 0
      %573 = vmatpush1.bf16.xpose.msra.mxu0 0
      %574 = vmatprep.subr.bf16.mxu0 0
      %575 = vmatpush1.bf16.xpose.msra.mxu0 0
      %576 = vmatprep.subr.bf16.mxu0 0
      %577 = vmatpush1.bf16.xpose.msra.mxu0 0
      %578 = vmatprep.subr.bf16.mxu0 0
      %579 = vmatpush1.bf16.xpose.msra.mxu0 %v562
      %580 = vmatprep.subr.bf16.mxu0 0
      %581 = vmatpush2.bf16.xpose.msra.mxu0 0
      %582 = vmatprep.subr.bf16.mxu0 0
      %583 = vmatpush2.bf16.xpose.msra.mxu0 0
      %584 = vmatprep.subr.bf16.mxu0 0
      %585 = vmatpush2.bf16.xpose.msra.mxu0 0
      %586 = vmatprep.subr.bf16.mxu0 0
      %587 = vmatpush2.bf16.xpose.msra.mxu0 0
      %588 = vmatprep.subr.bf16.mxu0 0
      %589 = vmatpush2.bf16.xpose.msra.mxu0 0
      %590 = vmatprep.subr.bf16.mxu0 0
      %591 = vmatpush2.bf16.xpose.msra.mxu0 0
      %592 = vmatprep.subr.bf16.mxu0 0
      %593 = vmatpush2.bf16.xpose.msra.mxu0 0
      %594 = vmatprep.subr.bf16.mxu0 0
      %595 = vmatpush2.bf16.xpose.msra.mxu0 0
      %596 = vmatprep.mubr.bf16.mxu0 0
      %597 = vmatmul.mubr.bf16.gmra.mxu0 %v559
      %v598 = vpop.f32.mrf.mxu0
      %v599 = vadd.f32 %v182, %v598
      %v600 = vpop.f32.mrf.mxu0
      %v601 = vpop.f32.mrf.mxu0
      %v602 = vpop.f32.mrf.mxu0
      %603 = vdwg.mxu0
      %v604 = vsel %vm189, %v599, -inf
      %605 = vmax.xlane.f32.xlu0 %v604
      %v606 = vpop.xlane.xlu0 %605
      %v607 = vsub.f32 %v599, %v606
      %v608 = vmul.f32 %v607, 1.442695
      %v609 = vpow.pop %v608
      %v610 = vsel %vm189, %v609, 0.0
      %611 = vadd.xlane.f32.xlu0 %v610
      %v612 = vpop.xlane.xlu0 %611
      %v613 = vrcp.pop %v612
      %v614 = vmul.f32 %v609, %v613
      %v615 = vpack.c.bf16 %v614, %v614
      %616 = vrot.lane.b32.xlu0 %v555, 40
      %v617 = vpop.permute.xlu0 %616
      %v619 = vsel %vm189, %v615, 0
      %v622 = vsel %vm253, %v617, 0
      %624 = vmatprep.subr.bf16.mxu0 0
      %625 = vmatpush1.bf16.msra.mxu0 0
      %626 = vmatprep.subr.bf16.mxu0 0
      %627 = vmatpush1.bf16.msra.mxu0 0
      %628 = vmatprep.subr.bf16.mxu0 0
      %629 = vmatpush1.bf16.msra.mxu0 0
      %630 = vmatprep.subr.bf16.mxu0 0
      %631 = vmatpush1.bf16.msra.mxu0 0
      %632 = vmatprep.subr.bf16.mxu0 0
      %633 = vmatpush1.bf16.msra.mxu0 0
      %634 = vmatprep.subr.bf16.mxu0 0
      %635 = vmatpush1.bf16.msra.mxu0 0
      %636 = vmatprep.subr.bf16.mxu0 0
      %637 = vmatpush1.bf16.msra.mxu0 0
      %638 = vmatprep.subr.bf16.mxu0 0
      %639 = vmatpush1.bf16.msra.mxu0 %v622
      %640 = vmatprep.subr.bf16.mxu0 0
      %641 = vmatpush2.bf16.msra.mxu0 0
      %642 = vmatprep.subr.bf16.mxu0 0
      %643 = vmatpush2.bf16.msra.mxu0 0
      %644 = vmatprep.subr.bf16.mxu0 0
      %645 = vmatpush2.bf16.msra.mxu0 0
      %646 = vmatprep.subr.bf16.mxu0 0
      %647 = vmatpush2.bf16.msra.mxu0 0
      %648 = vmatprep.subr.bf16.mxu0 0
      %649 = vmatpush2.bf16.msra.mxu0 0
      %650 = vmatprep.subr.bf16.mxu0 0
      %651 = vmatpush2.bf16.msra.mxu0 0
      %652 = vmatprep.subr.bf16.mxu0 0
      %653 = vmatpush2.bf16.msra.mxu0 0
      %654 = vmatprep.subr.bf16.mxu0 0
      %655 = vmatpush2.bf16.msra.mxu0 0
      %656 = vmatprep.mubr.bf16.mxu0 0
      %657 = vmatmul.mubr.bf16.gmra.mxu0 %v619
      %v658 = vpop.f32.mrf.mxu0
      %v659 = vadd.f32 0.0, %v658
      %v660 = vpop.f32.mrf.mxu0
      %v661 = vpop.f32.mrf.mxu0
      %v662 = vpop.f32.mrf.mxu0
      %663 = vdwg.mxu0
      %665 = vrot.lane.b32.xlu0 %v659, 24
      %v666 = vpop.permute.xlu0 %665
      %vm668 = vcmask 261312
      %669 = vst.msk [vmem:[#allocation2] sm:$0xff] %vm668, %v666
      %v670 = vld [vmem:[#allocation2] sm:$0xff]
      %v671 = vpack.c.bf16 %v670, %v670
      %vm672 = vcmask 257024
      %673 = vst.msk [vmem:[%s172] sm:$0xf] %vm672, %v671
      %p674 = scmp.lt.s32.totalorder %s17, 1
      %s675 = scalar_select %p674, %s17, 1
      %p676 = scmp.lt.s32.totalorder %s18, 0
      %s677 = scalar_select %p676, %s18, 0
      %s678 = sadd.s32 %s677, %s675
      %s679 = smul.addr %s678, 4
      %s680 = scalar_lea.vmem %s2, %s679
      // Predicated region
      $region29: #{albef_forward.82} parent=27 // pred_check
        %p681 = pneg %p97
      $region30: #{albef_forward.82} parent=27 // pred_check_branch
        %683 = sbr.rel (%p681) target = $region32
      $region31: #{albef_forward.82} parent=27 // pred_region
        _
      $region32: #{albef_forward.82} parent=27 // pred_fallthru
        _
    $region28: #{albef_forward.82} parent=5 // pred_fallthru
      _
    %p684 = scmp.le.s32.totalorder 2, %s8
    // Predicated region
    $region33: #{albef_forward.82} parent=5 // pred_check
      %p685 = pneg %p684
    $region34: #{albef_forward.82} parent=5 // pred_check_branch
      %687 = sbr.rel (%p685) target = $region36
    $region35: #{albef_forward.82} parent=5 // pred_region
      %s688 = ssub.s32 %s8, 2
      // Predicated region
      $region37: #{albef_forward.82} parent=35 // pred_check
        %p689 = pneg %p103
      $region38: #{albef_forward.82} parent=35 // pred_check_branch
        %691 = sbr.rel (%p689) target = $region40
      $region39: #{albef_forward.82} parent=35 // pred_region
        %p692 = scmp.lt.s32.totalorder %s19, 1
        %s693 = scalar_select %p692, %s19, 1
        %p694 = scmp.lt.s32.totalorder %s20, 0
        %s695 = scalar_select %p694, %s20, 0
        %s696 = sadd.s32 %s695, %s693
        %s697 = smul.addr %s696, 4
        %s698 = scalar_lea.vmem %s2, %s697
      $region40: #{albef_forward.82} parent=35 // pred_fallthru
        _
    $region36: #{albef_forward.82} parent=5 // pred_fallthru
      _
  $region6: #{albef_forward.82} parent=0 // loop_footer
    %s12 = sadd.s32 1, %s8
  $region7: #{albef_forward.82} parent=0 // loop_footer_branch
    %7 = sbr.rel target = $region3
  $region8: #{albef_forward.82} parent=0 // loop_exit
    _

// kernel: albef_forward.85
$region0: #{albef_forward.85}
  #allocation0 [shape = 'u32[]', space=smem, size = 0x4, offset = 0x4, fixed_abs, tag = 'smem constant byte address 0x4 - core index']
  #allocation1 [shape = 'u32[144,128]{1,0:T(1,128)}', space=vmem, size = 0x12000, scoped, tag = 'internal scratch']
  #allocation2 [shape = 'f32[16,256]{1,0:T(8,128)}', space=vmem, size = 0x4000, scoped, tag = 'scratch operand']
  %s0 = inlined_call_operand.vmem [shape: bf16[16,128], index: 0, kind: input, shape index: {}]
  %s1 = inlined_call_operand.vmem [shape: bf16[128,256], index: 1, kind: input, shape index: {}]
  %s2 = inlined_call_operand.vmem [shape: f32[1,256], index: 2, kind: input, shape index: {}]
  %s3 = inlined_call_operand.vmem [shape: bf16[16,256], index: 3, kind: output, shape index: {}]
  %s4 = sld [smem:[#allocation0]]
  $region30: #{albef_forward.85} parent=0
    _
  %s6 = ssub.s32 1, %s4
  %s7 = scalar_select 0, %s6, %s4
  // Predicated region
  $region2: #{albef_forward.85} parent=0 // pred_check
    _
  $region3: #{albef_forward.85} parent=0 // pred_check_branch
    %9 = sbr.rel (0) target = $region5
  $region4: #{albef_forward.85} parent=0 // pred_region
    _
  $region5: #{albef_forward.85} parent=0 // pred_fallthru
    _
  // Predicated region
  $region6: #{albef_forward.85} parent=0 // pred_check
    _
  $region7: #{albef_forward.85} parent=0 // pred_check_branch
    %11 = sbr.rel (0) target = $region9
  $region8: #{albef_forward.85} parent=0 // pred_region
    _
  $region9: #{albef_forward.85} parent=0 // pred_fallthru
    _
  // Predicated region
  $region10: #{albef_forward.85} parent=0 // pred_check
    _
  $region11: #{albef_forward.85} parent=0 // pred_check_branch
    %13 = sbr.rel (0) target = $region13
  $region12: #{albef_forward.85} parent=0 // pred_region
    _
  $region13: #{albef_forward.85} parent=0 // pred_fallthru
    _
  %p15 = scmp.eq.s32.totalorder 0, 0
  // Predicated region
  $region14: #{albef_forward.85} parent=0 // pred_check
    %p16 = pneg %p15
  $region15: #{albef_forward.85} parent=0 // pred_check_branch
    %18 = sbr.rel (%p16) target = $region17
  $region16: #{albef_forward.85} parent=0 // pred_region
    %19 = vst [vmem:[#allocation2] sm:$0xff] 0.0
    %20 = vst [vmem:[#allocation2 + $0x8] sm:$0xff] 0.0
    %21 = vst [vmem:[#allocation2 + $0x10] sm:$0xff] 0.0
    %22 = vst [vmem:[#allocation2 + $0x18] sm:$0xff] 0.0
  $region17: #{albef_forward.85} parent=0 // pred_fallthru
    _
  %v23 = vld [vmem:[#allocation2] sm:$0xff]
  %v24 = vld [vmem:[#allocation2 + $0x8] sm:$0xff]
  %v25 = vld [vmem:[#allocation2 + $0x10] sm:$0xff]
  %v26 = vld [vmem:[#allocation2 + $0x18] sm:$0xff]
  %v27 = vld [vmem:[%s0] sm:$0xf]
  %v28 = vld [vmem:[%s0 + $0x4] sm:$0xf]
  %v29 = vld [vmem:[%s1] sm:$0xff]
  %v30 = vld [vmem:[%s1 + $0x8] sm:$0xff]
  %v31 = vld [vmem:[%s1 + $0x10] sm:$0xff]
  %v32 = vld [vmem:[%s1 + $0x18] sm:$0xff]
  %v33 = vld [vmem:[%s1 + $0x20] sm:$0xff]
  %v34 = vld [vmem:[%s1 + $0x28] sm:$0xff]
  %v35 = vld [vmem:[%s1 + $0x30] sm:$0xff]
  %v36 = vld [vmem:[%s1 + $0x38] sm:$0xff]
  %v37 = vld [vmem:[%s1 + $0x40] sm:$0xff]
  %v38 = vld [vmem:[%s1 + $0x48] sm:$0xff]
  %v39 = vld [vmem:[%s1 + $0x50] sm:$0xff]
  %v40 = vld [vmem:[%s1 + $0x58] sm:$0xff]
  %v41 = vld [vmem:[%s1 + $0x60] sm:$0xff]
  %v42 = vld [vmem:[%s1 + $0x68] sm:$0xff]
  %v43 = vld [vmem:[%s1 + $0x70] sm:$0xff]
  %v44 = vld [vmem:[%s1 + $0x78] sm:$0xff]
  %v47 = vunpack.c.l.b16 %v27
  %v48 = vunpack.c.l.b16 %v28
  %v49 = vpack.c.b16 %v48, %v47
  %v67 = vunpack.c.l.b16 %v29
  %v68 = vunpack.c.h.b16 %v29
  %v69 = vunpack.c.l.b16 %v30
  %v70 = vunpack.c.h.b16 %v30
  %v71 = vunpack.c.l.b16 %v31
  %v72 = vunpack.c.h.b16 %v31
  %v73 = vunpack.c.l.b16 %v32
  %v74 = vunpack.c.h.b16 %v32
  %v75 = vunpack.c.l.b16 %v33
  %v76 = vunpack.c.h.b16 %v33
  %v77 = vunpack.c.l.b16 %v34
  %v78 = vunpack.c.h.b16 %v34
  %v79 = vunpack.c.l.b16 %v35
  %v80 = vunpack.c.h.b16 %v35
  %v81 = vunpack.c.l.b16 %v36
  %v82 = vunpack.c.h.b16 %v36
  %v83 = vunpack.c.l.b16 %v37
  %v84 = vunpack.c.h.b16 %v37
  %v85 = vunpack.c.l.b16 %v38
  %v86 = vunpack.c.h.b16 %v38
  %v87 = vunpack.c.l.b16 %v39
  %v88 = vunpack.c.h.b16 %v39
  %v89 = vunpack.c.l.b16 %v40
  %v90 = vunpack.c.h.b16 %v40
  %v91 = vunpack.c.l.b16 %v41
  %v92 = vunpack.c.h.b16 %v41
  %v93 = vunpack.c.l.b16 %v42
  %v94 = vunpack.c.h.b16 %v42
  %v95 = vunpack.c.l.b16 %v43
  %v96 = vunpack.c.h.b16 %v43
  %v97 = vunpack.c.l.b16 %v44
  %v98 = vunpack.c.h.b16 %v44
  %v99 = vpack.c.b16 %v69, %v67
  %v100 = vpack.c.b16 %v70, %v68
  %v101 = vpack.c.b16 %v73, %v71
  %v102 = vpack.c.b16 %v74, %v72
  %v103 = vpack.c.b16 %v77, %v75
  %v104 = vpack.c.b16 %v78, %v76
  %v105 = vpack.c.b16 %v81, %v79
  %v106 = vpack.c.b16 %v82, %v80
  %v107 = vpack.c.b16 %v85, %v83
  %v108 = vpack.c.b16 %v86, %v84
  %v109 = vpack.c.b16 %v89, %v87
  %v110 = vpack.c.b16 %v90, %v88
  %v111 = vpack.c.b16 %v93, %v91
  %v112 = vpack.c.b16 %v94, %v92
  %v113 = vpack.c.b16 %v97, %v95
  %v114 = vpack.c.b16 %v98, %v96
  %131 = vmatprep.subr.bf16.mxu0 %v114
  %132 = vmatpush1.bf16.msra.mxu0 %v113
  %133 = vmatprep.subr.bf16.mxu0 %v112
  %134 = vmatpush1.bf16.msra.mxu0 %v111
  %135 = vmatprep.subr.bf16.mxu0 %v110
  %136 = vmatpush1.bf16.msra.mxu0 %v109
  %137 = vmatprep.subr.bf16.mxu0 %v108
  %138 = vmatpush1.bf16.msra.mxu0 %v107
  %139 = vmatprep.subr.bf16.mxu0 %v106
  %140 = vmatpush1.bf16.msra.mxu0 %v105
  %141 = vmatprep.subr.bf16.mxu0 %v104
  %142 = vmatpush1.bf16.msra.mxu0 %v103
  %143 = vmatprep.subr.bf16.mxu0 %v102
  %144 = vmatpush1.bf16.msra.mxu0 %v101
  %145 = vmatprep.subr.bf16.mxu0 %v100
  %146 = vmatpush1.bf16.msra.mxu0 %v99
  %147 = vmatprep.subr.bf16.mxu0 0
  %148 = vmatpush2.bf16.msra.mxu0 0
  %149 = vmatprep.subr.bf16.mxu0 0
  %150 = vmatpush2.bf16.msra.mxu0 0
  %151 = vmatprep.subr.bf16.mxu0 0
  %152 = vmatpush2.bf16.msra.mxu0 0
  %153 = vmatprep.subr.bf16.mxu0 0
  %154 = vmatpush2.bf16.msra.mxu0 0
  %155 = vmatprep.subr.bf16.mxu0 0
  %156 = vmatpush2.bf16.msra.mxu0 0
  %157 = vmatprep.subr.bf16.mxu0 0
  %158 = vmatpush2.bf16.msra.mxu0 0
  %159 = vmatprep.subr.bf16.mxu0 0
  %160 = vmatpush2.bf16.msra.mxu0 0
  %161 = vmatprep.subr.bf16.mxu0 0
  %162 = vmatpush2.bf16.msra.mxu0 0
  %163 = vmatprep.mubr.bf16.mxu0 0
  %164 = vmatmul.mubr.bf16.gmra.mxu0 %v49
  %v165 = vpop.f32.mrf.mxu0
  %v166 = vadd.f32 0.0, %v165
  %v167 = vpop.f32.mrf.mxu0
  %v168 = vadd.f32 0.0, %v167
  %v169 = vpop.f32.mrf.mxu0
  %v170 = vadd.f32 0.0, %v169
  %v171 = vpop.f32.mrf.mxu0
  %v172 = vadd.f32 0.0, %v171
  %173 = vdwg.mxu0
  %v174 = vadd.f32 %v23, %v166
  %v175 = vadd.f32 %v24, %v168
  %v176 = vadd.f32 %v25, %v170
  %v177 = vadd.f32 %v26, %v172
  %178 = vst [vmem:[#allocation2] sm:$0xff] %v174
  %179 = vst [vmem:[#allocation2 + $0x8] sm:$0xff] %v175
  %180 = vst [vmem:[#allocation2 + $0x10] sm:$0xff] %v176
  %181 = vst [vmem:[#allocation2 + $0x18] sm:$0xff] %v177
  // Predicated region
  $region18: #{albef_forward.85} parent=0 // pred_check
    %p182 = pneg %p15
  $region19: #{albef_forward.85} parent=0 // pred_check_branch
    %184 = sbr.rel (%p182) target = $region21
  $region20: #{albef_forward.85} parent=0 // pred_region
    %v185 = vld [vmem:[#allocation2] sm:$0xff]
    %v186 = vld [vmem:[#allocation2 + $0x8] sm:$0xff]
    %v187 = vld [vmem:[#allocation2 + $0x10] sm:$0xff]
    %v188 = vld [vmem:[#allocation2 + $0x18] sm:$0xff]
    %v189 = vld [vmem:[%s2] sm:$0x3]
    %v191 = vlaneseq
    %v192 = vshrl.u32 %v191, 7
    %v193 = vsub.s32 0, %v192
    %v194 = vrot.slane %v189, %v193
    %v195 = vlaneseq
    %v196 = vshrl.u32 %v195, 7
    %v197 = vsub.s32 1, %v196
    %v198 = vrot.slane %v189, %v197
    %v201 = vadd.f32 %v185, %v194
    %v202 = vadd.f32 %v186, %v198
    %v203 = vadd.f32 %v187, %v194
    %v204 = vadd.f32 %v188, %v198
    %v205 = vmul.f32 %v201, %v201
    %v206 = vmul.f32 %v202, %v202
    %v207 = vmul.f32 %v203, %v203
    %v208 = vmul.f32 %v204, %v204
    %v209 = vmul.f32 %v201, %v205
    %v210 = vmul.f32 %v202, %v206
    %v211 = vmul.f32 %v203, %v207
    %v212 = vmul.f32 %v204, %v208
    %v213 = vmul.f32 %v209, 0.044715
    %v214 = vmul.f32 %v210, 0.044715
    %v215 = vmul.f32 %v211, 0.044715
    %v216 = vmul.f32 %v212, 0.044715
    %v217 = vadd.f32 %v201, %v213
    %v218 = vadd.f32 %v202, %v214
    %v219 = vadd.f32 %v203, %v215
    %v220 = vadd.f32 %v204, %v216
    %v221 = vmul.f32 %v217, 0.7978846
    %v222 = vmul.f32 %v218, 0.7978846
    %v223 = vmul.f32 %v219, 0.7978846
    %v224 = vmul.f32 %v220, 0.7978846
    %v225 = vtanh.pop %v221
    %v226 = vtanh.pop %v222
    %v227 = vtanh.pop %v223
    %v228 = vtanh.pop %v224
    %v229 = vadd.f32 %v225, 1.0
    %v230 = vadd.f32 %v226, 1.0
    %v231 = vadd.f32 %v227, 1.0
    %v232 = vadd.f32 %v228, 1.0
    %v233 = vmul.f32 %v229, 0.5
    %v234 = vmul.f32 %v230, 0.5
    %v235 = vmul.f32 %v231, 0.5
    %v236 = vmul.f32 %v232, 0.5
    %v237 = vmul.f32 %v201, %v233
    %v238 = vmul.f32 %v202, %v234
    %v239 = vmul.f32 %v203, %v235
    %v240 = vmul.f32 %v204, %v236
    %v241 = vpack.c.bf16 %v239, %v237
    %v242 = vpack.c.bf16 %v240, %v238
    %v245 = vunpack.c.l.b16 %v241
    %v246 = vunpack.c.l.b16 %v242
    %v247 = vunpack.c.h.b16 %v241
    %v248 = vunpack.c.h.b16 %v242
    %v249 = vpack.c.b16 %v246, %v245
    %v250 = vpack.c.b16 %v248, %v247
    %253 = vst [vmem:[%s3] sm:$0xff] %v249
    %254 = vst [vmem:[%s3 + $0x8] sm:$0xff] %v250
  $region21: #{albef_forward.85} parent=0 // pred_fallthru
    _
  // Predicated region
  $region22: #{albef_forward.85} parent=0 // pred_check
    _
  $region23: #{albef_forward.85} parent=0 // pred_check_branch
    %256 = sbr.rel (0) target = $region25
  $region24: #{albef_forward.85} parent=0 // pred_region
    _
  $region25: #{albef_forward.85} parent=0 // pred_fallthru
    _
  // Predicated region
  $region26: #{albef_forward.85} parent=0 // pred_check
    _
  $region27: #{albef_forward.85} parent=0 // pred_check_branch
    %258 = sbr.rel (0) target = $region29
  $region28: #{albef_forward.85} parent=0 // pred_region
    _
  $region29: #{albef_forward.85} parent=0 // pred_fallthru
    _

// kernel: albef_forward.58
$region0: #{albef_forward.58}
  #allocation0 [shape = 'u32[]', space=smem, size = 0x4, offset = 0x4, fixed_abs, tag = 'smem constant byte address 0x4 - core index']
  #allocation1 [shape = 'u32[144,128]{1,0:T(1,128)}', space=vmem, size = 0x12000, scoped, tag = 'internal scratch']
  #allocation2 [shape = 'f32[8,256]{1,0:T(8,128)}', space=vmem, size = 0x2000, scoped, tag = 'scratch operand']
  %s0 = inlined_call_operand.vmem [shape: bf16[8,256], index: 0, kind: input, shape index: {}]
  %s1 = inlined_call_operand.vmem [shape: bf16[256,256], index: 1, kind: input, shape index: {}]
  %s2 = inlined_call_operand.vmem [shape: f32[1,256], index: 2, kind: input, shape index: {}]
  %s3 = inlined_call_operand.vmem [shape: f32[8,256], index: 3, kind: output, shape index: {}]
  %s4 = sld [smem:[#allocation0]]
  $region30: #{albef_forward.58} parent=0
    _
  %s6 = ssub.s32 1, %s4
  %s7 = scalar_select 0, %s6, %s4
  // Predicated region
  $region2: #{albef_forward.58} parent=0 // pred_check
    _
  $region3: #{albef_forward.58} parent=0 // pred_check_branch
    %9 = sbr.rel (0) target = $region5
  $region4: #{albef_forward.58} parent=0 // pred_region
    _
  $region5: #{albef_forward.58} parent=0 // pred_fallthru
    _
  // Predicated region
  $region6: #{albef_forward.58} parent=0 // pred_check
    _
  $region7: #{albef_forward.58} parent=0 // pred_check_branch
    %11 = sbr.rel (0) target = $region9
  $region8: #{albef_forward.58} parent=0 // pred_region
    _
  $region9: #{albef_forward.58} parent=0 // pred_fallthru
    _
  // Predicated region
  $region10: #{albef_forward.58} parent=0 // pred_check
    _
  $region11: #{albef_forward.58} parent=0 // pred_check_branch
    %13 = sbr.rel (0) target = $region13
  $region12: #{albef_forward.58} parent=0 // pred_region
    _
  $region13: #{albef_forward.58} parent=0 // pred_fallthru
    _
  %p14 = scmp.eq.s32.totalorder 0, 0
  // Predicated region
  $region14: #{albef_forward.58} parent=0 // pred_check
    %p15 = pneg %p14
  $region15: #{albef_forward.58} parent=0 // pred_check_branch
    %17 = sbr.rel (%p15) target = $region17
  $region16: #{albef_forward.58} parent=0 // pred_region
    %18 = vst [vmem:[#allocation2] sm:$0xff] 0.0
    %19 = vst [vmem:[#allocation2 + $0x8] sm:$0xff] 0.0
  $region17: #{albef_forward.58} parent=0 // pred_fallthru
    _
  %v20 = vld [vmem:[#allocation2] sm:$0xff]
  %v21 = vld [vmem:[#allocation2 + $0x8] sm:$0xff]
  %v22 = vld [vmem:[%s0] sm:$0xff]
  %v23 = vld [vmem:[%s1] sm:$0xff]
  %v24 = vld [vmem:[%s1 + $0x8] sm:$0xff]
  %v25 = vld [vmem:[%s1 + $0x10] sm:$0xff]
  %v26 = vld [vmem:[%s1 + $0x18] sm:$0xff]
  %v27 = vld [vmem:[%s1 + $0x20] sm:$0xff]
  %v28 = vld [vmem:[%s1 + $0x28] sm:$0xff]
  %v29 = vld [vmem:[%s1 + $0x30] sm:$0xff]
  %v30 = vld [vmem:[%s1 + $0x38] sm:$0xff]
  %v31 = vld [vmem:[%s1 + $0x40] sm:$0xff]
  %v32 = vld [vmem:[%s1 + $0x48] sm:$0xff]
  %v33 = vld [vmem:[%s1 + $0x50] sm:$0xff]
  %v34 = vld [vmem:[%s1 + $0x58] sm:$0xff]
  %v35 = vld [vmem:[%s1 + $0x60] sm:$0xff]
  %v36 = vld [vmem:[%s1 + $0x68] sm:$0xff]
  %v37 = vld [vmem:[%s1 + $0x70] sm:$0xff]
  %v38 = vld [vmem:[%s1 + $0x78] sm:$0xff]
  %v39 = vld [vmem:[%s1 + $0x80] sm:$0xff]
  %v40 = vld [vmem:[%s1 + $0x88] sm:$0xff]
  %v41 = vld [vmem:[%s1 + $0x90] sm:$0xff]
  %v42 = vld [vmem:[%s1 + $0x98] sm:$0xff]
  %v43 = vld [vmem:[%s1 + $0xa0] sm:$0xff]
  %v44 = vld [vmem:[%s1 + $0xa8] sm:$0xff]
  %v45 = vld [vmem:[%s1 + $0xb0] sm:$0xff]
  %v46 = vld [vmem:[%s1 + $0xb8] sm:$0xff]
  %v47 = vld [vmem:[%s1 + $0xc0] sm:$0xff]
  %v48 = vld [vmem:[%s1 + $0xc8] sm:$0xff]
  %v49 = vld [vmem:[%s1 + $0xd0] sm:$0xff]
  %v50 = vld [vmem:[%s1 + $0xd8] sm:$0xff]
  %v51 = vld [vmem:[%s1 + $0xe0] sm:$0xff]
  %v52 = vld [vmem:[%s1 + $0xe8] sm:$0xff]
  %v53 = vld [vmem:[%s1 + $0xf0] sm:$0xff]
  %v54 = vld [vmem:[%s1 + $0xf8] sm:$0xff]
  %v56 = vunpack.c.l.b16 %v22
  %v57 = vunpack.c.h.b16 %v22
  %v58 = vpack.c.b16 %v56, %v56
  %v59 = vpack.c.b16 %v57, %v57
  %v94 = vunpack.c.l.b16 %v23
  %v95 = vunpack.c.h.b16 %v23
  %v96 = vunpack.c.l.b16 %v24
  %v97 = vunpack.c.h.b16 %v24
  %v98 = vunpack.c.l.b16 %v25
  %v99 = vunpack.c.h.b16 %v25
  %v100 = vunpack.c.l.b16 %v26
  %v101 = vunpack.c.h.b16 %v26
  %v102 = vunpack.c.l.b16 %v27
  %v103 = vunpack.c.h.b16 %v27
  %v104 = vunpack.c.l.b16 %v28
  %v105 = vunpack.c.h.b16 %v28
  %v106 = vunpack.c.l.b16 %v29
  %v107 = vunpack.c.h.b16 %v29
  %v108 = vunpack.c.l.b16 %v30
  %v109 = vunpack.c.h.b16 %v30
  %v110 = vunpack.c.l.b16 %v31
  %v111 = vunpack.c.h.b16 %v31
  %v112 = vunpack.c.l.b16 %v32
  %v113 = vunpack.c.h.b16 %v32
  %v114 = vunpack.c.l.b16 %v33
  %v115 = vunpack.c.h.b16 %v33
  %v116 = vunpack.c.l.b16 %v34
  %v117 = vunpack.c.h.b16 %v34
  %v118 = vunpack.c.l.b16 %v35
  %v119 = vunpack.c.h.b16 %v35
  %v120 = vunpack.c.l.b16 %v36
  %v121 = vunpack.c.h.b16 %v36
  %v122 = vunpack.c.l.b16 %v37
  %v123 = vunpack.c.h.b16 %v37
  %v124 = vunpack.c.l.b16 %v38
  %v125 = vunpack.c.h.b16 %v38
  %v126 = vunpack.c.l.b16 %v39
  %v127 = vunpack.c.h.b16 %v39
  %v128 = vunpack.c.l.b16 %v40
  %v129 = vunpack.c.h.b16 %v40
  %v130 = vunpack.c.l.b16 %v41
  %v131 = vunpack.c.h.b16 %v41
  %v132 = vunpack.c.l.b16 %v42
  %v133 = vunpack.c.h.b16 %v42
  %v134 = vunpack.c.l.b16 %v43
  %v135 = vunpack.c.h.b16 %v43
  %v136 = vunpack.c.l.b16 %v44
  %v137 = vunpack.c.h.b16 %v44
  %v138 = vunpack.c.l.b16 %v45
  %v139 = vunpack.c.h.b16 %v45
  %v140 = vunpack.c.l.b16 %v46
  %v141 = vunpack.c.h.b16 %v46
  %v142 = vunpack.c.l.b16 %v47
  %v143 = vunpack.c.h.b16 %v47
  %v144 = vunpack.c.l.b16 %v48
  %v145 = vunpack.c.h.b16 %v48
  %v146 = vunpack.c.l.b16 %v49
  %v147 = vunpack.c.h.b16 %v49
  %v148 = vunpack.c.l.b16 %v50
  %v149 = vunpack.c.h.b16 %v50
  %v150 = vunpack.c.l.b16 %v51
  %v151 = vunpack.c.h.b16 %v51
  %v152 = vunpack.c.l.b16 %v52
  %v153 = vunpack.c.h.b16 %v52
  %v154 = vunpack.c.l.b16 %v53
  %v155 = vunpack.c.h.b16 %v53
  %v156 = vunpack.c.l.b16 %v54
  %v157 = vunpack.c.h.b16 %v54
  %v158 = vpack.c.b16 %v96, %v94
  %v159 = vpack.c.b16 %v97, %v95
  %v160 = vpack.c.b16 %v100, %v98
  %v161 = vpack.c.b16 %v101, %v99
  %v162 = vpack.c.b16 %v104, %v102
  %v163 = vpack.c.b16 %v105, %v103
  %v164 = vpack.c.b16 %v108, %v106
  %v165 = vpack.c.b16 %v109, %v107
  %v166 = vpack.c.b16 %v112, %v110
  %v167 = vpack.c.b16 %v113, %v111
  %v168 = vpack.c.b16 %v116, %v114
  %v169 = vpack.c.b16 %v117, %v115
  %v170 = vpack.c.b16 %v120, %v118
  %v171 = vpack.c.b16 %v121, %v119
  %v172 = vpack.c.b16 %v124, %v122
  %v173 = vpack.c.b16 %v125, %v123
  %v174 = vpack.c.b16 %v128, %v126
  %v175 = vpack.c.b16 %v129, %v127
  %v176 = vpack.c.b16 %v132, %v130
  %v177 = vpack.c.b16 %v133, %v131
  %v178 = vpack.c.b16 %v136, %v134
  %v179 = vpack.c.b16 %v137, %v135
  %v180 = vpack.c.b16 %v140, %v138
  %v181 = vpack.c.b16 %v141, %v139
  %v182 = vpack.c.b16 %v144, %v142
  %v183 = vpack.c.b16 %v145, %v143
  %v184 = vpack.c.b16 %v148, %v146
  %v185 = vpack.c.b16 %v149, %v147
  %v186 = vpack.c.b16 %v152, %v150
  %v187 = vpack.c.b16 %v153, %v151
  %v188 = vpack.c.b16 %v156, %v154
  %v189 = vpack.c.b16 %v157, %v155
  %222 = vmatprep.subr.bf16.mxu0 %v173
  %223 = vmatpush1.bf16.msra.mxu0 %v172
  %224 = vmatprep.subr.bf16.mxu0 %v171
  %225 = vmatpush1.bf16.msra.mxu0 %v170
  %226 = vmatprep.subr.bf16.mxu0 %v169
  %227 = vmatpush1.bf16.msra.mxu0 %v168
  %228 = vmatprep.subr.bf16.mxu0 %v167
  %229 = vmatpush1.bf16.msra.mxu0 %v166
  %230 = vmatprep.subr.bf16.mxu0 %v165
  %231 = vmatpush1.bf16.msra.mxu0 %v164
  %232 = vmatprep.subr.bf16.mxu0 %v163
  %233 = vmatpush1.bf16.msra.mxu0 %v162
  %234 = vmatprep.subr.bf16.mxu0 %v161
  %235 = vmatpush1.bf16.msra.mxu0 %v160
  %236 = vmatprep.subr.bf16.mxu0 %v159
  %237 = vmatpush1.bf16.msra.mxu0 %v158
  %238 = vmatprep.subr.bf16.mxu0 %v189
  %239 = vmatpush2.bf16.msra.mxu0 %v188
  %240 = vmatprep.subr.bf16.mxu0 %v187
  %241 = vmatpush2.bf16.msra.mxu0 %v186
  %242 = vmatprep.subr.bf16.mxu0 %v185
  %243 = vmatpush2.bf16.msra.mxu0 %v184
  %244 = vmatprep.subr.bf16.mxu0 %v183
  %245 = vmatpush2.bf16.msra.mxu0 %v182
  %246 = vmatprep.subr.bf16.mxu0 %v181
  %247 = vmatpush2.bf16.msra.mxu0 %v180
  %248 = vmatprep.subr.bf16.mxu0 %v179
  %249 = vmatpush2.bf16.msra.mxu0 %v178
  %250 = vmatprep.subr.bf16.mxu0 %v177
  %251 = vmatpush2.bf16.msra.mxu0 %v176
  %252 = vmatprep.subr.bf16.mxu0 %v175
  %253 = vmatpush2.bf16.msra.mxu0 %v174
  %254 = vmatprep.mubr.bf16.mxu0 %v59
  %255 = vmatmul.mubr.bf16.gmra.mxu0 %v58
  %v256 = vpop.f32.mrf.mxu0
  %v257 = vadd.f32 0.0, %v256
  %v258 = vpop.f32.mrf.mxu0
  %v259 = vadd.f32 0.0, %v258
  %v260 = vpop.f32.mrf.mxu0
  %v261 = vpop.f32.mrf.mxu0
  %262 = vdwg.mxu0
  %v263 = vadd.f32 %v20, %v257
  %v264 = vadd.f32 %v21, %v259
  %265 = vst [vmem:[#allocation2] sm:$0xff] %v263
  %266 = vst [vmem:[#allocation2 + $0x8] sm:$0xff] %v264
  // Predicated region
  $region18: #{albef_forward.58} parent=0 // pred_check
    %p267 = pneg %p14
  $region19: #{albef_forward.58} parent=0 // pred_check_branch
    %269 = sbr.rel (%p267) target = $region21
  $region20: #{albef_forward.58} parent=0 // pred_region
    %v270 = vld [vmem:[#allocation2] sm:$0xff]
    %v271 = vld [vmem:[#allocation2 + $0x8] sm:$0xff]
    %v272 = vld [vmem:[%s2] sm:$0x3]
    %v274 = vlaneseq
    %v275 = vshrl.u32 %v274, 7
    %v276 = vsub.s32 0, %v275
    %v277 = vrot.slane %v272, %v276
    %v278 = vlaneseq
    %v279 = vshrl.u32 %v278, 7
    %v280 = vsub.s32 1, %v279
    %v281 = vrot.slane %v272, %v280
    %v284 = vadd.f32 %v270, %v277
    %v285 = vadd.f32 %v271, %v281
    %286 = vst [vmem:[%s3] sm:$0xff] %v284
    %287 = vst [vmem:[%s3 + $0x8] sm:$0xff] %v285
  $region21: #{albef_forward.58} parent=0 // pred_fallthru
    _
  // Predicated region
  $region22: #{albef_forward.58} parent=0 // pred_check
    _
  $region23: #{albef_forward.58} parent=0 // pred_check_branch
    %289 = sbr.rel (0) target = $region25
  $region24: #{albef_forward.58} parent=0 // pred_region
    _
  $region25: #{albef_forward.58} parent=0 // pred_fallthru
    _
  // Predicated region
  $region26: #{albef_forward.58} parent=0 // pred_check
    _
  $region27: #{albef_forward.58} parent=0 // pred_check_branch
    %291 = sbr.rel (0) target = $region29
  $region28: #{albef_forward.58} parent=0 // pred_region
    _
  $region29: #{albef_forward.58} parent=0 // pred_fallthru
    _

// kernel: albef_forward.59
$region0: #{albef_forward.59}
  #allocation0 [shape = 'u32[]', space=smem, size = 0x4, offset = 0x4, fixed_abs, tag = 'smem constant byte address 0x4 - core index']
  #allocation1 [shape = 'u32[144,128]{1,0:T(1,128)}', space=vmem, size = 0x12000, scoped, tag = 'internal scratch']
  %s0 = inlined_call_operand.vmem [shape: f32[16,32], index: 0, kind: input, shape index: {}]
  %s1 = inlined_call_operand.vmem [shape: f32[1,32], index: 1, kind: input, shape index: {}]
  %s2 = inlined_call_operand.vmem [shape: f32[1,32], index: 2, kind: input, shape index: {}]
  %s3 = inlined_call_operand.vmem [shape: bf16[16,32], index: 3, kind: output, shape index: {}]
  %s4 = sld [smem:[#allocation0]]
  $region22: #{albef_forward.59} parent=0
    _
  %s6 = ssub.s32 1, %s4
  %s7 = scalar_select 0, %s6, %s4
  // Predicated region
  $region2: #{albef_forward.59} parent=0 // pred_check
    _
  $region3: #{albef_forward.59} parent=0 // pred_check_branch
    %9 = sbr.rel (0) target = $region5
  $region4: #{albef_forward.59} parent=0 // pred_region
    _
  $region5: #{albef_forward.59} parent=0 // pred_fallthru
    _
  // Predicated region
  $region6: #{albef_forward.59} parent=0 // pred_check
    _
  $region7: #{albef_forward.59} parent=0 // pred_check_branch
    %11 = sbr.rel (0) target = $region9
  $region8: #{albef_forward.59} parent=0 // pred_region
    _
  $region9: #{albef_forward.59} parent=0 // pred_fallthru
    _
  // Predicated region
  $region10: #{albef_forward.59} parent=0 // pred_check
    _
  $region11: #{albef_forward.59} parent=0 // pred_check_branch
    %13 = sbr.rel (0) target = $region13
  $region12: #{albef_forward.59} parent=0 // pred_region
    _
  $region13: #{albef_forward.59} parent=0 // pred_fallthru
    _
  %v14 = vld [vmem:[%s0] sm:$0xff]
  %v15 = vld [vmem:[%s0 + $0x8] sm:$0xff]
  %vm16 = vcmask 261120
  %v17 = vsel %vm16, %v14, 0.0
  %18 = vadd.xlane.f32.xlu0 %v17
  %v19 = vpop.xlane.xlu0 %18
  %v20 = vsel %vm16, %v15, 0.0
  %21 = vadd.xlane.f32.xlu0 %v20
  %v22 = vpop.xlane.xlu0 %21
  %v23 = vrcp.pop 32.0
  %v24 = vmul.f32 %v19, %v23
  %v25 = vmul.f32 %v22, %v23
  %v26 = vsub.f32 %v14, %v24
  %v27 = vsub.f32 %v15, %v25
  %v28 = vmul.f32 %v26, %v26
  %v29 = vmul.f32 %v27, %v27
  %v30 = vsel %vm16, %v28, 0.0
  %31 = vadd.xlane.f32.xlu0 %v30
  %v32 = vpop.xlane.xlu0 %31
  %v33 = vsel %vm16, %v29, 0.0
  %34 = vadd.xlane.f32.xlu0 %v33
  %v35 = vpop.xlane.xlu0 %34
  %v36 = vmul.f32 %v32, %v23
  %v37 = vmul.f32 %v35, %v23
  %v38 = vadd.f32 %v36, 1e-06
  %v39 = vadd.f32 %v37, 1e-06
  %v40 = vrsqrt.pop %v38
  %v41 = vrsqrt.pop %v39
  %v42 = vmul.f32 %v26, %v40
  %v43 = vmul.f32 %v27, %v41
  %v44 = vld [vmem:[%s1] sm:$0x1]
  %v46 = vlaneseq
  %v47 = vshrl.u32 %v46, 7
  %v48 = vsub.s32 0, %v47
  %v49 = vrot.slane %v44, %v48
  %v51 = vmul.f32 %v42, %v49
  %v52 = vmul.f32 %v43, %v49
  %v53 = vld [vmem:[%s2] sm:$0x1]
  %v55 = vlaneseq
  %v56 = vshrl.u32 %v55, 7
  %v57 = vsub.s32 0, %v56
  %v58 = vrot.slane %v53, %v57
  %v60 = vadd.f32 %v51, %v58
  %v61 = vadd.f32 %v52, %v58
  %v62 = vpack.c.bf16 %v61, %v60
  %v64 = vunpack.c.l.b16 %v62
  %v65 = vunpack.c.h.b16 %v62
  %v66 = vpack.c.b16 %v64, %v64
  %v67 = vpack.c.b16 %v65, %v65
  %vm70 = vcmask 257024
  %71 = vst.msk [vmem:[%s3] sm:$0xf] %vm70, %v66
  %72 = vst.msk [vmem:[%s3 + $0x4] sm:$0xf] %vm70, %v67
  // Predicated region
  $region14: #{albef_forward.59} parent=0 // pred_check
    _
  $region15: #{albef_forward.59} parent=0 // pred_check_branch
    %74 = sbr.rel (0) target = $region17
  $region16: #{albef_forward.59} parent=0 // pred_region
    _
  $region17: #{albef_forward.59} parent=0 // pred_fallthru
    _
  // Predicated region
  $region18: #{albef_forward.59} parent=0 // pred_check
    _
  $region19: #{albef_forward.59} parent=0 // pred_check_branch
    %76 = sbr.rel (0) target = $region21
  $region20: #{albef_forward.59} parent=0 // pred_region
    _
  $region21: #{albef_forward.59} parent=0 // pred_fallthru
    _

// kernel: albef_forward.62
$region0: #{albef_forward.62}
  #allocation0 [shape = 'u32[]', space=smem, size = 0x4, offset = 0x4, fixed_abs, tag = 'smem constant byte address 0x4 - core index']
  #allocation1 [shape = 'u32[144,128]{1,0:T(1,128)}', space=vmem, size = 0x12000, scoped, tag = 'internal scratch']
  #allocation2 [shape = 'f32[16,256]{1,0:T(8,128)}', space=vmem, size = 0x4000, scoped, tag = 'scratch operand']
  %s0 = inlined_call_operand.vmem [shape: bf16[16,128], index: 0, kind: input, shape index: {}]
  %s1 = inlined_call_operand.vmem [shape: bf16[128,256], index: 1, kind: input, shape index: {}]
  %s2 = inlined_call_operand.vmem [shape: f32[1,256], index: 2, kind: input, shape index: {}]
  %s3 = inlined_call_operand.vmem [shape: f32[16,256], index: 3, kind: input, shape index: {}]
  %s4 = inlined_call_operand.vmem [shape: f32[16,256], index: 4, kind: output, shape index: {}]
  %s5 = sld [smem:[#allocation0]]
  $region34: #{albef_forward.62} parent=0
    _
  %s7 = ssub.s32 1, %s5
  %s8 = scalar_select 0, %s7, %s5
  // Predicated region
  $region2: #{albef_forward.62} parent=0 // pred_check
    _
  $region3: #{albef_forward.62} parent=0 // pred_check_branch
    %10 = sbr.rel (0) target = $region5
  $region4: #{albef_forward.62} parent=0 // pred_region
    _
  $region5: #{albef_forward.62} parent=0 // pred_fallthru
    _
  // Predicated region
  $region6: #{albef_forward.62} parent=0 // pred_check
    _
  $region7: #{albef_forward.62} parent=0 // pred_check_branch
    %12 = sbr.rel (0) target = $region9
  $region8: #{albef_forward.62} parent=0 // pred_region
    _
  $region9: #{albef_forward.62} parent=0 // pred_fallthru
    _
  // Predicated region
  $region10: #{albef_forward.62} parent=0 // pred_check
    _
  $region11: #{albef_forward.62} parent=0 // pred_check_branch
    %14 = sbr.rel (0) target = $region13
  $region12: #{albef_forward.62} parent=0 // pred_region
    _
  $region13: #{albef_forward.62} parent=0 // pred_fallthru
    _
  // Predicated region
  $region14: #{albef_forward.62} parent=0 // pred_check
    _
  $region15: #{albef_forward.62} parent=0 // pred_check_branch
    %16 = sbr.rel (0) target = $region17
  $region16: #{albef_forward.62} parent=0 // pred_region
    _
  $region17: #{albef_forward.62} parent=0 // pred_fallthru
    _
  %p18 = scmp.eq.s32.totalorder 0, 0
  // Predicated region
  $region18: #{albef_forward.62} parent=0 // pred_check
    %p19 = pneg %p18
  $region19: #{albef_forward.62} parent=0 // pred_check_branch
    %21 = sbr.rel (%p19) target = $region21
  $region20: #{albef_forward.62} parent=0 // pred_region
    %22 = vst [vmem:[#allocation2] sm:$0xff] 0.0
    %23 = vst [vmem:[#allocation2 + $0x8] sm:$0xff] 0.0
    %24 = vst [vmem:[#allocation2 + $0x10] sm:$0xff] 0.0
    %25 = vst [vmem:[#allocation2 + $0x18] sm:$0xff] 0.0
  $region21: #{albef_forward.62} parent=0 // pred_fallthru
    _
  %v26 = vld [vmem:[#allocation2] sm:$0xff]
  %v27 = vld [vmem:[#allocation2 + $0x8] sm:$0xff]
  %v28 = vld [vmem:[#allocation2 + $0x10] sm:$0xff]
  %v29 = vld [vmem:[#allocation2 + $0x18] sm:$0xff]
  %v30 = vld [vmem:[%s0] sm:$0xf]
  %v31 = vld [vmem:[%s0 + $0x4] sm:$0xf]
  %v32 = vld [vmem:[%s1] sm:$0xff]
  %v33 = vld [vmem:[%s1 + $0x8] sm:$0xff]
  %v34 = vld [vmem:[%s1 + $0x10] sm:$0xff]
  %v35 = vld [vmem:[%s1 + $0x18] sm:$0xff]
  %v36 = vld [vmem:[%s1 + $0x20] sm:$0xff]
  %v37 = vld [vmem:[%s1 + $0x28] sm:$0xff]
  %v38 = vld [vmem:[%s1 + $0x30] sm:$0xff]
  %v39 = vld [vmem:[%s1 + $0x38] sm:$0xff]
  %v40 = vld [vmem:[%s1 + $0x40] sm:$0xff]
  %v41 = vld [vmem:[%s1 + $0x48] sm:$0xff]
  %v42 = vld [vmem:[%s1 + $0x50] sm:$0xff]
  %v43 = vld [vmem:[%s1 + $0x58] sm:$0xff]
  %v44 = vld [vmem:[%s1 + $0x60] sm:$0xff]
  %v45 = vld [vmem:[%s1 + $0x68] sm:$0xff]
  %v46 = vld [vmem:[%s1 + $0x70] sm:$0xff]
  %v47 = vld [vmem:[%s1 + $0x78] sm:$0xff]
  %v50 = vunpack.c.l.b16 %v30
  %v51 = vunpack.c.l.b16 %v31
  %v52 = vpack.c.b16 %v51, %v50
  %v70 = vunpack.c.l.b16 %v32
  %v71 = vunpack.c.h.b16 %v32
  %v72 = vunpack.c.l.b16 %v33
  %v73 = vunpack.c.h.b16 %v33
  %v74 = vunpack.c.l.b16 %v34
  %v75 = vunpack.c.h.b16 %v34
  %v76 = vunpack.c.l.b16 %v35
  %v77 = vunpack.c.h.b16 %v35
  %v78 = vunpack.c.l.b16 %v36
  %v79 = vunpack.c.h.b16 %v36
  %v80 = vunpack.c.l.b16 %v37
  %v81 = vunpack.c.h.b16 %v37
  %v82 = vunpack.c.l.b16 %v38
  %v83 = vunpack.c.h.b16 %v38
  %v84 = vunpack.c.l.b16 %v39
  %v85 = vunpack.c.h.b16 %v39
  %v86 = vunpack.c.l.b16 %v40
  %v87 = vunpack.c.h.b16 %v40
  %v88 = vunpack.c.l.b16 %v41
  %v89 = vunpack.c.h.b16 %v41
  %v90 = vunpack.c.l.b16 %v42
  %v91 = vunpack.c.h.b16 %v42
  %v92 = vunpack.c.l.b16 %v43
  %v93 = vunpack.c.h.b16 %v43
  %v94 = vunpack.c.l.b16 %v44
  %v95 = vunpack.c.h.b16 %v44
  %v96 = vunpack.c.l.b16 %v45
  %v97 = vunpack.c.h.b16 %v45
  %v98 = vunpack.c.l.b16 %v46
  %v99 = vunpack.c.h.b16 %v46
  %v100 = vunpack.c.l.b16 %v47
  %v101 = vunpack.c.h.b16 %v47
  %v102 = vpack.c.b16 %v72, %v70
  %v103 = vpack.c.b16 %v73, %v71
  %v104 = vpack.c.b16 %v76, %v74
  %v105 = vpack.c.b16 %v77, %v75
  %v106 = vpack.c.b16 %v80, %v78
  %v107 = vpack.c.b16 %v81, %v79
  %v108 = vpack.c.b16 %v84, %v82
  %v109 = vpack.c.b16 %v85, %v83
  %v110 = vpack.c.b16 %v88, %v86
  %v111 = vpack.c.b16 %v89, %v87
  %v112 = vpack.c.b16 %v92, %v90
  %v113 = vpack.c.b16 %v93, %v91
  %v114 = vpack.c.b16 %v96, %v94
  %v115 = vpack.c.b16 %v97, %v95
  %v116 = vpack.c.b16 %v100, %v98
  %v117 = vpack.c.b16 %v101, %v99
  %134 = vmatprep.subr.bf16.mxu0 %v117
  %135 = vmatpush1.bf16.msra.mxu0 %v116
  %136 = vmatprep.subr.bf16.mxu0 %v115
  %137 = vmatpush1.bf16.msra.mxu0 %v114
  %138 = vmatprep.subr.bf16.mxu0 %v113
  %139 = vmatpush1.bf16.msra.mxu0 %v112
  %140 = vmatprep.subr.bf16.mxu0 %v111
  %141 = vmatpush1.bf16.msra.mxu0 %v110
  %142 = vmatprep.subr.bf16.mxu0 %v109
  %143 = vmatpush1.bf16.msra.mxu0 %v108
  %144 = vmatprep.subr.bf16.mxu0 %v107
  %145 = vmatpush1.bf16.msra.mxu0 %v106
  %146 = vmatprep.subr.bf16.mxu0 %v105
  %147 = vmatpush1.bf16.msra.mxu0 %v104
  %148 = vmatprep.subr.bf16.mxu0 %v103
  %149 = vmatpush1.bf16.msra.mxu0 %v102
  %150 = vmatprep.subr.bf16.mxu0 0
  %151 = vmatpush2.bf16.msra.mxu0 0
  %152 = vmatprep.subr.bf16.mxu0 0
  %153 = vmatpush2.bf16.msra.mxu0 0
  %154 = vmatprep.subr.bf16.mxu0 0
  %155 = vmatpush2.bf16.msra.mxu0 0
  %156 = vmatprep.subr.bf16.mxu0 0
  %157 = vmatpush2.bf16.msra.mxu0 0
  %158 = vmatprep.subr.bf16.mxu0 0
  %159 = vmatpush2.bf16.msra.mxu0 0
  %160 = vmatprep.subr.bf16.mxu0 0
  %161 = vmatpush2.bf16.msra.mxu0 0
  %162 = vmatprep.subr.bf16.mxu0 0
  %163 = vmatpush2.bf16.msra.mxu0 0
  %164 = vmatprep.subr.bf16.mxu0 0
  %165 = vmatpush2.bf16.msra.mxu0 0
  %166 = vmatprep.mubr.bf16.mxu0 0
  %167 = vmatmul.mubr.bf16.gmra.mxu0 %v52
  %v168 = vpop.f32.mrf.mxu0
  %v169 = vadd.f32 0.0, %v168
  %v170 = vpop.f32.mrf.mxu0
  %v171 = vadd.f32 0.0, %v170
  %v172 = vpop.f32.mrf.mxu0
  %v173 = vadd.f32 0.0, %v172
  %v174 = vpop.f32.mrf.mxu0
  %v175 = vadd.f32 0.0, %v174
  %176 = vdwg.mxu0
  %v177 = vadd.f32 %v26, %v169
  %v178 = vadd.f32 %v27, %v171
  %v179 = vadd.f32 %v28, %v173
  %v180 = vadd.f32 %v29, %v175
  %181 = vst [vmem:[#allocation2] sm:$0xff] %v177
  %182 = vst [vmem:[#allocation2 + $0x8] sm:$0xff] %v178
  %183 = vst [vmem:[#allocation2 + $0x10] sm:$0xff] %v179
  %184 = vst [vmem:[#allocation2 + $0x18] sm:$0xff] %v180
  // Predicated region
  $region22: #{albef_forward.62} parent=0 // pred_check
    %p185 = pneg %p18
  $region23: #{albef_forward.62} parent=0 // pred_check_branch
    %187 = sbr.rel (%p185) target = $region25
  $region24: #{albef_forward.62} parent=0 // pred_region
    %v188 = vld [vmem:[#allocation2] sm:$0xff]
    %v189 = vld [vmem:[#allocation2 + $0x8] sm:$0xff]
    %v190 = vld [vmem:[#allocation2 + $0x10] sm:$0xff]
    %v191 = vld [vmem:[#allocation2 + $0x18] sm:$0xff]
    %v192 = vld [vmem:[%s2] sm:$0x3]
    %v194 = vlaneseq
    %v195 = vshrl.u32 %v194, 7
    %v196 = vsub.s32 0, %v195
    %v197 = vrot.slane %v192, %v196
    %v198 = vlaneseq
    %v199 = vshrl.u32 %v198, 7
    %v200 = vsub.s32 1, %v199
    %v201 = vrot.slane %v192, %v200
    %v204 = vadd.f32 %v188, %v197
    %v205 = vadd.f32 %v189, %v201
    %v206 = vadd.f32 %v190, %v197
    %v207 = vadd.f32 %v191, %v201
    %v208 = vld [vmem:[%s3] sm:$0xff]
    %v209 = vld [vmem:[%s3 + $0x8] sm:$0xff]
    %v210 = vld [vmem:[%s3 + $0x10] sm:$0xff]
    %v211 = vld [vmem:[%s3 + $0x18] sm:$0xff]
    %v212 = vadd.f32 %v204, %v208
    %v213 = vadd.f32 %v205, %v209
    %v214 = vadd.f32 %v206, %v210
    %v215 = vadd.f32 %v207, %v211
    %216 = vst [vmem:[%s4] sm:$0xff] %v212
    %217 = vst [vmem:[%s4 + $0x8] sm:$0xff] %v213
    %218 = vst [vmem:[%s4 + $0x10] sm:$0xff] %v214
    %219 = vst [vmem:[%s4 + $0x18] sm:$0xff] %v215
  $region25: #{albef_forward.62} parent=0 // pred_fallthru
    _
  // Predicated region
  $region26: #{albef_forward.62} parent=0 // pred_check
    _
  $region27: #{albef_forward.62} parent=0 // pred_check_branch
    %221 = sbr.rel (0) target = $region29
  $region28: #{albef_forward.62} parent=0 // pred_region
    _
  $region29: #{albef_forward.62} parent=0 // pred_fallthru
    _
  // Predicated region
  $region30: #{albef_forward.62} parent=0 // pred_check
    _
  $region31: #{albef_forward.62} parent=0 // pred_check_branch
    %223 = sbr.rel (0) target = $region33
  $region32: #{albef_forward.62} parent=0 // pred_region
    _
  $region33: #{albef_forward.62} parent=0 // pred_fallthru
    _

// kernel: albef_forward.61
$region0: #{albef_forward.61}
  #allocation0 [shape = 'u32[]', space=smem, size = 0x4, offset = 0x4, fixed_abs, tag = 'smem constant byte address 0x4 - core index']
  #allocation1 [shape = 'u32[144,128]{1,0:T(1,128)}', space=vmem, size = 0x12000, scoped, tag = 'internal scratch']
  #allocation2 [shape = 'f32[5,32]{1,0:T(8,128)}', space=vmem, size = 0x1000, scoped, tag = 'scratch operand']
  %s0 = inlined_call_operand.vmem [shape: bf16[2,5,96], index: 0, kind: input, shape index: {}]
  %s1 = inlined_call_operand.vmem [shape: bf16[2,5,32], index: 1, kind: output, shape index: {}]
  %s2 = sld [smem:[#allocation0]]
  $region37: #{albef_forward.61} parent=0
    _
  %s4 = ssub.s32 1, %s2
  %s5 = scalar_select 0, %s4, %s2
  loop: start=0, step=1, limit=4
  $region2: #{albef_forward.61} parent=0 // loop_pre_header
    _
  $region3: #{albef_forward.61} parent=0 // loop_header
    %s7 = sphi 0, %s11
    %p8 = scmp.ge.s32.totalorder %s7, 4
    %s14 = sphi 0, %s26
    %s15 = sphi 0, %s22
    %s16 = sphi 0, %s14
    %s17 = sphi 0, %s15
    %s18 = sphi 0, %s16
    %s19 = sphi 0, %s17
    %s29 = sphi 0, %s31
    %s32 = sphi 0, %s29
    %s33 = sphi 0, %s32
    %s49 = sphi 0, %s33
    %s57 = sphi 0, %s59
    %s60 = sphi 0, %s57
    %s61 = sphi 0, %s60
    %s77 = sphi 0, %s61
  $region4: #{albef_forward.61} parent=0 // loop_header_branch
    %10 = sbr.rel (%p8) target = $region8
  $region5: #{albef_forward.61} parent=0 // loop_body
    %s12 = ssub.s32 %s7, 1
    %s13 = ssub.s32 %s7, 2
    %s20 = sadd.s32 1, %s15
    %p21 = scmp.ge.s32.totalorder %s20, 1
    %s22 = scalar_select %p21, 0, %s20
    %s23 = sadd.s32 1, %s14
    %s24 = scalar_select %p21, %s23, %s14
    %p25 = scmp.ge.s32.totalorder %s24, 2
    %s26 = scalar_select %p25, 0, %s24
    %s27 = ssub.s32 %s14, %s26
    %p28 = scmp.eq.s32.totalorder %s27, 0
    %s30 = sadd.s32 %s29, 1
    %s31 = scalar_select %p28, %s29, %s30
    %p34 = pneg %p28
    %p35 = scmp.eq.s32.totalorder %s7, 1
    %p36 = por %p34, %p35
    %p37 = scmp.ne.s32.totalorder %s29, %s32
    %p38 = scmp.eq.s32.totalorder %s7, 0
    %p39 = por %p37, %p38
    %p40 = scmp.ne.s32.totalorder %s29, %s32
    %p41 = scmp.eq.s32.totalorder %s12, 1
    %p42 = por %p40, %p41
    %p43 = scmp.ne.s32.totalorder %s32, %s33
    %p44 = scmp.eq.s32.totalorder %s12, 0
    %p45 = por %p43, %p44
    %p46 = scmp.ne.s32.totalorder %s32, %s33
    %p47 = scmp.eq.s32.totalorder %s13, 1
    %p48 = por %p46, %p47
    %p50 = scmp.ne.s32.totalorder %s33, %s49
    %p51 = scmp.eq.s32.totalorder %s13, 0
    %p52 = por %p50, %p51
    %s53 = ssub.s32 %s14, %s26
    %s54 = ssub.s32 %s15, %s22
    %s55 = sor.u32 %s53, %s54
    %p56 = scmp.eq.s32.totalorder %s55, 0
    %s58 = sadd.s32 %s57, 1
    %s59 = scalar_select %p56, %s57, %s58
    %p62 = pneg %p56
    %p63 = scmp.eq.s32.totalorder %s7, 1
    %p64 = por %p62, %p63
    %p65 = scmp.ne.s32.totalorder %s57, %s60
    %p66 = scmp.eq.s32.totalorder %s7, 0
    %p67 = por %p65, %p66
    %p68 = scmp.ne.s32.totalorder %s57, %s60
    %p69 = scmp.eq.s32.totalorder %s12, 1
    %p70 = por %p68, %p69
    %p71 = scmp.ne.s32.totalorder %s60, %s61
    %p72 = scmp.eq.s32.totalorder %s12, 0
    %p73 = por %p71, %p72
    %p74 = scmp.ne.s32.totalorder %s60, %s61
    %p75 = scmp.eq.s32.totalorder %s13, 1
    %p76 = por %p74, %p75
    %p78 = scmp.ne.s32.totalorder %s61, %s77
    %p79 = scmp.eq.s32.totalorder %s13, 0
    %p80 = por %p78, %p79
    %p81 = scmp.le.s32.totalorder 1, %s7
    %p82 = scmp.lt.s32.totalorder %s7, 3
    %p83 = pnand %p81, %p82
    %p84 = pneg %p83
    // Predicated region
    $region9: #{albef_forward.61} parent=5 // pred_check
      _
    $region10: #{albef_forward.61} parent=5 // pred_check_branch
      %86 = sbr.rel (%p83) target = $region12
    $region11: #{albef_forward.61} parent=5 // pred_region
      %s87 = ssub.s32 %s7, 1
    $region12: #{albef_forward.61} parent=5 // pred_fallthru
      _
    %p88 = scmp.lt.s32.totalorder %s7, 2
    // Predicated region
    $region13: #{albef_forward.61} parent=5 // pred_check
      %p89 = pneg %p88
    $region14: #{albef_forward.61} parent=5 // pred_check_branch
      %91 = sbr.rel (%p89) target = $region16
    $region15: #{albef_forward.61} parent=5 // pred_region
      // Predicated region
      $region17: #{albef_forward.61} parent=15 // pred_check
        %p92 = pneg %p39
      $region18: #{albef_forward.61} parent=15 // pred_check_branch
        %94 = sbr.rel (%p92) target = $region20
      $region19: #{albef_forward.61} parent=15 // pred_region
        %p95 = scmp.lt.s32.totalorder %s14, 1
        %s96 = scalar_select %p95, %s14, 1
        %s97 = smul.addr %s96, 4
        %s98 = scalar_lea.vmem %s0, %s97
      $region20: #{albef_forward.61} parent=15 // pred_fallthru
        _
    $region16: #{albef_forward.61} parent=5 // pred_fallthru
      _
    %p99 = scmp.le.s32.totalorder 1, %s7
    %p100 = scmp.lt.s32.totalorder %s7, 3
    %p101 = pnand %p99, %p100
    %p102 = pneg %p101
    // Predicated region
    $region21: #{albef_forward.61} parent=5 // pred_check
      _
    $region22: #{albef_forward.61} parent=5 // pred_check_branch
      %104 = sbr.rel (%p101) target = $region24
    $region23: #{albef_forward.61} parent=5 // pred_region
      %s105 = ssub.s32 %s7, 1
      %p106 = scmp.lt.s32.totalorder %s16, 1
      %s107 = scalar_select %p106, %s16, 1
      %s108 = smul.addr %s107, 4
      %s109 = scalar_lea.vmem %s0, %s108
      %p110 = pneg %p45
      %p111 = pneg %p42
      %p112 = pneg %p73
      %p113 = pneg %p70
      %p114 = scmp.lt.s32.totalorder %s16, 1
      %s115 = scalar_select %p114, %s16, 1
      %p116 = scmp.lt.s32.totalorder %s17, 0
      %s117 = scalar_select %p116, %s17, 0
      %s118 = sadd.s32 %s117, %s115
      %s119 = smul.addr %s118, 4
      %s120 = scalar_lea.vmem %s1, %s119
      %p121 = scmp.lt.s32.totalorder %s16, 1
      %s122 = scalar_select %p121, %s16, 1
      %s123 = smul.addr %s122, 4
      %s124 = scalar_lea.vmem %s0, %s123
      %p125 = scmp.lt.s32.totalorder %s16, 1
      %s126 = scalar_select %p125, %s16, 1
      %p127 = scmp.lt.s32.totalorder %s17, 0
      %s128 = scalar_select %p127, %s17, 0
      %s129 = sadd.s32 %s128, %s126
      %s130 = smul.addr %s129, 4
      %s131 = scalar_lea.vmem %s1, %s130
      %v134 = vld [vmem:[%s124] sm:$0x7]
      %v135 = vmul.bf16 %v134, 1052065461
      %v137 = vunpack.c.l.b16 %v134
      %v138 = vpack.c.b16 %v137, %v137
      %139 = vrot.lane.b32.xlu0 %v138, 96
      %v140 = vpop.permute.xlu0 %139
      %vm141 = vcmask 64512
      %v143 = vsel %vm141, %v135, 0
      %v146 = vsel %vm141, %v140, 0
      %148 = vmatprep.subr.bf16.mxu0 0
      %149 = vmatpush1.bf16.xpose.msra.mxu0 0
      %150 = vmatprep.subr.bf16.mxu0 0
      %151 = vmatpush1.bf16.xpose.msra.mxu0 0
      %152 = vmatprep.subr.bf16.mxu0 0
      %153 = vmatpush1.bf16.xpose.msra.mxu0 0
      %154 = vmatprep.subr.bf16.mxu0 0
      %155 = vmatpush1.bf16.xpose.msra.mxu0 0
      %156 = vmatprep.subr.bf16.mxu0 0
      %157 = vmatpush1.bf16.xpose.msra.mxu0 0
      %158 = vmatprep.subr.bf16.mxu0 0
      %159 = vmatpush1.bf16.xpose.msra.mxu0 0
      %160 = vmatprep.subr.bf16.mxu0 0
      %161 = vmatpush1.bf16.xpose.msra.mxu0 0
      %162 = vmatprep.subr.bf16.mxu0 0
      %163 = vmatpush1.bf16.xpose.msra.mxu0 %v146
      %164 = vmatprep.subr.bf16.mxu0 0
      %165 = vmatpush2.bf16.xpose.msra.mxu0 0
      %166 = vmatprep.subr.bf16.mxu0 0
      %167 = vmatpush2.bf16.xpose.msra.mxu0 0
      %168 = vmatprep.subr.bf16.mxu0 0
      %169 = vmatpush2.bf16.xpose.msra.mxu0 0
      %170 = vmatprep.subr.bf16.mxu0 0
      %171 = vmatpush2.bf16.xpose.msra.mxu0 0
      %172 = vmatprep.subr.bf16.mxu0 0
      %173 = vmatpush2.bf16.xpose.msra.mxu0 0
      %174 = vmatprep.subr.bf16.mxu0 0
      %175 = vmatpush2.bf16.xpose.msra.mxu0 0
      %176 = vmatprep.subr.bf16.mxu0 0
      %177 = vmatpush2.bf16.xpose.msra.mxu0 0
      %178 = vmatprep.subr.bf16.mxu0 0
      %179 = vmatpush2.bf16.xpose.msra.mxu0 0
      %180 = vmatprep.mubr.bf16.mxu0 0
      %181 = vmatmul.mubr.bf16.gmra.mxu0 %v143
      %v182 = vpop.f32.mrf.mxu0
      %v183 = vadd.f32 0.0, %v182
      %v184 = vpop.f32.mrf.mxu0
      %v185 = vpop.f32.mrf.mxu0
      %v186 = vpop.f32.mrf.mxu0
      %187 = vdwg.mxu0
      %vm188 = vcmask 36864
      %v189 = vsel %vm188, %v183, -inf
      %190 = vmax.xlane.f32.xlu0 %v189
      %v191 = vpop.xlane.xlu0 %190
      %v192 = vsub.f32 %v183, %v191
      %v193 = vmul.f32 %v192, 1.442695
      %v194 = vpow.pop %v193
      %v195 = vsel %vm188, %v194, 0.0
      %196 = vadd.xlane.f32.xlu0 %v195
      %v197 = vpop.xlane.xlu0 %196
      %v198 = vrcp.pop %v197
      %v199 = vmul.f32 %v194, %v198
      %v200 = vpack.c.bf16 %v199, %v199
      %201 = vrot.lane.b32.xlu0 %v138, 64
      %v202 = vpop.permute.xlu0 %201
      %vm203 = vcmask 39936
      %v205 = vsel %vm203, %v200, 0
      %vm207 = vcmask 1041408
      %vm208 = vcmask 1042432
      %v209 = vsel %vm207, 4294967295, 65535
      %v210 = vsel %vm208, %v209, 0
      %v212 = vand.u32 %v202, %v210
      %214 = vmatprep.subr.bf16.mxu0 0
      %215 = vmatpush1.bf16.msra.mxu0 0
      %216 = vmatprep.subr.bf16.mxu0 0
      %217 = vmatpush1.bf16.msra.mxu0 0
      %218 = vmatprep.subr.bf16.mxu0 0
      %219 = vmatpush1.bf16.msra.mxu0 0
      %220 = vmatprep.subr.bf16.mxu0 0
      %221 = vmatpush1.bf16.msra.mxu0 0
      %222 = vmatprep.subr.bf16.mxu0 0
      %223 = vmatpush1.bf16.msra.mxu0 0
      %224 = vmatprep.subr.bf16.mxu0 0
      %225 = vmatpush1.bf16.msra.mxu0 0
      %226 = vmatprep.subr.bf16.mxu0 0
      %227 = vmatpush1.bf16.msra.mxu0 0
      %228 = vmatprep.subr.bf16.mxu0 0
      %229 = vmatpush1.bf16.msra.mxu0 %v212
      %230 = vmatprep.subr.bf16.mxu0 0
      %231 = vmatpush2.bf16.msra.mxu0 0
      %232 = vmatprep.subr.bf16.mxu0 0
      %233 = vmatpush2.bf16.msra.mxu0 0
      %234 = vmatprep.subr.bf16.mxu0 0
      %235 = vmatpush2.bf16.msra.mxu0 0
      %236 = vmatprep.subr.bf16.mxu0 0
      %237 = vmatpush2.bf16.msra.mxu0 0
      %238 = vmatprep.subr.bf16.mxu0 0
      %239 = vmatpush2.bf16.msra.mxu0 0
      %240 = vmatprep.subr.bf16.mxu0 0
      %241 = vmatpush2.bf16.msra.mxu0 0
      %242 = vmatprep.subr.bf16.mxu0 0
      %243 = vmatpush2.bf16.msra.mxu0 0
      %244 = vmatprep.subr.bf16.mxu0 0
      %245 = vmatpush2.bf16.msra.mxu0 0
      %246 = vmatprep.mubr.bf16.mxu0 0
      %247 = vmatmul.mubr.bf16.gmra.mxu0 %v205
      %v248 = vpop.f32.mrf.mxu0
      %v249 = vadd.f32 0.0, %v248
      %v250 = vpop.f32.mrf.mxu0
      %v251 = vpop.f32.mrf.mxu0
      %v252 = vpop.f32.mrf.mxu0
      %253 = vdwg.mxu0
      %vm254 = vcmask 61440
      %255 = vst.msk [vmem:[#allocation2] sm:$0x1f] %vm254, %v249
      %v256 = vld [vmem:[%s124] sm:$0x7]
      %v257 = vmul.bf16 %v256, 1052065461
      %v259 = vunpack.c.l.b16 %v257
      %v260 = vpack.c.b16 %v259, %v259
      %261 = vrot.lane.b32.xlu0 %v260, 120
      %v262 = vpop.permute.xlu0 %261
      %v264 = vunpack.c.l.b16 %v256
      %v265 = vpack.c.b16 %v264, %v264
      %266 = vrot.lane.b32.xlu0 %v265, 88
      %v267 = vpop.permute.xlu0 %266
      %v269 = vsel %vm141, %v262, 0
      %v272 = vsel %vm141, %v267, 0
      %274 = vmatprep.subr.bf16.mxu0 0
      %275 = vmatpush1.bf16.xpose.msra.mxu0 0
      %276 = vmatprep.subr.bf16.mxu0 0
      %277 = vmatpush1.bf16.xpose.msra.mxu0 0
      %278 = vmatprep.subr.bf16.mxu0 0
      %279 = vmatpush1.bf16.xpose.msra.mxu0 0
      %280 = vmatprep.subr.bf16.mxu0 0
      %281 = vmatpush1.bf16.xpose.msra.mxu0 0
      %282 = vmatprep.subr.bf16.mxu0 0
      %283 = vmatpush1.bf16.xpose.msra.mxu0 0
      %284 = vmatprep.subr.bf16.mxu0 0
      %285 = vmatpush1.bf16.xpose.msra.mxu0 0
      %286 = vmatprep.subr.bf16.mxu0 0
      %287 = vmatpush1.bf16.xpose.msra.mxu0 0
      %288 = vmatprep.subr.bf16.mxu0 0
      %289 = vmatpush1.bf16.xpose.msra.mxu0 %v272
      %290 = vmatprep.subr.bf16.mxu0 0
      %291 = vmatpush2.bf16.xpose.msra.mxu0 0
      %292 = vmatprep.subr.bf16.mxu0 0
      %293 = vmatpush2.bf16.xpose.msra.mxu0 0
      %294 = vmatprep.subr.bf16.mxu0 0
      %295 = vmatpush2.bf16.xpose.msra.mxu0 0
      %296 = vmatprep.subr.bf16.mxu0 0
      %297 = vmatpush2.bf16.xpose.msra.mxu0 0
      %298 = vmatprep.subr.bf16.mxu0 0
      %299 = vmatpush2.bf16.xpose.msra.mxu0 0
      %300 = vmatprep.subr.bf16.mxu0 0
      %301 = vmatpush2.bf16.xpose.msra.mxu0 0
      %302 = vmatprep.subr.bf16.mxu0 0
      %303 = vmatpush2.bf16.xpose.msra.mxu0 0
      %304 = vmatprep.subr.bf16.mxu0 0
      %305 = vmatpush2.bf16.xpose.msra.mxu0 0
      %306 = vmatprep.mubr.bf16.mxu0 0
      %307 = vmatmul.mubr.bf16.gmra.mxu0 %v269
      %v308 = vpop.f32.mrf.mxu0
      %v309 = vadd.f32 0.0, %v308
      %v310 = vpop.f32.mrf.mxu0
      %v311 = vpop.f32.mrf.mxu0
      %v312 = vpop.f32.mrf.mxu0
      %313 = vdwg.mxu0
      %v314 = vsel %vm188, %v309, -inf
      %315 = vmax.xlane.f32.xlu0 %v314
      %v316 = vpop.xlane.xlu0 %315
      %v317 = vsub.f32 %v309, %v316
      %v318 = vmul.f32 %v317, 1.442695
      %v319 = vpow.pop %v318
      %v320 = vsel %vm188, %v319, 0.0
      %321 = vadd.xlane.f32.xlu0 %v320
      %v322 = vpop.xlane.xlu0 %321
      %v323 = vrcp.pop %v322
      %v324 = vmul.f32 %v319, %v323
      %v325 = vpack.c.bf16 %v324, %v324
      %326 = vrot.lane.b32.xlu0 %v265, 56
      %v327 = vpop.permute.xlu0 %326
      %v329 = vsel %vm203, %v325, 0
      %v332 = vand.u32 %v327, %v210
      %334 = vmatprep.subr.bf16.mxu0 0
      %335 = vmatpush1.bf16.msra.mxu0 0
      %336 = vmatprep.subr.bf16.mxu0 0
      %337 = vmatpush1.bf16.msra.mxu0 0
      %338 = vmatprep.subr.bf16.mxu0 0
      %339 = vmatpush1.bf16.msra.mxu0 0
      %340 = vmatprep.subr.bf16.mxu0 0
      %341 = vmatpush1.bf16.msra.mxu0 0
      %342 = vmatprep.subr.bf16.mxu0 0
      %343 = vmatpush1.bf16.msra.mxu0 0
      %344 = vmatprep.subr.bf16.mxu0 0
      %345 = vmatpush1.bf16.msra.mxu0 0
      %346 = vmatprep.subr.bf16.mxu0 0
      %347 = vmatpush1.bf16.msra.mxu0 0
      %348 = vmatprep.subr.bf16.mxu0 0
      %349 = vmatpush1.bf16.msra.mxu0 %v332
      %350 = vmatprep.subr.bf16.mxu0 0
      %351 = vmatpush2.bf16.msra.mxu0 0
      %352 = vmatprep.subr.bf16.mxu0 0
      %353 = vmatpush2.bf16.msra.mxu0 0
      %354 = vmatprep.subr.bf16.mxu0 0
      %355 = vmatpush2.bf16.msra.mxu0 0
      %356 = vmatprep.subr.bf16.mxu0 0
      %357 = vmatpush2.bf16.msra.mxu0 0
      %358 = vmatprep.subr.bf16.mxu0 0
      %359 = vmatpush2.bf16.msra.mxu0 0
      %360 = vmatprep.subr.bf16.mxu0 0
      %361 = vmatpush2.bf16.msra.mxu0 0
      %362 = vmatprep.subr.bf16.mxu0 0
      %363 = vmatpush2.bf16.msra.mxu0 0
      %364 = vmatprep.subr.bf16.mxu0 0
      %365 = vmatpush2.bf16.msra.mxu0 0
      %366 = vmatprep.mubr.bf16.mxu0 0
      %367 = vmatmul.mubr.bf16.gmra.mxu0 %v329
      %v368 = vpop.f32.mrf.mxu0
      %v369 = vadd.f32 0.0, %v368
      %v370 = vpop.f32.mrf.mxu0
      %v371 = vpop.f32.mrf.mxu0
      %v372 = vpop.f32.mrf.mxu0
      %373 = vdwg.mxu0
      %375 = vrot.lane.b32.xlu0 %v369, 8
      %v376 = vpop.permute.xlu0 %375
      %vm378 = vcmask 127040
      %379 = vst.msk [vmem:[#allocation2] sm:$0x1f] %vm378, %v376
      %v380 = vld [vmem:[%s124] sm:$0x7]
      %v381 = vmul.bf16 %v380, 1052065461
      %v383 = vunpack.c.l.b16 %v381
      %v384 = vpack.c.b16 %v383, %v383
      %385 = vrot.lane.b32.xlu0 %v384, 112
      %v386 = vpop.permute.xlu0 %385
      %v388 = vunpack.c.l.b16 %v380
      %v389 = vpack.c.b16 %v388, %v388
      %390 = vrot.lane.b32.xlu0 %v389, 80
      %v391 = vpop.permute.xlu0 %390
      %v393 = vsel %vm141, %v386, 0
      %v396 = vsel %vm141, %v391, 0
      %398 = vmatprep.subr.bf16.mxu0 0
      %399 = vmatpush1.bf16.xpose.msra.mxu0 0
      %400 = vmatprep.subr.bf16.mxu0 0
      %401 = vmatpush1.bf16.xpose.msra.mxu0 0
      %402 = vmatprep.subr.bf16.mxu0 0
      %403 = vmatpush1.bf16.xpose.msra.mxu0 0
      %404 = vmatprep.subr.bf16.mxu0 0
      %405 = vmatpush1.bf16.xpose.msra.mxu0 0
      %406 = vmatprep.subr.bf16.mxu0 0
      %407 = vmatpush1.bf16.xpose.msra.mxu0 0
      %408 = vmatprep.subr.bf16.mxu0 0
      %409 = vmatpush1.bf16.xpose.msra.mxu0 0
      %410 = vmatprep.subr.bf16.mxu0 0
      %411 = vmatpush1.bf16.xpose.msra.mxu0 0
      %412 = vmatprep.subr.bf16.mxu0 0
      %413 = vmatpush1.bf16.xpose.msra.mxu0 %v396
      %414 = vmatprep.subr.bf16.mxu0 0
      %415 = vmatpush2.bf16.xpose.msra.mxu0 0
      %416 = vmatprep.subr.bf16.mxu0 0
      %417 = vmatpush2.bf16.xpose.msra.mxu0 0
      %418 = vmatprep.subr.bf16.mxu0 0
      %419 = vmatpush2.bf16.xpose.msra.mxu0 0
      %420 = vmatprep.subr.bf16.mxu0 0
      %421 = vmatpush2.bf16.xpose.msra.mxu0 0
      %422 = vmatprep.subr.bf16.mxu0 0
      %423 = vmatpush2.bf16.xpose.msra.mxu0 0
      %424 = vmatprep.subr.bf16.mxu0 0
      %425 = vmatpush2.bf16.xpose.msra.mxu0 0
      %426 = vmatprep.subr.bf16.mxu0 0
      %427 = vmatpush2.bf16.xpose.msra.mxu0 0
      %428 = vmatprep.subr.bf16.mxu0 0
      %429 = vmatpush2.bf16.xpose.msra.mxu0 0
      %430 = vmatprep.mubr.bf16.mxu0 0
      %431 = vmatmul.mubr.bf16.gmra.mxu0 %v393
      %v432 = vpop.f32.mrf.mxu0
      %v433 = vadd.f32 0.0, %v432
      %v434 = vpop.f32.mrf.mxu0
      %v435 = vpop.f32.mrf.mxu0
      %v436 = vpop.f32.mrf.mxu0
      %437 = vdwg.mxu0
      %v438 = vsel %vm188, %v433, -inf
      %439 = vmax.xlane.f32.xlu0 %v438
      %v440 = vpop.xlane.xlu0 %439
      %v441 = vsub.f32 %v433, %v440
      %v442 = vmul.f32 %v441, 1.442695
      %v443 = vpow.pop %v442
      %v444 = vsel %vm188, %v443, 0.0
      %445 = vadd.xlane.f32.xlu0 %v444
      %v446 = vpop.xlane.xlu0 %445
      %v447 = vrcp.pop %v446
      %v448 = vmul.f32 %v443, %v447
      %v449 = vpack.c.bf16 %v448, %v448
      %450 = vrot.lane.b32.xlu0 %v389, 48
      %v451 = vpop.permute.xlu0 %450
      %v453 = vsel %vm203, %v449, 0
      %v456 = vand.u32 %v451, %v210
      %458 = vmatprep.subr.bf16.mxu0 0
      %459 = vmatpush1.bf16.msra.mxu0 0
      %460 = vmatprep.subr.bf16.mxu0 0
      %461 = vmatpush1.bf16.msra.mxu0 0
      %462 = vmatprep.subr.bf16.mxu0 0
      %463 = vmatpush1.bf16.msra.mxu0 0
      %464 = vmatprep.subr.bf16.mxu0 0
      %465 = vmatpush1.bf16.msra.mxu0 0
      %466 = vmatprep.subr.bf16.mxu0 0
      %467 = vmatpush1.bf16.msra.mxu0 0
      %468 = vmatprep.subr.bf16.mxu0 0
      %469 = vmatpush1.bf16.msra.mxu0 0
      %470 = vmatprep.subr.bf16.mxu0 0
      %471 = vmatpush1.bf16.msra.mxu0 0
      %472 = vmatprep.subr.bf16.mxu0 0
      %473 = vmatpush1.bf16.msra.mxu0 %v456
      %474 = vmatprep.subr.bf16.mxu0 0
      %475 = vmatpush2.bf16.msra.mxu0 0
      %476 = vmatprep.subr.bf16.mxu0 0
      %477 = vmatpush2.bf16.msra.mxu0 0
      %478 = vmatprep.subr.bf16.mxu0 0
      %479 = vmatpush2.bf16.msra.mxu0 0
      %480 = vmatprep.subr.bf16.mxu0 0
      %481 = vmatpush2.bf16.msra.mxu0 0
      %482 = vmatprep.subr.bf16.mxu0 0
      %483 = vmatpush2.bf16.msra.mxu0 0
      %484 = vmatprep.subr.bf16.mxu0 0
      %485 = vmatpush2.bf16.msra.mxu0 0
      %486 = vmatprep.subr.bf16.mxu0 0
      %487 = vmatpush2.bf16.msra.mxu0 0
      %488 = vmatprep.subr.bf16.mxu0 0
      %489 = vmatpush2.bf16.msra.mxu0 0
      %490 = vmatprep.mubr.bf16.mxu0 0
      %491 = vmatmul.mubr.bf16.gmra.mxu0 %v453
      %v492 = vpop.f32.mrf.mxu0
      %v493 = vadd.f32 0.0, %v492
      %v494 = vpop.f32.mrf.mxu0
      %v495 = vpop.f32.mrf.mxu0
      %v496 = vpop.f32.mrf.mxu0
      %497 = vdwg.mxu0
      %499 = vrot.lane.b32.xlu0 %v493, 16
      %v500 = vpop.permute.xlu0 %499
      %vm502 = vcmask 192640
      %503 = vst.msk [vmem:[#allocation2] sm:$0x1f] %vm502, %v500
      %v504 = vld [vmem:[%s124] sm:$0x7]
      %v505 = vmul.bf16 %v504, 1052065461
      %v507 = vunpack.c.l.b16 %v505
      %v508 = vpack.c.b16 %v507, %v507
      %509 = vrot.lane.b32.xlu0 %v508, 104
      %v510 = vpop.permute.xlu0 %509
      %v512 = vunpack.c.l.b16 %v504
      %v513 = vpack.c.b16 %v512, %v512
      %514 = vrot.lane.b32.xlu0 %v513, 72
      %v515 = vpop.permute.xlu0 %514
      %v517 = vsel %vm141, %v510, 0
      %v520 = vsel %vm141, %v515, 0
      %522 = vmatprep.subr.bf16.mxu0 0
      %523 = vmatpush1.bf16.xpose.msra.mxu0 0
      %524 = vmatprep.subr.bf16.mxu0 0
      %525 = vmatpush1.bf16.xpose.msra.mxu0 0
      %526 = vmatprep.subr.bf16.mxu0 0
      %527 = vmatpush1.bf16.xpose.msra.mxu0 0
      %528 = vmatprep.subr.bf16.mxu0 0
      %529 = vmatpush1.bf16.xpose.msra.mxu0 0
      %530 = vmatprep.subr.bf16.mxu0 0
      %531 = vmatpush1.bf16.xpose.msra.mxu0 0
      %532 = vmatprep.subr.bf16.mxu0 0
      %533 = vmatpush1.bf16.xpose.msra.mxu0 0
      %534 = vmatprep.subr.bf16.mxu0 0
      %535 = vmatpush1.bf16.xpose.msra.mxu0 0
      %536 = vmatprep.subr.bf16.mxu0 0
      %537 = vmatpush1.bf16.xpose.msra.mxu0 %v520
      %538 = vmatprep.subr.bf16.mxu0 0
      %539 = vmatpush2.bf16.xpose.msra.mxu0 0
      %540 = vmatprep.subr.bf16.mxu0 0
      %541 = vmatpush2.bf16.xpose.msra.mxu0 0
      %542 = vmatprep.subr.bf16.mxu0 0
      %543 = vmatpush2.bf16.xpose.msra.mxu0 0
      %544 = vmatprep.subr.bf16.mxu0 0
      %545 = vmatpush2.bf16.xpose.msra.mxu0 0
      %546 = vmatprep.subr.bf16.mxu0 0
      %547 = vmatpush2.bf16.xpose.msra.mxu0 0
      %548 = vmatprep.subr.bf16.mxu0 0
      %549 = vmatpush2.bf16.xpose.msra.mxu0 0
      %550 = vmatprep.subr.bf16.mxu0 0
      %551 = vmatpush2.bf16.xpose.msra.mxu0 0
      %552 = vmatprep.subr.bf16.mxu0 0
      %553 = vmatpush2.bf16.xpose.msra.mxu0 0
      %554 = vmatprep.mubr.bf16.mxu0 0
      %555 = vmatmul.mubr.bf16.gmra.mxu0 %v517
      %v556 = vpop.f32.mrf.mxu0
      %v557 = vadd.f32 0.0, %v556
      %v558 = vpop.f32.mrf.mxu0
      %v559 = vpop.f32.mrf.mxu0
      %v560 = vpop.f32.mrf.mxu0
      %561 = vdwg.mxu0
      %v562 = vsel %vm188, %v557, -inf
      %563 = vmax.xlane.f32.xlu0 %v562
      %v564 = vpop.xlane.xlu0 %563
      %v565 = vsub.f32 %v557, %v564
      %v566 = vmul.f32 %v565, 1.442695
      %v567 = vpow.pop %v566
      %v568 = vsel %vm188, %v567, 0.0
      %569 = vadd.xlane.f32.xlu0 %v568
      %v570 = vpop.xlane.xlu0 %569
      %v571 = vrcp.pop %v570
      %v572 = vmul.f32 %v567, %v571
      %v573 = vpack.c.bf16 %v572, %v572
      %574 = vrot.lane.b32.xlu0 %v513, 40
      %v575 = vpop.permute.xlu0 %574
      %v577 = vsel %vm203, %v573, 0
      %v580 = vand.u32 %v575, %v210
      %582 = vmatprep.subr.bf16.mxu0 0
      %583 = vmatpush1.bf16.msra.mxu0 0
      %584 = vmatprep.subr.bf16.mxu0 0
      %585 = vmatpush1.bf16.msra.mxu0 0
      %586 = vmatprep.subr.bf16.mxu0 0
      %587 = vmatpush1.bf16.msra.mxu0 0
      %588 = vmatprep.subr.bf16.mxu0 0
      %589 = vmatpush1.bf16.msra.mxu0 0
      %590 = vmatprep.subr.bf16.mxu0 0
      %591 = vmatpush1.bf16.msra.mxu0 0
      %592 = vmatprep.subr.bf16.mxu0 0
      %593 = vmatpush1.bf16.msra.mxu0 0
      %594 = vmatprep.subr.bf16.mxu0 0
      %595 = vmatpush1.bf16.msra.mxu0 0
      %596 = vmatprep.subr.bf16.mxu0 0
      %597 = vmatpush1.bf16.msra.mxu0 %v580
      %598 = vmatprep.subr.bf16.mxu0 0
      %599 = vmatpush2.bf16.msra.mxu0 0
      %600 = vmatprep.subr.bf16.mxu0 0
      %601 = vmatpush2.bf16.msra.mxu0 0
      %602 = vmatprep.subr.bf16.mxu0 0
      %603 = vmatpush2.bf16.msra.mxu0 0
      %604 = vmatprep.subr.bf16.mxu0 0
      %605 = vmatpush2.bf16.msra.mxu0 0
      %606 = vmatprep.subr.bf16.mxu0 0
      %607 = vmatpush2.bf16.msra.mxu0 0
      %608 = vmatprep.subr.bf16.mxu0 0
      %609 = vmatpush2.bf16.msra.mxu0 0
      %610 = vmatprep.subr.bf16.mxu0 0
      %611 = vmatpush2.bf16.msra.mxu0 0
      %612 = vmatprep.subr.bf16.mxu0 0
      %613 = vmatpush2.bf16.msra.mxu0 0
      %614 = vmatprep.mubr.bf16.mxu0 0
      %615 = vmatmul.mubr.bf16.gmra.mxu0 %v577
      %v616 = vpop.f32.mrf.mxu0
      %v617 = vadd.f32 0.0, %v616
      %v618 = vpop.f32.mrf.mxu0
      %v619 = vpop.f32.mrf.mxu0
      %v620 = vpop.f32.mrf.mxu0
      %621 = vdwg.mxu0
      %623 = vrot.lane.b32.xlu0 %v617, 24
      %v624 = vpop.permute.xlu0 %623
      %vm626 = vcmask 258240
      %627 = vst.msk [vmem:[#allocation2] sm:$0x1f] %vm626, %v624
      %v628 = vld [vmem:[#allocation2] sm:$0x1f]
      %v629 = vpack.c.bf16 %v628, %v628
      %vm630 = vcmask 256000
      %vm631 = vsmask.f32 2304
      %vm632 = vmand %vm630, %vm631
      %v633 = vld [vmem:[%s131] sm:$0x7]
      %v634 = vsel %vm632, %v629, %v633
      %635 = vst [vmem:[%s131] sm:$0x7] %v634
      %p636 = scmp.lt.s32.totalorder %s16, 1
      %s637 = scalar_select %p636, %s16, 1
      %p638 = scmp.lt.s32.totalorder %s17, 0
      %s639 = scalar_select %p638, %s17, 0
      %s640 = sadd.s32 %s639, %s637
      %s641 = smul.addr %s640, 4
      %s642 = scalar_lea.vmem %s1, %s641
      // Predicated region
      $region25: #{albef_forward.61} parent=23 // pred_check
        %p643 = pneg %p70
      $region26: #{albef_forward.61} parent=23 // pred_check_branch
        %645 = sbr.rel (%p643) target = $region28
      $region27: #{albef_forward.61} parent=23 // pred_region
        _
      $region28: #{albef_forward.61} parent=23 // pred_fallthru
        _
    $region24: #{albef_forward.61} parent=5 // pred_fallthru
      _
    %p646 = scmp.le.s32.totalorder 2, %s7
    // Predicated region
    $region29: #{albef_forward.61} parent=5 // pred_check
      %p647 = pneg %p646
    $region30: #{albef_forward.61} parent=5 // pred_check_branch
      %649 = sbr.rel (%p647) target = $region32
    $region31: #{albef_forward.61} parent=5 // pred_region
      %s650 = ssub.s32 %s7, 2
      // Predicated region
      $region33: #{albef_forward.61} parent=31 // pred_check
        %p651 = pneg %p76
      $region34: #{albef_forward.61} parent=31 // pred_check_branch
        %653 = sbr.rel (%p651) target = $region36
      $region35: #{albef_forward.61} parent=31 // pred_region
        %p654 = scmp.lt.s32.totalorder %s18, 1
        %s655 = scalar_select %p654, %s18, 1
        %p656 = scmp.lt.s32.totalorder %s19, 0
        %s657 = scalar_select %p656, %s19, 0
        %s658 = sadd.s32 %s657, %s655
        %s659 = smul.addr %s658, 4
        %s660 = scalar_lea.vmem %s1, %s659
      $region36: #{albef_forward.61} parent=31 // pred_fallthru
        _
    $region32: #{albef_forward.61} parent=5 // pred_fallthru
      _
  $region6: #{albef_forward.61} parent=0 // loop_footer
    %s11 = sadd.s32 1, %s7
  $region7: #{albef_forward.61} parent=0 // loop_footer_branch
    %6 = sbr.rel target = $region3
  $region8: #{albef_forward.61} parent=0 // loop_exit
    _

// kernel: albef_forward.94
$region0: #{albef_forward.94}
  #allocation0 [shape = 'u32[]', space=smem, size = 0x4, offset = 0x4, fixed_abs, tag = 'smem constant byte address 0x4 - core index']
  #allocation1 [shape = 'u32[144,128]{1,0:T(1,128)}', space=vmem, size = 0x12000, scoped, tag = 'internal scratch']
  #allocation2 [shape = 'f32[8,32]{1,0:T(8,128)}', space=vmem, size = 0x1000, scoped, tag = 'scratch operand']
  %s0 = inlined_call_operand.vmem [shape: bf16[2,8,32], index: 0, kind: input, shape index: {}]
  %s1 = inlined_call_operand.vmem [shape: bf16[2,5,64], index: 1, kind: input, shape index: {}]
  %s2 = inlined_call_operand.vmem [shape: bf16[2,8,32], index: 2, kind: output, shape index: {}]
  %s3 = sld [smem:[#allocation0]]
  $region41: #{albef_forward.94} parent=0
    _
  %s5 = ssub.s32 1, %s3
  %s6 = scalar_select 0, %s5, %s3
  loop: start=0, step=1, limit=4
  $region2: #{albef_forward.94} parent=0 // loop_pre_header
    _
  $region3: #{albef_forward.94} parent=0 // loop_header
    %s8 = sphi 0, %s12
    %p9 = scmp.ge.s32.totalorder %s8, 4
    %s15 = sphi 0, %s27
    %s16 = sphi 0, %s23
    %s17 = sphi 0, %s15
    %s18 = sphi 0, %s16
    %s19 = sphi 0, %s17
    %s20 = sphi 0, %s18
    %s30 = sphi 0, %s32
    %s33 = sphi 0, %s30
    %s34 = sphi 0, %s33
    %s50 = sphi 0, %s34
    %s56 = sphi 0, %s58
    %s59 = sphi 0, %s56
    %s60 = sphi 0, %s59
    %s76 = sphi 0, %s60
    %s84 = sphi 0, %s86
    %s87 = sphi 0, %s84
    %s88 = sphi 0, %s87
    %s104 = sphi 0, %s88
  $region4: #{albef_forward.94} parent=0 // loop_header_branch
    %11 = sbr.rel (%p9) target = $region8
  $region5: #{albef_forward.94} parent=0 // loop_body
    %s13 = ssub.s32 %s8, 1
    %s14 = ssub.s32 %s8, 2
    %s21 = sadd.s32 1, %s16
    %p22 = scmp.ge.s32.totalorder %s21, 1
    %s23 = scalar_select %p22, 0, %s21
    %s24 = sadd.s32 1, %s15
    %s25 = scalar_select %p22, %s24, %s15
    %p26 = scmp.ge.s32.totalorder %s25, 2
    %s27 = scalar_select %p26, 0, %s25
    %s28 = ssub.s32 %s15, %s27
    %p29 = scmp.eq.s32.totalorder %s28, 0
    %s31 = sadd.s32 %s30, 1
    %s32 = scalar_select %p29, %s30, %s31
    %p35 = pneg %p29
    %p36 = scmp.eq.s32.totalorder %s8, 1
    %p37 = por %p35, %p36
    %p38 = scmp.ne.s32.totalorder %s30, %s33
    %p39 = scmp.eq.s32.totalorder %s8, 0
    %p40 = por %p38, %p39
    %p41 = scmp.ne.s32.totalorder %s30, %s33
    %p42 = scmp.eq.s32.totalorder %s13, 1
    %p43 = por %p41, %p42
    %p44 = scmp.ne.s32.totalorder %s33, %s34
    %p45 = scmp.eq.s32.totalorder %s13, 0
    %p46 = por %p44, %p45
    %p47 = scmp.ne.s32.totalorder %s33, %s34
    %p48 = scmp.eq.s32.totalorder %s14, 1
    %p49 = por %p47, %p48
    %p51 = scmp.ne.s32.totalorder %s34, %s50
    %p52 = scmp.eq.s32.totalorder %s14, 0
    %p53 = por %p51, %p52
    %s54 = ssub.s32 %s15, %s27
    %p55 = scmp.eq.s32.totalorder %s54, 0
    %s57 = sadd.s32 %s56, 1
    %s58 = scalar_select %p55, %s56, %s57
    %p61 = pneg %p55
    %p62 = scmp.eq.s32.totalorder %s8, 1
    %p63 = por %p61, %p62
    %p64 = scmp.ne.s32.totalorder %s56, %s59
    %p65 = scmp.eq.s32.totalorder %s8, 0
    %p66 = por %p64, %p65
    %p67 = scmp.ne.s32.totalorder %s56, %s59
    %p68 = scmp.eq.s32.totalorder %s13, 1
    %p69 = por %p67, %p68
    %p70 = scmp.ne.s32.totalorder %s59, %s60
    %p71 = scmp.eq.s32.totalorder %s13, 0
    %p72 = por %p70, %p71
    %p73 = scmp.ne.s32.totalorder %s59, %s60
    %p74 = scmp.eq.s32.totalorder %s14, 1
    %p75 = por %p73, %p74
    %p77 = scmp.ne.s32.totalorder %s60, %s76
    %p78 = scmp.eq.s32.totalorder %s14, 0
    %p79 = por %p77, %p78
    %s80 = ssub.s32 %s15, %s27
    %s81 = ssub.s32 %s16, %s23
    %s82 = sor.u32 %s80, %s81
    %p83 = scmp.eq.s32.totalorder %s82, 0
    %s85 = sadd.s32 %s84, 1
    %s86 = scalar_select %p83, %s84, %s85
    %p89 = pneg %p83
    %p90 = scmp.eq.s32.totalorder %s8, 1
    %p91 = por %p89, %p90
    %p92 = scmp.ne.s32.totalorder %s84, %s87
    %p93 = scmp.eq.s32.totalorder %s8, 0
    %p94 = por %p92, %p93
    %p95 = scmp.ne.s32.totalorder %s84, %s87
    %p96 = scmp.eq.s32.totalorder %s13, 1
    %p97 = por %p95, %p96
    %p98 = scmp.ne.s32.totalorder %s87, %s88
    %p99 = scmp.eq.s32.totalorder %s13, 0
    %p100 = por %p98, %p99
    %p101 = scmp.ne.s32.totalorder %s87, %s88
    %p102 = scmp.eq.s32.totalorder %s14, 1
    %p103 = por %p101, %p102
    %p105 = scmp.ne.s32.totalorder %s88, %s104
    %p106 = scmp.eq.s32.totalorder %s14, 0
    %p107 = por %p105, %p106
    %p108 = scmp.le.s32.totalorder 1, %s8
    %p109 = scmp.lt.s32.totalorder %s8, 3
    %p110 = pnand %p108, %p109
    %p111 = pneg %p110
    // Predicated region
    $region9: #{albef_forward.94} parent=5 // pred_check
      _
    $region10: #{albef_forward.94} parent=5 // pred_check_branch
      %113 = sbr.rel (%p110) target = $region12
    $region11: #{albef_forward.94} parent=5 // pred_region
      %s114 = ssub.s32 %s8, 1
    $region12: #{albef_forward.94} parent=5 // pred_fallthru
      _
    %p115 = scmp.lt.s32.totalorder %s8, 2
    // Predicated region
    $region13: #{albef_forward.94} parent=5 // pred_check
      %p116 = pneg %p115
    $region14: #{albef_forward.94} parent=5 // pred_check_branch
      %118 = sbr.rel (%p116) target = $region16
    $region15: #{albef_forward.94} parent=5 // pred_region
      // Predicated region
      $region17: #{albef_forward.94} parent=15 // pred_check
        %p119 = pneg %p40
      $region18: #{albef_forward.94} parent=15 // pred_check_branch
        %121 = sbr.rel (%p119) target = $region20
      $region19: #{albef_forward.94} parent=15 // pred_region
        %p122 = scmp.lt.s32.totalorder %s15, 1
        %s123 = scalar_select %p122, %s15, 1
        %s124 = smul.addr %s123, 4
        %s125 = scalar_lea.vmem %s0, %s124
      $region20: #{albef_forward.94} parent=15 // pred_fallthru
        _
      // Predicated region
      $region21: #{albef_forward.94} parent=15 // pred_check
        %p126 = pneg %p66
      $region22: #{albef_forward.94} parent=15 // pred_check_branch
        %128 = sbr.rel (%p126) target = $region24
      $region23: #{albef_forward.94} parent=15 // pred_region
        %p129 = scmp.lt.s32.totalorder %s15, 1
        %s130 = scalar_select %p129, %s15, 1
        %s131 = smul.addr %s130, 4
        %s132 = scalar_lea.vmem %s1, %s131
      $region24: #{albef_forward.94} parent=15 // pred_fallthru
        _
    $region16: #{albef_forward.94} parent=5 // pred_fallthru
      _
    %p133 = scmp.le.s32.totalorder 1, %s8
    %p134 = scmp.lt.s32.totalorder %s8, 3
    %p135 = pnand %p133, %p134
    %p136 = pneg %p135
    // Predicated region
    $region25: #{albef_forward.94} parent=5 // pred_check
      _
    $region26: #{albef_forward.94} parent=5 // pred_check_branch
      %138 = sbr.rel (%p135) target = $region28
    $region27: #{albef_forward.94} parent=5 // pred_region
      %s139 = ssub.s32 %s8, 1
      %p140 = scmp.lt.s32.totalorder %s17, 1
      %s141 = scalar_select %p140, %s17, 1
      %s142 = smul.addr %s141, 4
      %s143 = scalar_lea.vmem %s0, %s142
      %p144 = pneg %p46
      %p145 = pneg %p43
      %p146 = scmp.lt.s32.totalorder %s17, 1
      %s147 = scalar_select %p146, %s17, 1
      %s148 = smul.addr %s147, 4
      %s149 = scalar_lea.vmem %s1, %s148
      %p150 = pneg %p72
      %p151 = pneg %p69
      %p152 = pneg %p100
      %p153 = pneg %p97
      %p154 = scmp.lt.s32.totalorder %s17, 1
      %s155 = scalar_select %p154, %s17, 1
      %p156 = scmp.lt.s32.totalorder %s18, 0
      %s157 = scalar_select %p156, %s18, 0
      %s158 = sadd.s32 %s157, %s155
      %s159 = smul.addr %s158, 4
      %s160 = scalar_lea.vmem %s2, %s159
      %p161 = scmp.lt.s32.totalorder %s17, 1
      %s162 = scalar_select %p161, %s17, 1
      %s163 = smul.addr %s162, 4
      %s164 = scalar_lea.vmem %s0, %s163
      %p165 = scmp.lt.s32.totalorder %s17, 1
      %s166 = scalar_select %p165, %s17, 1
      %s167 = smul.addr %s166, 4
      %s168 = scalar_lea.vmem %s1, %s167
      %p169 = scmp.lt.s32.totalorder %s17, 1
      %s170 = scalar_select %p169, %s17, 1
      %p171 = scmp.lt.s32.totalorder %s18, 0
      %s172 = scalar_select %p171, %s18, 0
      %s173 = sadd.s32 %s172, %s170
      %s174 = smul.addr %s173, 4
      %s175 = scalar_lea.vmem %s2, %s174
      %v178 = vld [vmem:[%s164] sm:$0xf]
      %v179 = vmul.bf16 %v178, 1052065461
      %v180 = vld [vmem:[%s168] sm:$0x7]
      %vm181 = vcmask 64512
      %v183 = vsel %vm181, %v179, 0
      %v186 = vsel %vm181, %v180, 0
      %188 = vmatprep.subr.bf16.mxu0 0
      %189 = vmatpush1.bf16.xpose.msra.mxu0 0
      %190 = vmatprep.subr.bf16.mxu0 0
      %191 = vmatpush1.bf16.xpose.msra.mxu0 0
      %192 = vmatprep.subr.bf16.mxu0 0
      %193 = vmatpush1.bf16.xpose.msra.mxu0 0
      %194 = vmatprep.subr.bf16.mxu0 0
      %195 = vmatpush1.bf16.xpose.msra.mxu0 0
      %196 = vmatprep.subr.bf16.mxu0 0
      %197 = vmatpush1.bf16.xpose.msra.mxu0 0
      %198 = vmatprep.subr.bf16.mxu0 0
      %199 = vmatpush1.bf16.xpose.msra.mxu0 0
      %200 = vmatprep.subr.bf16.mxu0 0
      %201 = vmatpush1.bf16.xpose.msra.mxu0 0
      %202 = vmatprep.subr.bf16.mxu0 0
      %203 = vmatpush1.bf16.xpose.msra.mxu0 %v186
      %204 = vmatprep.subr.bf16.mxu0 0
      %205 = vmatpush2.bf16.xpose.msra.mxu0 0
      %206 = vmatprep.subr.bf16.mxu0 0
      %207 = vmatpush2.bf16.xpose.msra.mxu0 0
      %208 = vmatprep.subr.bf16.mxu0 0
      %209 = vmatpush2.bf16.xpose.msra.mxu0 0
      %210 = vmatprep.subr.bf16.mxu0 0
      %211 = vmatpush2.bf16.xpose.msra.mxu0 0
      %212 = vmatprep.subr.bf16.mxu0 0
      %213 = vmatpush2.bf16.xpose.msra.mxu0 0
      %214 = vmatprep.subr.bf16.mxu0 0
      %215 = vmatpush2.bf16.xpose.msra.mxu0 0
      %216 = vmatprep.subr.bf16.mxu0 0
      %217 = vmatpush2.bf16.xpose.msra.mxu0 0
      %218 = vmatprep.subr.bf16.mxu0 0
      %219 = vmatpush2.bf16.xpose.msra.mxu0 0
      %220 = vmatprep.mubr.bf16.mxu0 0
      %221 = vmatmul.mubr.bf16.gmra.mxu0 %v183
      %v222 = vpop.f32.mrf.mxu0
      %v223 = vadd.f32 0.0, %v222
      %v224 = vpop.f32.mrf.mxu0
      %v225 = vpop.f32.mrf.mxu0
      %v226 = vpop.f32.mrf.mxu0
      %227 = vdwg.mxu0
      %vm228 = vcmask 39936
      %v229 = vsel %vm228, %v223, -inf
      %230 = vmax.xlane.f32.xlu0 %v229
      %v231 = vpop.xlane.xlu0 %230
      %v232 = vsub.f32 %v223, %v231
      %v233 = vmul.f32 %v232, 1.442695
      %v234 = vpow.pop %v233
      %v235 = vsel %vm228, %v234, 0.0
      %236 = vadd.xlane.f32.xlu0 %v235
      %v237 = vpop.xlane.xlu0 %236
      %v238 = vrcp.pop %v237
      %v239 = vmul.f32 %v234, %v238
      %v240 = vpack.c.bf16 %v239, %v239
      %v242 = vunpack.c.l.b16 %v180
      %v243 = vpack.c.b16 %v242, %v242
      %244 = vrot.lane.b32.xlu0 %v243, 96
      %v245 = vpop.permute.xlu0 %244
      %v247 = vsel %vm228, %v240, 0
      %vm249 = vcmask 1041408
      %vm250 = vcmask 1042432
      %v251 = vsel %vm249, 4294967295, 65535
      %v252 = vsel %vm250, %v251, 0
      %v254 = vand.u32 %v245, %v252
      %256 = vmatprep.subr.bf16.mxu0 0
      %257 = vmatpush1.bf16.msra.mxu0 0
      %258 = vmatprep.subr.bf16.mxu0 0
      %259 = vmatpush1.bf16.msra.mxu0 0
      %260 = vmatprep.subr.bf16.mxu0 0
      %261 = vmatpush1.bf16.msra.mxu0 0
      %262 = vmatprep.subr.bf16.mxu0 0
      %263 = vmatpush1.bf16.msra.mxu0 0
      %264 = vmatprep.subr.bf16.mxu0 0
      %265 = vmatpush1.bf16.msra.mxu0 0
      %266 = vmatprep.subr.bf16.mxu0 0
      %267 = vmatpush1.bf16.msra.mxu0 0
      %268 = vmatprep.subr.bf16.mxu0 0
      %269 = vmatpush1.bf16.msra.mxu0 0
      %270 = vmatprep.subr.bf16.mxu0 0
      %271 = vmatpush1.bf16.msra.mxu0 %v254
      %272 = vmatprep.subr.bf16.mxu0 0
      %273 = vmatpush2.bf16.msra.mxu0 0
      %274 = vmatprep.subr.bf16.mxu0 0
      %275 = vmatpush2.bf16.msra.mxu0 0
      %276 = vmatprep.subr.bf16.mxu0 0
      %277 = vmatpush2.bf16.msra.mxu0 0
      %278 = vmatprep.subr.bf16.mxu0 0
      %279 = vmatpush2.bf16.msra.mxu0 0
      %280 = vmatprep.subr.bf16.mxu0 0
      %281 = vmatpush2.bf16.msra.mxu0 0
      %282 = vmatprep.subr.bf16.mxu0 0
      %283 = vmatpush2.bf16.msra.mxu0 0
      %284 = vmatprep.subr.bf16.mxu0 0
      %285 = vmatpush2.bf16.msra.mxu0 0
      %286 = vmatprep.subr.bf16.mxu0 0
      %287 = vmatpush2.bf16.msra.mxu0 0
      %288 = vmatprep.mubr.bf16.mxu0 0
      %289 = vmatmul.mubr.bf16.gmra.mxu0 %v247
      %v290 = vpop.f32.mrf.mxu0
      %v291 = vadd.f32 0.0, %v290
      %v292 = vpop.f32.mrf.mxu0
      %v293 = vpop.f32.mrf.mxu0
      %v294 = vpop.f32.mrf.mxu0
      %295 = vdwg.mxu0
      %296 = vst.msk [vmem:[#allocation2] sm:$0xff] %vm181, %v291
      %v297 = vld [vmem:[%s164] sm:$0xf]
      %v298 = vmul.bf16 %v297, 1052065461
      %v299 = vld [vmem:[%s168] sm:$0x7]
      %v301 = vunpack.c.l.b16 %v298
      %v302 = vpack.c.b16 %v301, %v301
      %303 = vrot.lane.b32.xlu0 %v302, 120
      %v304 = vpop.permute.xlu0 %303
      %v306 = vunpack.c.l.b16 %v299
      %v307 = vpack.c.b16 %v306, %v306
      %308 = vrot.lane.b32.xlu0 %v307, 120
      %v309 = vpop.permute.xlu0 %308
      %v311 = vsel %vm181, %v304, 0
      %v314 = vsel %vm181, %v309, 0
      %316 = vmatprep.subr.bf16.mxu0 0
      %317 = vmatpush1.bf16.xpose.msra.mxu0 0
      %318 = vmatprep.subr.bf16.mxu0 0
      %319 = vmatpush1.bf16.xpose.msra.mxu0 0
      %320 = vmatprep.subr.bf16.mxu0 0
      %321 = vmatpush1.bf16.xpose.msra.mxu0 0
      %322 = vmatprep.subr.bf16.mxu0 0
      %323 = vmatpush1.bf16.xpose.msra.mxu0 0
      %324 = vmatprep.subr.bf16.mxu0 0
      %325 = vmatpush1.bf16.xpose.msra.mxu0 0
      %326 = vmatprep.subr.bf16.mxu0 0
      %327 = vmatpush1.bf16.xpose.msra.mxu0 0
      %328 = vmatprep.subr.bf16.mxu0 0
      %329 = vmatpush1.bf16.xpose.msra.mxu0 0
      %330 = vmatprep.subr.bf16.mxu0 0
      %331 = vmatpush1.bf16.xpose.msra.mxu0 %v314
      %332 = vmatprep.subr.bf16.mxu0 0
      %333 = vmatpush2.bf16.xpose.msra.mxu0 0
      %334 = vmatprep.subr.bf16.mxu0 0
      %335 = vmatpush2.bf16.xpose.msra.mxu0 0
      %336 = vmatprep.subr.bf16.mxu0 0
      %337 = vmatpush2.bf16.xpose.msra.mxu0 0
      %338 = vmatprep.subr.bf16.mxu0 0
      %339 = vmatpush2.bf16.xpose.msra.mxu0 0
      %340 = vmatprep.subr.bf16.mxu0 0
      %341 = vmatpush2.bf16.xpose.msra.mxu0 0
      %342 = vmatprep.subr.bf16.mxu0 0
      %343 = vmatpush2.bf16.xpose.msra.mxu0 0
      %344 = vmatprep.subr.bf16.mxu0 0
      %345 = vmatpush2.bf16.xpose.msra.mxu0 0
      %346 = vmatprep.subr.bf16.mxu0 0
      %347 = vmatpush2.bf16.xpose.msra.mxu0 0
      %348 = vmatprep.mubr.bf16.mxu0 0
      %349 = vmatmul.mubr.bf16.gmra.mxu0 %v311
      %v350 = vpop.f32.mrf.mxu0
      %v351 = vadd.f32 0.0, %v350
      %v352 = vpop.f32.mrf.mxu0
      %v353 = vpop.f32.mrf.mxu0
      %v354 = vpop.f32.mrf.mxu0
      %355 = vdwg.mxu0
      %v356 = vsel %vm228, %v351, -inf
      %357 = vmax.xlane.f32.xlu0 %v356
      %v358 = vpop.xlane.xlu0 %357
      %v359 = vsub.f32 %v351, %v358
      %v360 = vmul.f32 %v359, 1.442695
      %v361 = vpow.pop %v360
      %v362 = vsel %vm228, %v361, 0.0
      %363 = vadd.xlane.f32.xlu0 %v362
      %v364 = vpop.xlane.xlu0 %363
      %v365 = vrcp.pop %v364
      %v366 = vmul.f32 %v361, %v365
      %v367 = vpack.c.bf16 %v366, %v366
      %368 = vrot.lane.b32.xlu0 %v307, 88
      %v369 = vpop.permute.xlu0 %368
      %v371 = vsel %vm228, %v367, 0
      %v374 = vand.u32 %v369, %v252
      %376 = vmatprep.subr.bf16.mxu0 0
      %377 = vmatpush1.bf16.msra.mxu0 0
      %378 = vmatprep.subr.bf16.mxu0 0
      %379 = vmatpush1.bf16.msra.mxu0 0
      %380 = vmatprep.subr.bf16.mxu0 0
      %381 = vmatpush1.bf16.msra.mxu0 0
      %382 = vmatprep.subr.bf16.mxu0 0
      %383 = vmatpush1.bf16.msra.mxu0 0
      %384 = vmatprep.subr.bf16.mxu0 0
      %385 = vmatpush1.bf16.msra.mxu0 0
      %386 = vmatprep.subr.bf16.mxu0 0
      %387 = vmatpush1.bf16.msra.mxu0 0
      %388 = vmatprep.subr.bf16.mxu0 0
      %389 = vmatpush1.bf16.msra.mxu0 0
      %390 = vmatprep.subr.bf16.mxu0 0
      %391 = vmatpush1.bf16.msra.mxu0 %v374
      %392 = vmatprep.subr.bf16.mxu0 0
      %393 = vmatpush2.bf16.msra.mxu0 0
      %394 = vmatprep.subr.bf16.mxu0 0
      %395 = vmatpush2.bf16.msra.mxu0 0
      %396 = vmatprep.subr.bf16.mxu0 0
      %397 = vmatpush2.bf16.msra.mxu0 0
      %398 = vmatprep.subr.bf16.mxu0 0
      %399 = vmatpush2.bf16.msra.mxu0 0
      %400 = vmatprep.subr.bf16.mxu0 0
      %401 = vmatpush2.bf16.msra.mxu0 0
      %402 = vmatprep.subr.bf16.mxu0 0
      %403 = vmatpush2.bf16.msra.mxu0 0
      %404 = vmatprep.subr.bf16.mxu0 0
      %405 = vmatpush2.bf16.msra.mxu0 0
      %406 = vmatprep.subr.bf16.mxu0 0
      %407 = vmatpush2.bf16.msra.mxu0 0
      %408 = vmatprep.mubr.bf16.mxu0 0
      %409 = vmatmul.mubr.bf16.gmra.mxu0 %v371
      %v410 = vpop.f32.mrf.mxu0
      %v411 = vadd.f32 0.0, %v410
      %v412 = vpop.f32.mrf.mxu0
      %v413 = vpop.f32.mrf.mxu0
      %v414 = vpop.f32.mrf.mxu0
      %415 = vdwg.mxu0
      %417 = vrot.lane.b32.xlu0 %v411, 8
      %v418 = vpop.permute.xlu0 %417
      %vm420 = vcmask 130112
      %421 = vst.msk [vmem:[#allocation2] sm:$0xff] %vm420, %v418
      %v422 = vld [vmem:[%s164] sm:$0xf]
      %v423 = vmul.bf16 %v422, 1052065461
      %v424 = vld [vmem:[%s168] sm:$0x7]
      %v426 = vunpack.c.l.b16 %v423
      %v427 = vpack.c.b16 %v426, %v426
      %428 = vrot.lane.b32.xlu0 %v427, 112
      %v429 = vpop.permute.xlu0 %428
      %v431 = vunpack.c.l.b16 %v424
      %v432 = vpack.c.b16 %v431, %v431
      %433 = vrot.lane.b32.xlu0 %v432, 112
      %v434 = vpop.permute.xlu0 %433
      %v436 = vsel %vm181, %v429, 0
      %v439 = vsel %vm181, %v434, 0
      %441 = vmatprep.subr.bf16.mxu0 0
      %442 = vmatpush1.bf16.xpose.msra.mxu0 0
      %443 = vmatprep.subr.bf16.mxu0 0
      %444 = vmatpush1.bf16.xpose.msra.mxu0 0
      %445 = vmatprep.subr.bf16.mxu0 0
      %446 = vmatpush1.bf16.xpose.msra.mxu0 0
      %447 = vmatprep.subr.bf16.mxu0 0
      %448 = vmatpush1.bf16.xpose.msra.mxu0 0
      %449 = vmatprep.subr.bf16.mxu0 0
      %450 = vmatpush1.bf16.xpose.msra.mxu0 0
      %451 = vmatprep.subr.bf16.mxu0 0
      %452 = vmatpush1.bf16.xpose.msra.mxu0 0
      %453 = vmatprep.subr.bf16.mxu0 0
      %454 = vmatpush1.bf16.xpose.msra.mxu0 0
      %455 = vmatprep.subr.bf16.mxu0 0
      %456 = vmatpush1.bf16.xpose.msra.mxu0 %v439
      %457 = vmatprep.subr.bf16.mxu0 0
      %458 = vmatpush2.bf16.xpose.msra.mxu0 0
      %459 = vmatprep.subr.bf16.mxu0 0
      %460 = vmatpush2.bf16.xpose.msra.mxu0 0
      %461 = vmatprep.subr.bf16.mxu0 0
      %462 = vmatpush2.bf16.xpose.msra.mxu0 0
      %463 = vmatprep.subr.bf16.mxu0 0
      %464 = vmatpush2.bf16.xpose.msra.mxu0 0
      %465 = vmatprep.subr.bf16.mxu0 0
      %466 = vmatpush2.bf16.xpose.msra.mxu0 0
      %467 = vmatprep.subr.bf16.mxu0 0
      %468 = vmatpush2.bf16.xpose.msra.mxu0 0
      %469 = vmatprep.subr.bf16.mxu0 0
      %470 = vmatpush2.bf16.xpose.msra.mxu0 0
      %471 = vmatprep.subr.bf16.mxu0 0
      %472 = vmatpush2.bf16.xpose.msra.mxu0 0
      %473 = vmatprep.mubr.bf16.mxu0 0
      %474 = vmatmul.mubr.bf16.gmra.mxu0 %v436
      %v475 = vpop.f32.mrf.mxu0
      %v476 = vadd.f32 0.0, %v475
      %v477 = vpop.f32.mrf.mxu0
      %v478 = vpop.f32.mrf.mxu0
      %v479 = vpop.f32.mrf.mxu0
      %480 = vdwg.mxu0
      %v481 = vsel %vm228, %v476, -inf
      %482 = vmax.xlane.f32.xlu0 %v481
      %v483 = vpop.xlane.xlu0 %482
      %v484 = vsub.f32 %v476, %v483
      %v485 = vmul.f32 %v484, 1.442695
      %v486 = vpow.pop %v485
      %v487 = vsel %vm228, %v486, 0.0
      %488 = vadd.xlane.f32.xlu0 %v487
      %v489 = vpop.xlane.xlu0 %488
      %v490 = vrcp.pop %v489
      %v491 = vmul.f32 %v486, %v490
      %v492 = vpack.c.bf16 %v491, %v491
      %493 = vrot.lane.b32.xlu0 %v432, 80
      %v494 = vpop.permute.xlu0 %493
      %v496 = vsel %vm228, %v492, 0
      %v499 = vand.u32 %v494, %v252
      %501 = vmatprep.subr.bf16.mxu0 0
      %502 = vmatpush1.bf16.msra.mxu0 0
      %503 = vmatprep.subr.bf16.mxu0 0
      %504 = vmatpush1.bf16.msra.mxu0 0
      %505 = vmatprep.subr.bf16.mxu0 0
      %506 = vmatpush1.bf16.msra.mxu0 0
      %507 = vmatprep.subr.bf16.mxu0 0
      %508 = vmatpush1.bf16.msra.mxu0 0
      %509 = vmatprep.subr.bf16.mxu0 0
      %510 = vmatpush1.bf16.msra.mxu0 0
      %511 = vmatprep.subr.bf16.mxu0 0
      %512 = vmatpush1.bf16.msra.mxu0 0
      %513 = vmatprep.subr.bf16.mxu0 0
      %514 = vmatpush1.bf16.msra.mxu0 0
      %515 = vmatprep.subr.bf16.mxu0 0
      %516 = vmatpush1.bf16.msra.mxu0 %v499
      %517 = vmatprep.subr.bf16.mxu0 0
      %518 = vmatpush2.bf16.msra.mxu0 0
      %519 = vmatprep.subr.bf16.mxu0 0
      %520 = vmatpush2.bf16.msra.mxu0 0
      %521 = vmatprep.subr.bf16.mxu0 0
      %522 = vmatpush2.bf16.msra.mxu0 0
      %523 = vmatprep.subr.bf16.mxu0 0
      %524 = vmatpush2.bf16.msra.mxu0 0
      %525 = vmatprep.subr.bf16.mxu0 0
      %526 = vmatpush2.bf16.msra.mxu0 0
      %527 = vmatprep.subr.bf16.mxu0 0
      %528 = vmatpush2.bf16.msra.mxu0 0
      %529 = vmatprep.subr.bf16.mxu0 0
      %530 = vmatpush2.bf16.msra.mxu0 0
      %531 = vmatprep.subr.bf16.mxu0 0
      %532 = vmatpush2.bf16.msra.mxu0 0
      %533 = vmatprep.mubr.bf16.mxu0 0
      %534 = vmatmul.mubr.bf16.gmra.mxu0 %v496
      %v535 = vpop.f32.mrf.mxu0
      %v536 = vadd.f32 0.0, %v535
      %v537 = vpop.f32.mrf.mxu0
      %v538 = vpop.f32.mrf.mxu0
      %v539 = vpop.f32.mrf.mxu0
      %540 = vdwg.mxu0
      %542 = vrot.lane.b32.xlu0 %v536, 16
      %v543 = vpop.permute.xlu0 %542
      %vm545 = vcmask 195712
      %546 = vst.msk [vmem:[#allocation2] sm:$0xff] %vm545, %v543
      %v547 = vld [vmem:[%s164] sm:$0xf]
      %v548 = vmul.bf16 %v547, 1052065461
      %v549 = vld [vmem:[%s168] sm:$0x7]
      %v551 = vunpack.c.l.b16 %v548
      %v552 = vpack.c.b16 %v551, %v551
      %553 = vrot.lane.b32.xlu0 %v552, 104
      %v554 = vpop.permute.xlu0 %553
      %v556 = vunpack.c.l.b16 %v549
      %v557 = vpack.c.b16 %v556, %v556
      %558 = vrot.lane.b32.xlu0 %v557, 104
      %v559 = vpop.permute.xlu0 %558
      %v561 = vsel %vm181, %v554, 0
      %v564 = vsel %vm181, %v559, 0
      %566 = vmatprep.subr.bf16.mxu0 0
      %567 = vmatpush1.bf16.xpose.msra.mxu0 0
      %568 = vmatprep.subr.bf16.mxu0 0
      %569 = vmatpush1.bf16.xpose.msra.mxu0 0
      %570 = vmatprep.subr.bf16.mxu0 0
      %571 = vmatpush1.bf16.xpose.msra.mxu0 0
      %572 = vmatprep.subr.bf16.mxu0 0
      %573 = vmatpush1.bf16.xpose.msra.mxu0 0
      %574 = vmatprep.subr.bf16.mxu0 0
      %575 = vmatpush1.bf16.xpose.msra.mxu0 0
      %576 = vmatprep.subr.bf16.mxu0 0
      %577 = vmatpush1.bf16.xpose.msra.mxu0 0
      %578 = vmatprep.subr.bf16.mxu0 0
      %579 = vmatpush1.bf16.xpose.msra.mxu0 0
      %580 = vmatprep.subr.bf16.mxu0 0
      %581 = vmatpush1.bf16.xpose.msra.mxu0 %v564
      %582 = vmatprep.subr.bf16.mxu0 0
      %583 = vmatpush2.bf16.xpose.msra.mxu0 0
      %584 = vmatprep.subr.bf16.mxu0 0
      %585 = vmatpush2.bf16.xpose.msra.mxu0 0
      %586 = vmatprep.subr.bf16.mxu0 0
      %587 = vmatpush2.bf16.xpose.msra.mxu0 0
      %588 = vmatprep.subr.bf16.mxu0 0
      %589 = vmatpush2.bf16.xpose.msra.mxu0 0
      %590 = vmatprep.subr.bf16.mxu0 0
      %591 = vmatpush2.bf16.xpose.msra.mxu0 0
      %592 = vmatprep.subr.bf16.mxu0 0
      %593 = vmatpush2.bf16.xpose.msra.mxu0 0
      %594 = vmatprep.subr.bf16.mxu0 0
      %595 = vmatpush2.bf16.xpose.msra.mxu0 0
      %596 = vmatprep.subr.bf16.mxu0 0
      %597 = vmatpush2.bf16.xpose.msra.mxu0 0
      %598 = vmatprep.mubr.bf16.mxu0 0
      %599 = vmatmul.mubr.bf16.gmra.mxu0 %v561
      %v600 = vpop.f32.mrf.mxu0
      %v601 = vadd.f32 0.0, %v600
      %v602 = vpop.f32.mrf.mxu0
      %v603 = vpop.f32.mrf.mxu0
      %v604 = vpop.f32.mrf.mxu0
      %605 = vdwg.mxu0
      %v606 = vsel %vm228, %v601, -inf
      %607 = vmax.xlane.f32.xlu0 %v606
      %v608 = vpop.xlane.xlu0 %607
      %v609 = vsub.f32 %v601, %v608
      %v610 = vmul.f32 %v609, 1.442695
      %v611 = vpow.pop %v610
      %v612 = vsel %vm228, %v611, 0.0
      %613 = vadd.xlane.f32.xlu0 %v612
      %v614 = vpop.xlane.xlu0 %613
      %v615 = vrcp.pop %v614
      %v616 = vmul.f32 %v611, %v615
      %v617 = vpack.c.bf16 %v616, %v616
      %618 = vrot.lane.b32.xlu0 %v557, 72
      %v619 = vpop.permute.xlu0 %618
      %v621 = vsel %vm228, %v617, 0
      %v624 = vand.u32 %v619, %v252
      %626 = vmatprep.subr.bf16.mxu0 0
      %627 = vmatpush1.bf16.msra.mxu0 0
      %628 = vmatprep.subr.bf16.mxu0 0
      %629 = vmatpush1.bf16.msra.mxu0 0
      %630 = vmatprep.subr.bf16.mxu0 0
      %631 = vmatpush1.bf16.msra.mxu0 0
      %632 = vmatprep.subr.bf16.mxu0 0
      %633 = vmatpush1.bf16.msra.mxu0 0
      %634 = vmatprep.subr.bf16.mxu0 0
      %635 = vmatpush1.bf16.msra.mxu0 0
      %636 = vmatprep.subr.bf16.mxu0 0
      %637 = vmatpush1.bf16.msra.mxu0 0
      %638 = vmatprep.subr.bf16.mxu0 0
      %639 = vmatpush1.bf16.msra.mxu0 0
      %640 = vmatprep.subr.bf16.mxu0 0
      %641 = vmatpush1.bf16.msra.mxu0 %v624
      %642 = vmatprep.subr.bf16.mxu0 0
      %643 = vmatpush2.bf16.msra.mxu0 0
      %644 = vmatprep.subr.bf16.mxu0 0
      %645 = vmatpush2.bf16.msra.mxu0 0
      %646 = vmatprep.subr.bf16.mxu0 0
      %647 = vmatpush2.bf16.msra.mxu0 0
      %648 = vmatprep.subr.bf16.mxu0 0
      %649 = vmatpush2.bf16.msra.mxu0 0
      %650 = vmatprep.subr.bf16.mxu0 0
      %651 = vmatpush2.bf16.msra.mxu0 0
      %652 = vmatprep.subr.bf16.mxu0 0
      %653 = vmatpush2.bf16.msra.mxu0 0
      %654 = vmatprep.subr.bf16.mxu0 0
      %655 = vmatpush2.bf16.msra.mxu0 0
      %656 = vmatprep.subr.bf16.mxu0 0
      %657 = vmatpush2.bf16.msra.mxu0 0
      %658 = vmatprep.mubr.bf16.mxu0 0
      %659 = vmatmul.mubr.bf16.gmra.mxu0 %v621
      %v660 = vpop.f32.mrf.mxu0
      %v661 = vadd.f32 0.0, %v660
      %v662 = vpop.f32.mrf.mxu0
      %v663 = vpop.f32.mrf.mxu0
      %v664 = vpop.f32.mrf.mxu0
      %665 = vdwg.mxu0
      %667 = vrot.lane.b32.xlu0 %v661, 24
      %v668 = vpop.permute.xlu0 %667
      %vm670 = vcmask 261312
      %671 = vst.msk [vmem:[#allocation2] sm:$0xff] %vm670, %v668
      %v672 = vld [vmem:[#allocation2] sm:$0xff]
      %v673 = vpack.c.bf16 %v672, %v672
      %vm674 = vcmask 257024
      %675 = vst.msk [vmem:[%s175] sm:$0xf] %vm674, %v673
      %p676 = scmp.lt.s32.totalorder %s17, 1
      %s677 = scalar_select %p676, %s17, 1
      %p678 = scmp.lt.s32.totalorder %s18, 0
      %s679 = scalar_select %p678, %s18, 0
      %s680 = sadd.s32 %s679, %s677
      %s681 = smul.addr %s680, 4
      %s682 = scalar_lea.vmem %s2, %s681
      // Predicated region
      $region29: #{albef_forward.94} parent=27 // pred_check
        %p683 = pneg %p97
      $region30: #{albef_forward.94} parent=27 // pred_check_branch
        %685 = sbr.rel (%p683) target = $region32
      $region31: #{albef_forward.94} parent=27 // pred_region
        _
      $region32: #{albef_forward.94} parent=27 // pred_fallthru
        _
    $region28: #{albef_forward.94} parent=5 // pred_fallthru
      _
    %p686 = scmp.le.s32.totalorder 2, %s8
    // Predicated region
    $region33: #{albef_forward.94} parent=5 // pred_check
      %p687 = pneg %p686
    $region34: #{albef_forward.94} parent=5 // pred_check_branch
      %689 = sbr.rel (%p687) target = $region36
    $region35: #{albef_forward.94} parent=5 // pred_region
      %s690 = ssub.s32 %s8, 2
      // Predicated region
      $region37: #{albef_forward.94} parent=35 // pred_check
        %p691 = pneg %p103
      $region38: #{albef_forward.94} parent=35 // pred_check_branch
        %693 = sbr.rel (%p691) target = $region40
      $region39: #{albef_forward.94} parent=35 // pred_region
        %p694 = scmp.lt.s32.totalorder %s19, 1
        %s695 = scalar_select %p694, %s19, 1
        %p696 = scmp.lt.s32.totalorder %s20, 0
        %s697 = scalar_select %p696, %s20, 0
        %s698 = sadd.s32 %s697, %s695
        %s699 = smul.addr %s698, 4
        %s700 = scalar_lea.vmem %s2, %s699
      $region40: #{albef_forward.94} parent=35 // pred_fallthru
        _
    $region36: #{albef_forward.94} parent=5 // pred_fallthru
      _
  $region6: #{albef_forward.94} parent=0 // loop_footer
    %s12 = sadd.s32 1, %s8
  $region7: #{albef_forward.94} parent=0 // loop_footer_branch
    %7 = sbr.rel target = $region3
  $region8: #{albef_forward.94} parent=0 // loop_exit
    _

// kernel: albef_forward.115
$region0: #{albef_forward.115}
  #allocation0 [shape = 'u32[]', space=smem, size = 0x4, offset = 0x4, fixed_abs, tag = 'smem constant byte address 0x4 - core index']
  #allocation1 [shape = 'u32[144,128]{1,0:T(1,128)}', space=vmem, size = 0x12000, scoped, tag = 'internal scratch']
  #allocation2 [shape = 'f32[16,1]{1,0:T(8,128)}', space=vmem, size = 0x2000, scoped, tag = 'scratch operand']
  #allocation3 [shape = 'f32[16,1]{1,0:T(8,128)}', space=vmem, size = 0x2000, scoped, tag = 'scratch operand']
  #allocation4 [shape = 'f32[16,1]{1,0:T(8,128)}', space=vmem, size = 0x2000, scoped, tag = 'scratch operand']
  %s0 = inlined_call_operand.vmem [shape: bf16[16,32], index: 0, kind: input, shape index: {}]
  %s1 = inlined_call_operand.vmem [shape: bf16[32,512], index: 1, kind: input, shape index: {}]
  %s2 = inlined_call_operand.vmem [shape: f32[1,512], index: 2, kind: input, shape index: {}]
  %s3 = inlined_call_operand.vmem [shape: s32[16,1], index: 3, kind: input, shape index: {}]
  %s4 = inlined_call_operand.vmem [shape: f32[16,1], index: 4, kind: output, shape index: {0}]
  %s5 = inlined_call_operand.vmem [shape: f32[16,1], index: 5, kind: output, shape index: {1}]
  %6 = xla_tuple %s4, %s5
  %s7 = sld [smem:[#allocation0]]
  $region42: #{albef_forward.115} parent=0
    _
  %s9 = ssub.s32 1, %s7
  %s10 = scalar_select 0, %s9, %s7
  // Predicated region
  $region2: #{albef_forward.115} parent=0 // pred_check
    _
  $region3: #{albef_forward.115} parent=0 // pred_check_branch
    %12 = sbr.rel (0) target = $region5
  $region4: #{albef_forward.115} parent=0 // pred_region
    _
  $region5: #{albef_forward.115} parent=0 // pred_fallthru
    _
  // Predicated region
  $region6: #{albef_forward.115} parent=0 // pred_check
    _
  $region7: #{albef_forward.115} parent=0 // pred_check_branch
    %14 = sbr.rel (0) target = $region9
  $region8: #{albef_forward.115} parent=0 // pred_region
    _
  $region9: #{albef_forward.115} parent=0 // pred_fallthru
    _
  // Predicated region
  $region10: #{albef_forward.115} parent=0 // pred_check
    _
  $region11: #{albef_forward.115} parent=0 // pred_check_branch
    %16 = sbr.rel (0) target = $region13
  $region12: #{albef_forward.115} parent=0 // pred_region
    _
  $region13: #{albef_forward.115} parent=0 // pred_fallthru
    _
  // Predicated region
  $region14: #{albef_forward.115} parent=0 // pred_check
    _
  $region15: #{albef_forward.115} parent=0 // pred_check_branch
    %18 = sbr.rel (0) target = $region17
  $region16: #{albef_forward.115} parent=0 // pred_region
    _
  $region17: #{albef_forward.115} parent=0 // pred_fallthru
    _
  %p20 = scmp.eq.s32.totalorder 0, 0
  // Predicated region
  $region18: #{albef_forward.115} parent=0 // pred_check
    %p21 = pneg %p20
  $region19: #{albef_forward.115} parent=0 // pred_check_branch
    %23 = sbr.rel (%p21) target = $region21
  $region20: #{albef_forward.115} parent=0 // pred_region
    %vm24 = vcmask 7168
    %25 = vst.msk [vmem:[#allocation2] sm:$0xff] %vm24, -inf
    %26 = vst.msk [vmem:[#allocation2 + $0x8] sm:$0xff] %vm24, -inf
    %27 = vst.msk [vmem:[#allocation3] sm:$0xff] %vm24, 0.0
    %28 = vst.msk [vmem:[#allocation3 + $0x8] sm:$0xff] %vm24, 0.0
    %29 = vst.msk [vmem:[#allocation4] sm:$0xff] %vm24, 0.0
    %30 = vst.msk [vmem:[#allocation4 + $0x8] sm:$0xff] %vm24, 0.0
  $region21: #{albef_forward.115} parent=0 // pred_fallthru
    _
  %v31 = vld [vmem:[%s0] sm:$0xf]
  %v32 = vld [vmem:[%s0 + $0x4] sm:$0xf]
  %v33 = vld [vmem:[%s1] sm:$0xff]
  %v34 = vld [vmem:[%s1 + $0x8] sm:$0xff]
  %v35 = vld [vmem:[%s1 + $0x10] sm:$0xff]
  %v36 = vld [vmem:[%s1 + $0x18] sm:$0xff]
  %v37 = vld [vmem:[%s1 + $0x20] sm:$0xff]
  %v38 = vld [vmem:[%s1 + $0x28] sm:$0xff]
  %v39 = vld [vmem:[%s1 + $0x30] sm:$0xff]
  %v40 = vld [vmem:[%s1 + $0x38] sm:$0xff]
  %v41 = vld [vmem:[%s2] sm:$0xf]
  %v43 = vlaneseq
  %v44 = vshrl.u32 %v43, 7
  %v45 = vsub.s32 0, %v44
  %v46 = vrot.slane %v41, %v45
  %v47 = vlaneseq
  %v48 = vshrl.u32 %v47, 7
  %v49 = vsub.s32 1, %v48
  %v50 = vrot.slane %v41, %v49
  %v51 = vlaneseq
  %v52 = vshrl.u32 %v51, 7
  %v53 = vsub.s32 2, %v52
  %v54 = vrot.slane %v41, %v53
  %v55 = vlaneseq
  %v56 = vshrl.u32 %v55, 7
  %v57 = vsub.s32 3, %v56
  %v58 = vrot.slane %v41, %v57
  %v65 = vunpack.c.l.b16 %v31
  %v66 = vunpack.c.l.b16 %v32
  %v67 = vpack.c.b16 %v66, %v65
  %v76 = vunpack.c.l.b16 %v33
  %v77 = vunpack.c.h.b16 %v33
  %v78 = vunpack.c.l.b16 %v34
  %v79 = vunpack.c.h.b16 %v34
  %v80 = vunpack.c.l.b16 %v35
  %v81 = vunpack.c.h.b16 %v35
  %v82 = vunpack.c.l.b16 %v36
  %v83 = vunpack.c.h.b16 %v36
  %v84 = vunpack.c.l.b16 %v37
  %v85 = vunpack.c.h.b16 %v37
  %v86 = vunpack.c.l.b16 %v38
  %v87 = vunpack.c.h.b16 %v38
  %v88 = vunpack.c.l.b16 %v39
  %v89 = vunpack.c.h.b16 %v39
  %v90 = vunpack.c.l.b16 %v40
  %v91 = vunpack.c.h.b16 %v40
  %v92 = vpack.c.b16 %v80, %v76
  %v93 = vpack.c.b16 %v81, %v77
  %v94 = vpack.c.b16 %v82, %v78
  %v95 = vpack.c.b16 %v83, %v79
  %v96 = vpack.c.b16 %v88, %v84
  %v97 = vpack.c.b16 %v89, %v85
  %v98 = vpack.c.b16 %v90, %v86
  %v99 = vpack.c.b16 %v91, %v87
  %vm108 = vcmask 261120
  %v110 = vsel %vm108, %v67, 0
  %112 = vmatprep.subr.bf16.mxu0 0
  %113 = vmatpush1.bf16.msra.mxu0 0
  %114 = vmatprep.subr.bf16.mxu0 0
  %115 = vmatpush1.bf16.msra.mxu0 0
  %116 = vmatprep.subr.bf16.mxu0 0
  %117 = vmatpush1.bf16.msra.mxu0 0
  %118 = vmatprep.subr.bf16.mxu0 0
  %119 = vmatpush1.bf16.msra.mxu0 0
  %120 = vmatprep.subr.bf16.mxu0 0
  %121 = vmatpush1.bf16.msra.mxu0 0
  %122 = vmatprep.subr.bf16.mxu0 0
  %123 = vmatpush1.bf16.msra.mxu0 0
  %124 = vmatprep.subr.bf16.mxu0 %v97
  %125 = vmatpush1.bf16.msra.mxu0 %v96
  %126 = vmatprep.subr.bf16.mxu0 %v93
  %127 = vmatpush1.bf16.msra.mxu0 %v92
  %128 = vmatprep.subr.bf16.mxu0 0
  %129 = vmatpush2.bf16.msra.mxu0 0
  %130 = vmatprep.subr.bf16.mxu0 0
  %131 = vmatpush2.bf16.msra.mxu0 0
  %132 = vmatprep.subr.bf16.mxu0 0
  %133 = vmatpush2.bf16.msra.mxu0 0
  %134 = vmatprep.subr.bf16.mxu0 0
  %135 = vmatpush2.bf16.msra.mxu0 0
  %136 = vmatprep.subr.bf16.mxu0 0
  %137 = vmatpush2.bf16.msra.mxu0 0
  %138 = vmatprep.subr.bf16.mxu0 0
  %139 = vmatpush2.bf16.msra.mxu0 0
  %140 = vmatprep.subr.bf16.mxu0 0
  %141 = vmatpush2.bf16.msra.mxu0 0
  %142 = vmatprep.subr.bf16.mxu0 0
  %143 = vmatpush2.bf16.msra.mxu0 0
  %144 = vmatprep.mubr.bf16.mxu0 0
  %145 = vmatmul.mubr.bf16.gmra.mxu0 %v110
  %v146 = vpop.f32.mrf.mxu0
  %v147 = vadd.f32 %v46, %v146
  %v148 = vpop.f32.mrf.mxu0
  %v149 = vadd.f32 %v50, %v148
  %v150 = vpop.f32.mrf.mxu0
  %v151 = vadd.f32 %v46, %v150
  %v152 = vpop.f32.mrf.mxu0
  %v153 = vadd.f32 %v50, %v152
  %154 = vdwg.mxu0
  %155 = vmatprep.subr.bf16.mxu0 0
  %156 = vmatpush1.bf16.msra.mxu0 0
  %157 = vmatprep.subr.bf16.mxu0 0
  %158 = vmatpush1.bf16.msra.mxu0 0
  %159 = vmatprep.subr.bf16.mxu0 0
  %160 = vmatpush1.bf16.msra.mxu0 0
  %161 = vmatprep.subr.bf16.mxu0 0
  %162 = vmatpush1.bf16.msra.mxu0 0
  %163 = vmatprep.subr.bf16.mxu0 0
  %164 = vmatpush1.bf16.msra.mxu0 0
  %165 = vmatprep.subr.bf16.mxu0 0
  %166 = vmatpush1.bf16.msra.mxu0 0
  %167 = vmatprep.subr.bf16.mxu0 %v99
  %168 = vmatpush1.bf16.msra.mxu0 %v98
  %169 = vmatprep.subr.bf16.mxu0 %v95
  %170 = vmatpush1.bf16.msra.mxu0 %v94
  %171 = vmatprep.subr.bf16.mxu0 0
  %172 = vmatpush2.bf16.msra.mxu0 0
  %173 = vmatprep.subr.bf16.mxu0 0
  %174 = vmatpush2.bf16.msra.mxu0 0
  %175 = vmatprep.subr.bf16.mxu0 0
  %176 = vmatpush2.bf16.msra.mxu0 0
  %177 = vmatprep.subr.bf16.mxu0 0
  %178 = vmatpush2.bf16.msra.mxu0 0
  %179 = vmatprep.subr.bf16.mxu0 0
  %180 = vmatpush2.bf16.msra.mxu0 0
  %181 = vmatprep.subr.bf16.mxu0 0
  %182 = vmatpush2.bf16.msra.mxu0 0
  %183 = vmatprep.subr.bf16.mxu0 0
  %184 = vmatpush2.bf16.msra.mxu0 0
  %185 = vmatprep.subr.bf16.mxu0 0
  %186 = vmatpush2.bf16.msra.mxu0 0
  %187 = vmatprep.mubr.bf16.mxu0 0
  %188 = vmatmul.mubr.bf16.gmra.mxu0 %v110
  %v189 = vpop.f32.mrf.mxu0
  %v190 = vadd.f32 %v54, %v189
  %v191 = vpop.f32.mrf.mxu0
  %v192 = vadd.f32 %v58, %v191
  %v193 = vpop.f32.mrf.mxu0
  %v194 = vadd.f32 %v54, %v193
  %v195 = vpop.f32.mrf.mxu0
  %v196 = vadd.f32 %v58, %v195
  %197 = vdwg.mxu0
  %v198 = vld [vmem:[%s3] sm:$0xff]
  %v199 = vld [vmem:[%s3 + $0x8] sm:$0xff]
  %v200 = vlaneseq
  %v201 = vand.u32 %v200, 127
  %v202 = vadd.s32 %v201, 128
  %v203 = vadd.s32 %v201, 256
  %v204 = vadd.s32 %v201, 384
  %s205 = smul.u32 0, 512
  %v206 = vstv %s205
  %v207 = vadd.s32 %v201, %v206
  %v208 = vadd.s32 %v202, %v206
  %v209 = vadd.s32 %v203, %v206
  %v210 = vadd.s32 %v204, %v206
  %v211 = vld [vmem:[#allocation4] sm:$0xff]
  %v212 = vld [vmem:[#allocation4 + $0x8] sm:$0xff]
  %213 = vset.pattern.permute.xlu0 0
  %214 = vperm.xlu0 %213, %v198
  %v215 = vpop.permute.xlu0 %214
  %216 = vset.pattern.permute.xlu0 0
  %217 = vperm.xlu0 %216, %v199
  %v218 = vpop.permute.xlu0 %217
  %vm219 = vcmp.eq.s32.totalorder %v207, %v215
  %vm220 = vcmp.eq.s32.totalorder %v208, %v215
  %vm221 = vcmp.eq.s32.totalorder %v209, %v215
  %vm222 = vcmp.eq.s32.totalorder %v210, %v215
  %vm223 = vcmp.eq.s32.totalorder %v207, %v218
  %vm224 = vcmp.eq.s32.totalorder %v208, %v218
  %vm225 = vcmp.eq.s32.totalorder %v209, %v218
  %vm226 = vcmp.eq.s32.totalorder %v210, %v218
  %v227 = vsel %vm219, %v147, 0.0
  %v228 = vsel %vm220, %v149, 0.0
  %v229 = vsel %vm221, %v190, 0.0
  %v230 = vsel %vm222, %v192, 0.0
  %v231 = vsel %vm223, %v151, 0.0
  %v232 = vsel %vm224, %v153, 0.0
  %v233 = vsel %vm225, %v194, 0.0
  %v234 = vsel %vm226, %v196, 0.0
  %v235 = vadd.f32 %v227, %v228
  %v236 = vadd.f32 %v235, %v229
  %v237 = vadd.f32 %v236, %v230
  %238 = vadd.xlane.f32.xlu0 %v237
  %v239 = vpop.xlane.xlu0 %238
  %v240 = vadd.f32 %v231, %v232
  %v241 = vadd.f32 %v240, %v233
  %v242 = vadd.f32 %v241, %v234
  %243 = vadd.xlane.f32.xlu0 %v242
  %v244 = vpop.xlane.xlu0 %243
  %v245 = vadd.f32 %v211, %v239
  %v246 = vadd.f32 %v212, %v244
  %vm247 = vcmask 7168
  %248 = vst.msk [vmem:[#allocation4] sm:$0xff] %vm247, %v245
  %249 = vst.msk [vmem:[#allocation4 + $0x8] sm:$0xff] %vm247, %v246
  %v250 = vld [vmem:[#allocation2] sm:$0xff]
  %v251 = vld [vmem:[#allocation2 + $0x8] sm:$0xff]
  %v252 = vmax.f32 %v147, %v190
  %v253 = vmax.f32 %v149, %v192
  %v254 = vmax.f32 %v252, %v253
  %255 = vmax.xlane.f32.xlu0 %v254
  %v256 = vpop.xlane.xlu0 %255
  %v257 = vmax.f32 %v151, %v194
  %v258 = vmax.f32 %v153, %v196
  %v259 = vmax.f32 %v257, %v258
  %260 = vmax.xlane.f32.xlu0 %v259
  %v261 = vpop.xlane.xlu0 %260
  %v262 = vmax.f32 %v250, %v256
  %v263 = vmax.f32 %v251, %v261
  %v264 = vld [vmem:[#allocation3] sm:$0xff]
  %v265 = vld [vmem:[#allocation3 + $0x8] sm:$0xff]
  %v266 = vsub.f32 %v250, %v262
  %v267 = vsub.f32 %v251, %v263
  %v268 = vmul.f32 %v266, 1.442695
  %v269 = vpow.pop %v268
  %v270 = vmul.f32 %v267, 1.442695
  %v271 = vpow.pop %v270
  %v272 = vmul.f32 %v264, %v269
  %v273 = vmul.f32 %v265, %v271
  %275 = vset.pattern.permute.xlu0 0
  %276 = vperm.xlu0 %275, %v262
  %v277 = vpop.permute.xlu0 %276
  %280 = vset.pattern.permute.xlu0 0
  %281 = vperm.xlu0 %280, %v263
  %v282 = vpop.permute.xlu0 %281
  %v284 = vsub.f32 %v147, %v277
  %v285 = vsub.f32 %v149, %v277
  %v286 = vsub.f32 %v190, %v277
  %v287 = vsub.f32 %v192, %v277
  %v288 = vsub.f32 %v151, %v282
  %v289 = vsub.f32 %v153, %v282
  %v290 = vsub.f32 %v194, %v282
  %v291 = vsub.f32 %v196, %v282
  %v292 = vmul.f32 %v284, 1.442695
  %v293 = vpow.pop %v292
  %v294 = vmul.f32 %v285, 1.442695
  %v295 = vpow.pop %v294
  %v296 = vmul.f32 %v286, 1.442695
  %v297 = vpow.pop %v296
  %v298 = vmul.f32 %v287, 1.442695
  %v299 = vpow.pop %v298
  %v300 = vmul.f32 %v288, 1.442695
  %v301 = vpow.pop %v300
  %v302 = vmul.f32 %v289, 1.442695
  %v303 = vpow.pop %v302
  %v304 = vmul.f32 %v290, 1.442695
  %v305 = vpow.pop %v304
  %v306 = vmul.f32 %v291, 1.442695
  %v307 = vpow.pop %v306
  %v308 = vadd.f32 %v293, %v295
  %v309 = vadd.f32 %v308, %v297
  %v310 = vadd.f32 %v309, %v299
  %311 = vadd.xlane.f32.xlu0 %v310
  %v312 = vpop.xlane.xlu0 %311
  %v313 = vadd.f32 %v301, %v303
  %v314 = vadd.f32 %v313, %v305
  %v315 = vadd.f32 %v314, %v307
  %316 = vadd.xlane.f32.xlu0 %v315
  %v317 = vpop.xlane.xlu0 %316
  %v318 = vadd.f32 %v272, %v312
  %v319 = vadd.f32 %v273, %v317
  %320 = vst.msk [vmem:[#allocation3] sm:$0xff] %vm247, %v318
  %321 = vst.msk [vmem:[#allocation3 + $0x8] sm:$0xff] %vm247, %v319
  %322 = vst.msk [vmem:[#allocation2] sm:$0xff] %vm247, %v262
  %323 = vst.msk [vmem:[#allocation2 + $0x8] sm:$0xff] %vm247, %v263
  // Predicated region
  $region22: #{albef_forward.115} parent=0 // pred_check
    %p324 = pneg %p20
  $region23: #{albef_forward.115} parent=0 // pred_check_branch
    %326 = sbr.rel (%p324) target = $region25
  $region24: #{albef_forward.115} parent=0 // pred_region
    %vm327 = vcmp.ne.s32.totalorder %v198, 4294967196
    %vm328 = vcmp.ne.s32.totalorder %v199, 4294967196
    %v329 = vsel %vm327, 1, 0
    %v330 = vsel %vm328, 1, 0
    %v331 = vcvt.s32.f32 %v329
    %v332 = vcvt.s32.f32 %v330
    %v333 = vld [vmem:[#allocation2] sm:$0xff]
    %v334 = vld [vmem:[#allocation2 + $0x8] sm:$0xff]
    %v335 = vld [vmem:[#allocation3] sm:$0xff]
    %v336 = vld [vmem:[#allocation3 + $0x8] sm:$0xff]
    %v337 = vlog2.pop %v335
    %v338 = vmul.f32 %v337, 0.6931472
    %v339 = vlog2.pop %v336
    %v340 = vmul.f32 %v339, 0.6931472
    %v341 = vadd.f32 %v333, %v338
    %v342 = vadd.f32 %v334, %v340
    %v343 = vld [vmem:[#allocation4] sm:$0xff]
    %v344 = vld [vmem:[#allocation4 + $0x8] sm:$0xff]
    %v345 = vsub.f32 %v341, %v343
    %v346 = vsub.f32 %v342, %v344
    %v347 = vmul.f32 %v345, %v331
    %v348 = vmul.f32 %v346, %v332
    %349 = vst.msk [vmem:[%s4] sm:$0xff] %vm247, %v347
    %350 = vst.msk [vmem:[%s4 + $0x8] sm:$0xff] %vm247, %v348
    %351 = vst.msk [vmem:[%s5] sm:$0xff] %vm247, %v331
    %352 = vst.msk [vmem:[%s5 + $0x8] sm:$0xff] %vm247, %v332
  $region25: #{albef_forward.115} parent=0 // pred_fallthru
    _
  // Predicated region
  $region26: #{albef_forward.115} parent=0 // pred_check
    _
  $region27: #{albef_forward.115} parent=0 // pred_check_branch
    %354 = sbr.rel (0) target = $region29
  $region28: #{albef_forward.115} parent=0 // pred_region
    _
  $region29: #{albef_forward.115} parent=0 // pred_fallthru
    _
  // Predicated region
  $region30: #{albef_forward.115} parent=0 // pred_check
    _
  $region31: #{albef_forward.115} parent=0 // pred_check_branch
    %356 = sbr.rel (0) target = $region33
  $region32: #{albef_forward.115} parent=0 // pred_region
    _
  $region33: #{albef_forward.115} parent=0 // pred_fallthru
    _
  // Predicated region
  $region34: #{albef_forward.115} parent=0 // pred_check
    _
  $region35: #{albef_forward.115} parent=0 // pred_check_branch
    %358 = sbr.rel (0) target = $region37
  $region36: #{albef_forward.115} parent=0 // pred_region
    _
  $region37: #{albef_forward.115} parent=0 // pred_fallthru
    _
  // Predicated region
  $region38: #{albef_forward.115} parent=0 // pred_check
    _
  $region39: #{albef_forward.115} parent=0 // pred_check_branch
    %360 = sbr.rel (0) target = $region41
  $region40: #{albef_forward.115} parent=0 // pred_region
    _
  $region41: #{albef_forward.115} parent=0 // pred_fallthru
    _

// kernel: albef_forward.113
$region0: #{albef_forward.113}
  #allocation0 [shape = 'u32[]', space=smem, size = 0x4, offset = 0x4, fixed_abs, tag = 'smem constant byte address 0x4 - core index']
  #allocation1 [shape = 'u32[144,128]{1,0:T(1,128)}', space=vmem, size = 0x12000, scoped, tag = 'internal scratch']
  %s0 = inlined_call_operand.vmem [shape: bf16[16,32], index: 0, kind: input, shape index: {}]
  %s1 = inlined_call_operand.vmem [shape: f32[1,32], index: 1, kind: input, shape index: {}]
  %s2 = inlined_call_operand.vmem [shape: f32[1,32], index: 2, kind: input, shape index: {}]
  %s3 = inlined_call_operand.vmem [shape: bf16[16,32], index: 3, kind: output, shape index: {}]
  %s4 = sld [smem:[#allocation0]]
  $region22: #{albef_forward.113} parent=0
    _
  %s6 = ssub.s32 1, %s4
  %s7 = scalar_select 0, %s6, %s4
  // Predicated region
  $region2: #{albef_forward.113} parent=0 // pred_check
    _
  $region3: #{albef_forward.113} parent=0 // pred_check_branch
    %9 = sbr.rel (0) target = $region5
  $region4: #{albef_forward.113} parent=0 // pred_region
    _
  $region5: #{albef_forward.113} parent=0 // pred_fallthru
    _
  // Predicated region
  $region6: #{albef_forward.113} parent=0 // pred_check
    _
  $region7: #{albef_forward.113} parent=0 // pred_check_branch
    %11 = sbr.rel (0) target = $region9
  $region8: #{albef_forward.113} parent=0 // pred_region
    _
  $region9: #{albef_forward.113} parent=0 // pred_fallthru
    _
  // Predicated region
  $region10: #{albef_forward.113} parent=0 // pred_check
    _
  $region11: #{albef_forward.113} parent=0 // pred_check_branch
    %13 = sbr.rel (0) target = $region13
  $region12: #{albef_forward.113} parent=0 // pred_region
    _
  $region13: #{albef_forward.113} parent=0 // pred_fallthru
    _
  %v14 = vld [vmem:[%s0] sm:$0xf]
  %v15 = vld [vmem:[%s0 + $0x4] sm:$0xf]
  %v16 = vunpack.c.l.bf16 %v14
  %v17 = vunpack.c.l.bf16 %v15
  %vm18 = vcmask 261120
  %v19 = vsel %vm18, %v16, 0.0
  %20 = vadd.xlane.f32.xlu0 %v19
  %v21 = vpop.xlane.xlu0 %20
  %v22 = vsel %vm18, %v17, 0.0
  %23 = vadd.xlane.f32.xlu0 %v22
  %v24 = vpop.xlane.xlu0 %23
  %v25 = vrcp.pop 32.0
  %v26 = vmul.f32 %v21, %v25
  %v27 = vmul.f32 %v24, %v25
  %v28 = vsub.f32 %v16, %v26
  %v29 = vsub.f32 %v17, %v27
  %v30 = vmul.f32 %v28, %v28
  %v31 = vmul.f32 %v29, %v29
  %v32 = vsel %vm18, %v30, 0.0
  %33 = vadd.xlane.f32.xlu0 %v32
  %v34 = vpop.xlane.xlu0 %33
  %v35 = vsel %vm18, %v31, 0.0
  %36 = vadd.xlane.f32.xlu0 %v35
  %v37 = vpop.xlane.xlu0 %36
  %v38 = vmul.f32 %v34, %v25
  %v39 = vmul.f32 %v37, %v25
  %v40 = vadd.f32 %v38, 1e-12
  %v41 = vadd.f32 %v39, 1e-12
  %v42 = vrsqrt.pop %v40
  %v43 = vrsqrt.pop %v41
  %v44 = vmul.f32 %v28, %v42
  %v45 = vmul.f32 %v29, %v43
  %v46 = vld [vmem:[%s1] sm:$0x1]
  %v48 = vlaneseq
  %v49 = vshrl.u32 %v48, 7
  %v50 = vsub.s32 0, %v49
  %v51 = vrot.slane %v46, %v50
  %v53 = vmul.f32 %v44, %v51
  %v54 = vmul.f32 %v45, %v51
  %v55 = vld [vmem:[%s2] sm:$0x1]
  %v57 = vlaneseq
  %v58 = vshrl.u32 %v57, 7
  %v59 = vsub.s32 0, %v58
  %v60 = vrot.slane %v55, %v59
  %v62 = vadd.f32 %v53, %v60
  %v63 = vadd.f32 %v54, %v60
  %v64 = vpack.c.bf16 %v63, %v62
  %v66 = vunpack.c.l.b16 %v64
  %v67 = vunpack.c.h.b16 %v64
  %v68 = vpack.c.b16 %v66, %v66
  %v69 = vpack.c.b16 %v67, %v67
  %vm72 = vcmask 257024
  %73 = vst.msk [vmem:[%s3] sm:$0xf] %vm72, %v68
  %74 = vst.msk [vmem:[%s3 + $0x4] sm:$0xf] %vm72, %v69
  // Predicated region
  $region14: #{albef_forward.113} parent=0 // pred_check
    _
  $region15: #{albef_forward.113} parent=0 // pred_check_branch
    %76 = sbr.rel (0) target = $region17
  $region16: #{albef_forward.113} parent=0 // pred_region
    _
  $region17: #{albef_forward.113} parent=0 // pred_fallthru
    _
  // Predicated region
  $region18: #{albef_forward.113} parent=0 // pred_check
    _
  $region19: #{albef_forward.113} parent=0 // pred_check_branch
    %78 = sbr.rel (0) target = $region21
  $region20: #{albef_forward.113} parent=0 // pred_region
    _
  $region21: #{albef_forward.113} parent=0 // pred_fallthru
    _

</llo_original>
